<compile_context>
chip_gen: v7x
topology: tpu7x:2x2x1
jax: 0.10.0
libtpu: 0.0.40
codegen_flags: <defaults>
</compile_context>

<pallas_src>
import math

import jax
import jax.numpy as jnp
from jax.experimental import pallas as pl
from jax.experimental.pallas import tpu as pltpu

LANE = 128
_VMEM_LIMIT = 32 * 1024 * 1024


def _round_up(x, m):
    return ((x + m - 1) // m) * m


def _pad_last(x, target):
    pad = target - x.shape[-1]
    if pad == 0:
        return x
    return jnp.pad(x, [(0, 0)] * (x.ndim - 1) + [(0, pad)])


def _bytes(*arrays):
    return int(sum(a.size * jnp.dtype(a.dtype).itemsize for a in arrays))


# --------------------------- ConvTranspose2d(2,2) ---------------------------

def upconv2x2_s2(x_p, w_up, b_row, *, tbh):
    """ConvTranspose2d(kernel=2, stride=2); channels lane-padded.

    x_p:   (B, Hu, Wu, Cinp)   activations (compute dtype)
    w_up:  (2, Cinp, 2*Cp)     per-di weights, columns laid out (dj, cout)
    b_row: (1, 2*Cp) float32   bias replicated over dj
    returns (B, Hu, 2, Wu, 2*Cp) with out[b,i,di,j,dj*Cp+c] == y[b,2i+di,2j+dj,c],
    so the (di,dj) interleave is a free contiguous reshape in the caller.
    """
    B, Hu, Wu, Cinp = x_p.shape
    Cp2 = w_up.shape[-1]
    out_dtype = x_p.dtype

    def kernel(x_ref, w_ref, b_ref, o_ref):
        w = w_ref[0]                      # (Cinp, 2*Cp)
        b = b_ref[...]                    # (1, 2*Cp) f32
        for r in range(tbh):              # unrolled row loop
            acc = jnp.dot(x_ref[0, r], w,
                          preferred_element_type=jnp.float32) + b
            o_ref[0, r, 0] = acc.astype(o_ref.dtype)

    flops = 2 * B * 2 * Hu * Wu * Cinp * Cp2
    cost = pl.CostEstimate(
        flops=flops, transcendentals=0,
        bytes_accessed=_bytes(x_p, w_up, b_row)
        + B * Hu * 2 * Wu * Cp2 * jnp.dtype(out_dtype).itemsize)

    return pl.pallas_call(
        kernel,
        out_shape=jax.ShapeDtypeStruct((B, Hu, 2, Wu, Cp2), out_dtype),
        grid=(B, 2, Hu // tbh),
        in_specs=[
            pl.BlockSpec((1, tbh, Wu, Cinp), lambda b, di, ib: (b, ib, 0, 0)),
            pl.BlockSpec((1, Cinp, Cp2), lambda b, di, ib: (di, 0, 0)),
            pl.BlockSpec((1, Cp2), lambda b, di, ib: (0, 0)),
        ],
        out_specs=pl.BlockSpec((1, tbh, 1, Wu, Cp2),
                               lambda b, di, ib: (b, ib, di, 0, 0)),
        compiler_params=pltpu.CompilerParams(
            dimension_semantics=("parallel", "parallel", "parallel"),
            vmem_limit_bytes=_VMEM_LIMIT),
        cost_estimate=cost,
    )(x_p, w_up, b_row)


# ----------------- fused 3x3 conv + (folded) BN + ReLU kernel ----------------

def conv3x3_bn_relu(streams, weights, shift_row, *, ho, wo,
                    row_offsets, col_offsets):
    """VALID 3x3 conv (+ folded BN + ReLU), one output row per grid step.

    streams[s]: (B, H_s, W_s, C_s) activation stream (compute dtype)
    weights[s]: (9, C_s, Cp)       per-tap weights (BN scale folded in)
    shift_row : (1, Cp) float32    folded shift (conv bias + BN mean/beta)
    row_offsets/col_offsets[s]: static crop offsets of stream s (fuses crop).
    """
    n = len(streams)
    B = streams[0].shape[0]
    Cp = weights[0].shape[-1]
    out_dtype = streams[0].dtype

    def kernel(*refs):
        row_refs = refs[:3 * n]
        w_refs = refs[3 * n:4 * n]
        sh_ref = refs[4 * n]
        o_ref = refs[4 * n + 1]
        acc = jnp.zeros((wo, Cp), jnp.float32)
        for s in range(n):
            xoff = col_offsets[s]
            for ky in range(3):
                row = row_refs[3 * s + ky][0, 0]           # (W_s, C_s)
                for kx in range(3):
                    acc = acc + jnp.dot(
                        row[xoff + kx:xoff + kx + wo, :],
                        w_refs[s][ky * 3 + kx],
                        preferred_element_type=jnp.float32)
        o_ref[0, 0] = jnp.maximum(acc + sh_ref[...], 0.0).astype(o_ref.dtype)

    in_specs, args = [], []
    for s in range(n):
        _, hs, ws, cs = streams[s].shape
        roff = row_offsets[s]
        for ky in range(3):
            in_specs.append(pl.BlockSpec(
                (1, 1, ws, cs),
                lambda b, r, roff=roff, ky=ky: (b, roff + r + ky, 0, 0)))
            args.append(streams[s])
    for s in range(n):
        in_specs.append(pl.BlockSpec(weights[s].shape, lambda b, r: (0, 0, 0)))
        args.append(weights[s])
    in_specs.append(pl.BlockSpec(shift_row.shape, lambda b, r: (0, 0)))
    args.append(shift_row)

    flops = 2 * B * ho * wo * 9 * Cp * sum(w.shape[1] for w in weights)
    cost = pl.CostEstimate(
        flops=flops, transcendentals=0,
        bytes_accessed=_bytes(*args)
        + B * ho * wo * Cp * jnp.dtype(out_dtype).itemsize)

    return pl.pallas_call(
        kernel,
        out_shape=jax.ShapeDtypeStruct((B, ho, wo, Cp), out_dtype),
        grid=(B, ho),
        in_specs=in_specs,
        out_specs=pl.BlockSpec((1, 1, wo, Cp), lambda b, r: (b, r, 0, 0)),
        compiler_params=pltpu.CompilerParams(
            dimension_semantics=("parallel", "parallel"),
            vmem_limit_bytes=_VMEM_LIMIT),
        cost_estimate=cost,
    )(*args)


# ------------------------------ forward wrapper ------------------------------

def unet_up_forward(params, xdown_nchw, xup_nchw, *,
                    compute_dtype=jnp.bfloat16, eps=1e-5):
    """Matches UnetUp.forward(xdown, xup); NCHW in, NCHW f32 out."""
    B, Cu_in, Hu, Wu = xup_nchw.shape
    _, Cd, Hd, Wd = xdown_nchw.shape
    Cout = params["up_w"].shape[1]
    Cin_tot = params["w1"].shape[1]
    assert Cin_tot == Cd + Cout

    Cp = _round_up(Cout, LANE)        # lane-padded channel width downstream
    Cinp = _round_up(Cu_in, LANE)
    Cdp = _round_up(Cd, LANE)

    # NCHW -> NHWC, lane-pad channels, cast matmul operands to compute dtype.
    xup_p = _pad_last(jnp.transpose(xup_nchw, (0, 2, 3, 1)), Cinp).astype(compute_dtype)
    xdown_p = _pad_last(jnp.transpose(xdown_nchw, (0, 2, 3, 1)), Cdp).astype(compute_dtype)

    # ConvTranspose2d weights (Cin, Cout, 2, 2) -> (di, Cinp, (dj, cout)).
    w = jnp.transpose(params["up_w"], (2, 0, 3, 1))        # (2, Cin, 2, Cout)
    w = jnp.pad(w, ((0, 0), (0, Cinp - Cu_in), (0, 0), (0, Cp - Cout)))
    w_up = w.reshape(2, Cinp, 2 * Cp).astype(compute_dtype)
    b_up = jnp.tile(jnp.pad(params["up_b"], (0, Cp - Cout)), 2)[None, :].astype(jnp.float32)

    tbh = math.gcd(Hu, 8)
    y5 = upconv2x2_s2(xup_p, w_up, b_up, tbh=tbh)
    Hy, Wy = 2 * Hu, 2 * Wu
    # (B, Hu, 2, Wu, 2*Cp) -> (B, 2Hu, 2Wu, Cp): contiguous relabeling — the
    # (di, dj) interleave was already fused into the kernel's store pattern.
    y_up = y5.reshape(B, Hy, Wy, Cp)

    # Static crop offsets; the crop is fused into conv1's index_map / slices.
    y_off = (Hd - Hy) // 2
    x_off = (Wd - Wy) // 2

    def fold_bn(wq, bq, g, be, m, v):
        scale = g / jnp.sqrt(v + eps)
        wq = wq * scale[:, None, None, None]               # fold scale into W
        shift = (bq - m) * scale + be                      # fold bias/mean/beta
        wt = jnp.transpose(wq, (2, 3, 1, 0)).reshape(9, wq.shape[1], wq.shape[0])
        return wt, shift                                   # (9, Cin, Cout), (Cout,)

    # conv1: two input streams (cropped skip, upsampled); K split across them.
    wt1, sh1 = fold_bn(params["w1"], params["b1"], params["g1"],
                       params["be1"], params["m1"], params["v1"])
    Cu = Cin_tot - Cd
    w1_d = jnp.pad(wt1[:, :Cd, :],
                   ((0, 0), (0, Cdp - Cd), (0, Cp - Cout))).astype(compute_dtype)
    w1_u = jnp.pad(wt1[:, Cd:, :],
                   ((0, 0), (0, Cp - Cu), (0, Cp - Cout))).astype(compute_dtype)
    sh1_row = jnp.pad(sh1, (0, Cp - Cout))[None, :].astype(jnp.float32)

    ho1, wo1 = Hy - 2, Wy - 2
    y1 = conv3x3_bn_relu([xdown_p, y_up], [w1_d, w1_u], sh1_row,
                         ho=ho1, wo=wo1,
                         row_offsets=(y_off, 0), col_offsets=(x_off, 0))

    # conv2: single stream.
    wt2, sh2 = fold_bn(params["w2"], params["b2"], params["g2"],
                       params["be2"], params["m2"], params["v2"])
    w2_p = jnp.pad(wt2, ((0, 0), (0, Cp - Cout), (0, Cp - Cout))).astype(compute_dtype)
    sh2_row = jnp.pad(sh2, (0, Cp - Cout))[None, :].astype(jnp.float32)

    ho2, wo2 = ho1 - 2, wo1 - 2
    y2 = conv3x3_bn_relu([y1], [w2_p], sh2_row,
                         ho=ho2, wo=wo2, row_offsets=(0,), col_offsets=(0,))

    out = y2[:, :, :, :Cout].astype(jnp.float32)
    return jnp.transpose(out, (0, 3, 1, 2))


# --------------------------- pure-JAX reference -----------------------------

def _reference_forward(params, xdown, xup, eps=1e-5):
    # Transposed conv: out[n,o,2i+di,2j+dj] = sum_c x[n,c,i,j]*W[c,o,di,dj] + b[o]
    B, Cin, Hu, Wu = xup.shape
    Cout = params["up_w"].shape[1]
    t = jnp.einsum("ncij,cohw->noihjw", xup, params["up_w"])
    y = t.reshape(B, Cout, 2 * Hu, 2 * Wu) + params["up_b"][None, :, None, None]
    # crop & concat (NCHW)
    yo = (xdown.shape[2] - y.shape[2]) // 2
    xo = (xdown.shape[3] - y.shape[3]) // 2
    crop = xdown[:, :, yo:yo + y.shape[2], xo:xo + y.shape[3]]
    y = jnp.concatenate([crop, y], axis=1)

    def conv_bn_relu(x, w, b, g, be, m, v):
        c = jax.lax.conv_general_dilated(
            x, w, (1, 1), "VALID",
            dimension_numbers=("NCHW", "OIHW", "NCHW"))
        c = c + b[None, :, None, None]
        c = (c - m[None, :, None, None]) / jnp.sqrt(v[None, :, None, None] + eps)
        c = c * g[None, :, None, None] + be[None, :, None, None]
        return jnp.maximum(c, 0.0)

    y = conv_bn_relu(y, params["w1"], params["b1"], params["g1"],
                     params["be1"], params["m1"], params["v1"])
    y = conv_bn_relu(y, params["w2"], params["b2"], params["g2"],
                     params["be2"], params["m2"], params["v2"])
    return y


# ---------------------------------- main ------------------------------------

if __name__ == "__main__":
    B, Cin, Cout = 2, 8, 4          # UnetUp(in_channels=8, out_channels=4)
    Hu = Wu = 8                      # xup spatial
    Hd = Wd = 20                     # xdown spatial (larger -> exercises cropping)

    key = jax.random.PRNGKey(0)
    k = jax.random.split(key, 20)

    xup = jax.random.normal(k[0], (B, Cin, Hu, Wu), jnp.float32)
    xdown = jax.random.normal(k[1], (B, Cin - Cout, Hd, Wd), jnp.float32)

    params = {
        # ConvTranspose2d weight: [in, out, 2, 2]
        "up_w": 0.2 * jax.random.normal(k[2], (Cin, Cout, 2, 2), jnp.float32),
        "up_b": 0.1 * jax.random.normal(k[3], (Cout,), jnp.float32),
        # conv1: Conv2d(in=Cin(=concat channels), out=Cout, k=3)
        "w1": math.sqrt(2.0 / (9 * Cin)) * jax.random.normal(k[4], (Cout, Cin, 3, 3), jnp.float32),
        "b1": 0.05 * jax.random.normal(k[5], (Cout,), jnp.float32),
        "g1": 1.0 + 0.1 * jax.random.normal(k[6], (Cout,), jnp.float32),
        "be1": 0.1 * jax.random.normal(k[7], (Cout,), jnp.float32),
        "m1": 0.1 * jax.random.normal(k[8], (Cout,), jnp.float32),
        "v1": 1.0 + 0.2 * jax.random.uniform(k[9], (Cout,), jnp.float32),
        # conv2: Conv2d(in=Cout, out=Cout, k=3)
        "w2": math.sqrt(2.0 / (9 * Cout)) * jax.random.normal(k[10], (Cout, Cout, 3, 3), jnp.float32),
        "b2": 0.05 * jax.random.normal(k[11], (Cout,), jnp.float32),
        "g2": 1.0 + 0.1 * jax.random.normal(k[12], (Cout,), jnp.float32),
        "be2": 0.1 * jax.random.normal(k[13], (Cout,), jnp.float32),
        "m2": 0.1 * jax.random.normal(k[14], (Cout,), jnp.float32),
        "v2": 1.0 + 0.2 * jax.random.uniform(k[15], (Cout,), jnp.float32),
    }

    fwd = jax.jit(lambda p, xd, xu: unet_up_forward(p, xd, xu,
                                                    compute_dtype=jnp.bfloat16))
    out = jax.block_until_ready(fwd(params, xdown, xup))

    expected_shape = (B, Cout, 2 * Hu - 4, 2 * Wu - 4)   # 16x16 upsample, two valid 3x3 convs -> 12x12
    assert out.shape == expected_shape, (out.shape, expected_shape)

    ref = _reference_forward(params, xdown, xup)
    # bf16 matmul operands (f32 accumulation) -> tolerance sized for bf16 rounding.
    max_diff = float(jnp.max(jnp.abs(out - ref)))
    if not jnp.allclose(out, ref, atol=5e-2, rtol=5e-2):
        raise AssertionError(f"mismatch vs reference, max abs diff = {max_diff}")

    print("KERNEL_OK")
</pallas_src>

<mosaic_0001>
module attributes {stable_mosaic.version = 11 : i64} {
  func.func @kernel(%arg0: i32, %arg1: i32, %arg2: i32, %arg3: memref<1x8x8x128xbf16, #tpu.memory_space<vmem>>, %arg4: memref<1x128x256xbf16, #tpu.memory_space<vmem>>, %arg5: memref<1x256xf32, #tpu.memory_space<vmem>>, %arg6: memref<1x8x1x8x256xbf16, #tpu.memory_space<vmem>>) attributes {dimension_semantics = [#tpu.dimension_semantics<parallel>, #tpu.dimension_semantics<parallel>, #tpu.dimension_semantics<parallel>], iteration_bounds = array<i64: 2, 2, 1>, scalar_prefetch = 0 : i64, scratch_operands = 0 : i64, tpu.core_type = #tpu.core_type<tc>, window_params = [{transform_indices = @transform_0, window_bounds = array<i64: 1, 8, 8, 128>}, {transform_indices = @transform_1, window_bounds = array<i64: 1, 128, 256>}, {pipeline_mode = #tpu.pipeline_mode<synchronous>, transform_indices = @transform_2, window_bounds = array<i64: 1, 256>}, {transform_indices = @transform_3, window_bounds = array<i64: 1, 8, 1, 8, 256>}]} {
    %c0 = arith.constant 0 : index
    %c0_0 = arith.constant 0 : index
    %c0_1 = arith.constant 0 : index
    %0 = vector.load %arg4[%c0, %c0_0, %c0_1] : memref<1x128x256xbf16, #tpu.memory_space<vmem>>, vector<1x128x256xbf16>
    %1 = vector.shape_cast %0 : vector<1x128x256xbf16> to vector<128x256xbf16>
    %c0_2 = arith.constant 0 : index
    %c0_3 = arith.constant 0 : index
    %2 = vector.load %arg5[%c0_2, %c0_3] : memref<1x256xf32, #tpu.memory_space<vmem>>, vector<1x256xf32>
    %c0_4 = arith.constant 0 : index
    %c0_5 = arith.constant 0 : index
    %c0_6 = arith.constant 0 : index
    %c0_7 = arith.constant 0 : index
    %3 = vector.load %arg3[%c0_4, %c0_5, %c0_6, %c0_7] : memref<1x8x8x128xbf16, #tpu.memory_space<vmem>>, vector<1x1x8x128xbf16>
    %4 = vector.shape_cast %3 : vector<1x1x8x128xbf16> to vector<8x128xbf16>
    %cst = arith.constant dense<0.000000e+00> : vector<8x256xf32>
    %5 = tpu.matmul %4, %1, %cst {dimension_numbers = #tpu.dot_dimension_numbers<[1], [0], [0], [1], [0, 0, 1, 1], [], []>} : vector<8x128xbf16>, vector<128x256xbf16>, vector<8x256xf32> -> vector<8x256xf32>
    %6 = vector.broadcast %2 : vector<1x256xf32> to vector<8x256xf32>
    %7 = arith.addf %5, %6 : vector<8x256xf32>
    %8 = arith.truncf %7 : vector<8x256xf32> to vector<8x256xbf16>
    %c0_8 = arith.constant 0 : index
    %c0_9 = arith.constant 0 : index
    %c0_10 = arith.constant 0 : index
    %c0_11 = arith.constant 0 : index
    %c0_12 = arith.constant 0 : index
    %9 = vector.load %arg6[%c0_8, %c0_9, %c0_10, %c0_11, %c0_12] : memref<1x8x1x8x256xbf16, #tpu.memory_space<vmem>>, vector<1x1x1x8x256xbf16>
    %10 = vector.shape_cast %9 : vector<1x1x1x8x256xbf16> to vector<8x256xbf16>
    %11 = vector.shape_cast %8 : vector<8x256xbf16> to vector<1x1x1x8x256xbf16>
    tpu.vector_store %arg6[%c0_8, %c0_9, %c0_10, %c0_11, %c0_12], %11 {strides = array<i32>} : memref<1x8x1x8x256xbf16, #tpu.memory_space<vmem>>, vector<1x1x1x8x256xbf16>,
    %c0_13 = arith.constant 0 : index
    %c1 = arith.constant 1 : index
    %c0_14 = arith.constant 0 : index
    %c0_15 = arith.constant 0 : index
    %12 = vector.load %arg3[%c0_13, %c1, %c0_14, %c0_15] : memref<1x8x8x128xbf16, #tpu.memory_space<vmem>>, vector<1x1x8x128xbf16>
    %13 = vector.shape_cast %12 : vector<1x1x8x128xbf16> to vector<8x128xbf16>
    %cst_16 = arith.constant dense<0.000000e+00> : vector<8x256xf32>
    %14 = tpu.matmul %13, %1, %cst_16 {dimension_numbers = #tpu.dot_dimension_numbers<[1], [0], [0], [1], [0, 0, 1, 1], [], []>} : vector<8x128xbf16>, vector<128x256xbf16>, vector<8x256xf32> -> vector<8x256xf32>
    %15 = vector.broadcast %2 : vector<1x256xf32> to vector<8x256xf32>
    %16 = arith.addf %14, %15 : vector<8x256xf32>
    %17 = arith.truncf %16 : vector<8x256xf32> to vector<8x256xbf16>
    %c0_17 = arith.constant 0 : index
    %c1_18 = arith.constant 1 : index
    %c0_19 = arith.constant 0 : index
    %c0_20 = arith.constant 0 : index
    %c0_21 = arith.constant 0 : index
    %18 = vector.load %arg6[%c0_17, %c1_18, %c0_19, %c0_20, %c0_21] : memref<1x8x1x8x256xbf16, #tpu.memory_space<vmem>>, vector<1x1x1x8x256xbf16>
    %19 = vector.shape_cast %18 : vector<1x1x1x8x256xbf16> to vector<8x256xbf16>
    %20 = vector.shape_cast %17 : vector<8x256xbf16> to vector<1x1x1x8x256xbf16>
    tpu.vector_store %arg6[%c0_17, %c1_18, %c0_19, %c0_20, %c0_21], %20 {strides = array<i32>} : memref<1x8x1x8x256xbf16, #tpu.memory_space<vmem>>, vector<1x1x1x8x256xbf16>,
    %c0_22 = arith.constant 0 : index
    %c2 = arith.constant 2 : index
    %c0_23 = arith.constant 0 : index
    %c0_24 = arith.constant 0 : index
    %21 = vector.load %arg3[%c0_22, %c2, %c0_23, %c0_24] : memref<1x8x8x128xbf16, #tpu.memory_space<vmem>>, vector<1x1x8x128xbf16>
    %22 = vector.shape_cast %21 : vector<1x1x8x128xbf16> to vector<8x128xbf16>
    %cst_25 = arith.constant dense<0.000000e+00> : vector<8x256xf32>
    %23 = tpu.matmul %22, %1, %cst_25 {dimension_numbers = #tpu.dot_dimension_numbers<[1], [0], [0], [1], [0, 0, 1, 1], [], []>} : vector<8x128xbf16>, vector<128x256xbf16>, vector<8x256xf32> -> vector<8x256xf32>
    %24 = vector.broadcast %2 : vector<1x256xf32> to vector<8x256xf32>
    %25 = arith.addf %23, %24 : vector<8x256xf32>
    %26 = arith.truncf %25 : vector<8x256xf32> to vector<8x256xbf16>
    %c0_26 = arith.constant 0 : index
    %c2_27 = arith.constant 2 : index
    %c0_28 = arith.constant 0 : index
    %c0_29 = arith.constant 0 : index
    %c0_30 = arith.constant 0 : index
    %27 = vector.load %arg6[%c0_26, %c2_27, %c0_28, %c0_29, %c0_30] : memref<1x8x1x8x256xbf16, #tpu.memory_space<vmem>>, vector<1x1x1x8x256xbf16>
    %28 = vector.shape_cast %27 : vector<1x1x1x8x256xbf16> to vector<8x256xbf16>
    %29 = vector.shape_cast %26 : vector<8x256xbf16> to vector<1x1x1x8x256xbf16>
    tpu.vector_store %arg6[%c0_26, %c2_27, %c0_28, %c0_29, %c0_30], %29 {strides = array<i32>} : memref<1x8x1x8x256xbf16, #tpu.memory_space<vmem>>, vector<1x1x1x8x256xbf16>,
    %c0_31 = arith.constant 0 : index
    %c3 = arith.constant 3 : index
    %c0_32 = arith.constant 0 : index
    %c0_33 = arith.constant 0 : index
    %30 = vector.load %arg3[%c0_31, %c3, %c0_32, %c0_33] : memref<1x8x8x128xbf16, #tpu.memory_space<vmem>>, vector<1x1x8x128xbf16>
    %31 = vector.shape_cast %30 : vector<1x1x8x128xbf16> to vector<8x128xbf16>
    %cst_34 = arith.constant dense<0.000000e+00> : vector<8x256xf32>
    %32 = tpu.matmul %31, %1, %cst_34 {dimension_numbers = #tpu.dot_dimension_numbers<[1], [0], [0], [1], [0, 0, 1, 1], [], []>} : vector<8x128xbf16>, vector<128x256xbf16>, vector<8x256xf32> -> vector<8x256xf32>
    %33 = vector.broadcast %2 : vector<1x256xf32> to vector<8x256xf32>
    %34 = arith.addf %32, %33 : vector<8x256xf32>
    %35 = arith.truncf %34 : vector<8x256xf32> to vector<8x256xbf16>
    %c0_35 = arith.constant 0 : index
    %c3_36 = arith.constant 3 : index
    %c0_37 = arith.constant 0 : index
    %c0_38 = arith.constant 0 : index
    %c0_39 = arith.constant 0 : index
    %36 = vector.load %arg6[%c0_35, %c3_36, %c0_37, %c0_38, %c0_39] : memref<1x8x1x8x256xbf16, #tpu.memory_space<vmem>>, vector<1x1x1x8x256xbf16>
    %37 = vector.shape_cast %36 : vector<1x1x1x8x256xbf16> to vector<8x256xbf16>
    %38 = vector.shape_cast %35 : vector<8x256xbf16> to vector<1x1x1x8x256xbf16>
    tpu.vector_store %arg6[%c0_35, %c3_36, %c0_37, %c0_38, %c0_39], %38 {strides = array<i32>} : memref<1x8x1x8x256xbf16, #tpu.memory_space<vmem>>, vector<1x1x1x8x256xbf16>,
    %c0_40 = arith.constant 0 : index
    %c4 = arith.constant 4 : index
    %c0_41 = arith.constant 0 : index
    %c0_42 = arith.constant 0 : index
    %39 = vector.load %arg3[%c0_40, %c4, %c0_41, %c0_42] : memref<1x8x8x128xbf16, #tpu.memory_space<vmem>>, vector<1x1x8x128xbf16>
    %40 = vector.shape_cast %39 : vector<1x1x8x128xbf16> to vector<8x128xbf16>
    %cst_43 = arith.constant dense<0.000000e+00> : vector<8x256xf32>
    %41 = tpu.matmul %40, %1, %cst_43 {dimension_numbers = #tpu.dot_dimension_numbers<[1], [0], [0], [1], [0, 0, 1, 1], [], []>} : vector<8x128xbf16>, vector<128x256xbf16>, vector<8x256xf32> -> vector<8x256xf32>
    %42 = vector.broadcast %2 : vector<1x256xf32> to vector<8x256xf32>
    %43 = arith.addf %41, %42 : vector<8x256xf32>
    %44 = arith.truncf %43 : vector<8x256xf32> to vector<8x256xbf16>
    %c0_44 = arith.constant 0 : index
    %c4_45 = arith.constant 4 : index
    %c0_46 = arith.constant 0 : index
    %c0_47 = arith.constant 0 : index
    %c0_48 = arith.constant 0 : index
    %45 = vector.load %arg6[%c0_44, %c4_45, %c0_46, %c0_47, %c0_48] : memref<1x8x1x8x256xbf16, #tpu.memory_space<vmem>>, vector<1x1x1x8x256xbf16>
    %46 = vector.shape_cast %45 : vector<1x1x1x8x256xbf16> to vector<8x256xbf16>
    %47 = vector.shape_cast %44 : vector<8x256xbf16> to vector<1x1x1x8x256xbf16>
    tpu.vector_store %arg6[%c0_44, %c4_45, %c0_46, %c0_47, %c0_48], %47 {strides = array<i32>} : memref<1x8x1x8x256xbf16, #tpu.memory_space<vmem>>, vector<1x1x1x8x256xbf16>,
    %c0_49 = arith.constant 0 : index
    %c5 = arith.constant 5 : index
    %c0_50 = arith.constant 0 : index
    %c0_51 = arith.constant 0 : index
    %48 = vector.load %arg3[%c0_49, %c5, %c0_50, %c0_51] : memref<1x8x8x128xbf16, #tpu.memory_space<vmem>>, vector<1x1x8x128xbf16>
    %49 = vector.shape_cast %48 : vector<1x1x8x128xbf16> to vector<8x128xbf16>
    %cst_52 = arith.constant dense<0.000000e+00> : vector<8x256xf32>
    %50 = tpu.matmul %49, %1, %cst_52 {dimension_numbers = #tpu.dot_dimension_numbers<[1], [0], [0], [1], [0, 0, 1, 1], [], []>} : vector<8x128xbf16>, vector<128x256xbf16>, vector<8x256xf32> -> vector<8x256xf32>
    %51 = vector.broadcast %2 : vector<1x256xf32> to vector<8x256xf32>
    %52 = arith.addf %50, %51 : vector<8x256xf32>
    %53 = arith.truncf %52 : vector<8x256xf32> to vector<8x256xbf16>
    %c0_53 = arith.constant 0 : index
    %c5_54 = arith.constant 5 : index
    %c0_55 = arith.constant 0 : index
    %c0_56 = arith.constant 0 : index
    %c0_57 = arith.constant 0 : index
    %54 = vector.load %arg6[%c0_53, %c5_54, %c0_55, %c0_56, %c0_57] : memref<1x8x1x8x256xbf16, #tpu.memory_space<vmem>>, vector<1x1x1x8x256xbf16>
    %55 = vector.shape_cast %54 : vector<1x1x1x8x256xbf16> to vector<8x256xbf16>
    %56 = vector.shape_cast %53 : vector<8x256xbf16> to vector<1x1x1x8x256xbf16>
    tpu.vector_store %arg6[%c0_53, %c5_54, %c0_55, %c0_56, %c0_57], %56 {strides = array<i32>} : memref<1x8x1x8x256xbf16, #tpu.memory_space<vmem>>, vector<1x1x1x8x256xbf16>,
    %c0_58 = arith.constant 0 : index
    %c6 = arith.constant 6 : index
    %c0_59 = arith.constant 0 : index
    %c0_60 = arith.constant 0 : index
    %57 = vector.load %arg3[%c0_58, %c6, %c0_59, %c0_60] : memref<1x8x8x128xbf16, #tpu.memory_space<vmem>>, vector<1x1x8x128xbf16>
    %58 = vector.shape_cast %57 : vector<1x1x8x128xbf16> to vector<8x128xbf16>
    %cst_61 = arith.constant dense<0.000000e+00> : vector<8x256xf32>
    %59 = tpu.matmul %58, %1, %cst_61 {dimension_numbers = #tpu.dot_dimension_numbers<[1], [0], [0], [1], [0, 0, 1, 1], [], []>} : vector<8x128xbf16>, vector<128x256xbf16>, vector<8x256xf32> -> vector<8x256xf32>
    %60 = vector.broadcast %2 : vector<1x256xf32> to vector<8x256xf32>
    %61 = arith.addf %59, %60 : vector<8x256xf32>
    %62 = arith.truncf %61 : vector<8x256xf32> to vector<8x256xbf16>
    %c0_62 = arith.constant 0 : index
    %c6_63 = arith.constant 6 : index
    %c0_64 = arith.constant 0 : index
    %c0_65 = arith.constant 0 : index
    %c0_66 = arith.constant 0 : index
    %63 = vector.load %arg6[%c0_62, %c6_63, %c0_64, %c0_65, %c0_66] : memref<1x8x1x8x256xbf16, #tpu.memory_space<vmem>>, vector<1x1x1x8x256xbf16>
    %64 = vector.shape_cast %63 : vector<1x1x1x8x256xbf16> to vector<8x256xbf16>
    %65 = vector.shape_cast %62 : vector<8x256xbf16> to vector<1x1x1x8x256xbf16>
    tpu.vector_store %arg6[%c0_62, %c6_63, %c0_64, %c0_65, %c0_66], %65 {strides = array<i32>} : memref<1x8x1x8x256xbf16, #tpu.memory_space<vmem>>, vector<1x1x1x8x256xbf16>,
    %c0_67 = arith.constant 0 : index
    %c7 = arith.constant 7 : index
    %c0_68 = arith.constant 0 : index
    %c0_69 = arith.constant 0 : index
    %66 = vector.load %arg3[%c0_67, %c7, %c0_68, %c0_69] : memref<1x8x8x128xbf16, #tpu.memory_space<vmem>>, vector<1x1x8x128xbf16>
    %67 = vector.shape_cast %66 : vector<1x1x8x128xbf16> to vector<8x128xbf16>
    %cst_70 = arith.constant dense<0.000000e+00> : vector<8x256xf32>
    %68 = tpu.matmul %67, %1, %cst_70 {dimension_numbers = #tpu.dot_dimension_numbers<[1], [0], [0], [1], [0, 0, 1, 1], [], []>} : vector<8x128xbf16>, vector<128x256xbf16>, vector<8x256xf32> -> vector<8x256xf32>
    %69 = vector.broadcast %2 : vector<1x256xf32> to vector<8x256xf32>
    %70 = arith.addf %68, %69 : vector<8x256xf32>
    %71 = arith.truncf %70 : vector<8x256xf32> to vector<8x256xbf16>
    %c0_71 = arith.constant 0 : index
    %c7_72 = arith.constant 7 : index
    %c0_73 = arith.constant 0 : index
    %c0_74 = arith.constant 0 : index
    %c0_75 = arith.constant 0 : index
    %72 = vector.load %arg6[%c0_71, %c7_72, %c0_73, %c0_74, %c0_75] : memref<1x8x1x8x256xbf16, #tpu.memory_space<vmem>>, vector<1x1x1x8x256xbf16>
    %73 = vector.shape_cast %72 : vector<1x1x1x8x256xbf16> to vector<8x256xbf16>
    %74 = vector.shape_cast %71 : vector<8x256xbf16> to vector<1x1x1x8x256xbf16>
    tpu.vector_store %arg6[%c0_71, %c7_72, %c0_73, %c0_74, %c0_75], %74 {strides = array<i32>} : memref<1x8x1x8x256xbf16, #tpu.memory_space<vmem>>, vector<1x1x1x8x256xbf16>,
    return
  }
  func.func @transform_0(%arg0: i32, %arg1: i32, %arg2: i32) -> (i32, i32, i32, i32) {
    %c0_i32 = arith.constant 0 : i32
    %c0_i32_0 = arith.constant 0 : i32
    %c0_i32_1 = arith.constant 0 : i32
    return %arg0, %arg2, %c0_i32, %c0_i32_0 : i32, i32, i32, i32
  }
  func.func @transform_1(%arg0: i32, %arg1: i32, %arg2: i32) -> (i32, i32, i32) {
    %c0_i32 = arith.constant 0 : i32
    %c0_i32_0 = arith.constant 0 : i32
    %c0_i32_1 = arith.constant 0 : i32
    return %arg1, %c0_i32, %c0_i32_0 : i32, i32, i32
  }
  func.func @transform_2(%arg0: i32, %arg1: i32, %arg2: i32) -> (i32, i32) {
    %c0_i32 = arith.constant 0 : i32
    %c0_i32_0 = arith.constant 0 : i32
    %c0_i32_1 = arith.constant 0 : i32
    return %c0_i32, %c0_i32_0 : i32, i32
  }
  func.func @transform_3(%arg0: i32, %arg1: i32, %arg2: i32) -> (i32, i32, i32, i32, i32) {
    %c0_i32 = arith.constant 0 : i32
    %c0_i32_0 = arith.constant 0 : i32
    %c0_i32_1 = arith.constant 0 : i32
    return %arg0, %arg2, %arg1, %c0_i32, %c0_i32_0 : i32, i32, i32, i32, i32
  }
}

module attributes {stable_mosaic.version = 11 : i64} {
  func.func @kernel(%arg0: i32, %arg1: i32, %arg2: memref<1x1x20x128xbf16, #tpu.memory_space<vmem>>, %arg3: memref<1x1x20x128xbf16, #tpu.memory_space<vmem>>, %arg4: memref<1x1x20x128xbf16, #tpu.memory_space<vmem>>, %arg5: memref<1x1x16x128xbf16, #tpu.memory_space<vmem>>, %arg6: memref<1x1x16x128xbf16, #tpu.memory_space<vmem>>, %arg7: memref<1x1x16x128xbf16, #tpu.memory_space<vmem>>, %arg8: memref<9x128x128xbf16, #tpu.memory_space<vmem>>, %arg9: memref<9x128x128xbf16, #tpu.memory_space<vmem>>, %arg10: memref<1x128xf32, #tpu.memory_space<vmem>>, %arg11: memref<1x1x14x128xbf16, #tpu.memory_space<vmem>>) attributes {dimension_semantics = [#tpu.dimension_semantics<parallel>, #tpu.dimension_semantics<parallel>], iteration_bounds = array<i64: 2, 14>, scalar_prefetch = 0 : i64, scratch_operands = 0 : i64, tpu.core_type = #tpu.core_type<tc>, window_params = [{transform_indices = @transform_0, window_bounds = array<i64: 1, 1, 20, 128>}, {transform_indices = @transform_1, window_bounds = array<i64: 1, 1, 20, 128>}, {transform_indices = @transform_2, window_bounds = array<i64: 1, 1, 20, 128>}, {transform_indices = @transform_3, window_bounds = array<i64: 1, 1, 16, 128>}, {transform_indices = @transform_4, window_bounds = array<i64: 1, 1, 16, 128>}, {transform_indices = @transform_5, window_bounds = array<i64: 1, 1, 16, 128>}, {pipeline_mode = #tpu.pipeline_mode<synchronous>, transform_indices = @transform_6, window_bounds = array<i64: 9, 128, 128>}, {pipeline_mode = #tpu.pipeline_mode<synchronous>, transform_indices = @transform_7, window_bounds = array<i64: 9, 128, 128>}, {pipeline_mode = #tpu.pipeline_mode<synchronous>, transform_indices = @transform_8, window_bounds = array<i64: 1, 128>}, {transform_indices = @transform_9, window_bounds = array<i64: 1, 1, 14, 128>}]} {
    %cst = arith.constant 0.000000e+00 : f32
    %0 = vector.broadcast %cst : f32 to vector<14x128xf32>
    %c0 = arith.constant 0 : index
    %c0_0 = arith.constant 0 : index
    %c0_1 = arith.constant 0 : index
    %c0_2 = arith.constant 0 : index
    %1 = vector.load %arg2[%c0, %c0_0, %c0_1, %c0_2] : memref<1x1x20x128xbf16, #tpu.memory_space<vmem>>, vector<1x1x20x128xbf16>
    %2 = vector.shape_cast %1 : vector<1x1x20x128xbf16> to vector<20x128xbf16>
    %3 = vector.extract_strided_slice %2 {offsets = [2, 0], sizes = [14, 128], strides = [1, 1]} : vector<20x128xbf16> to vector<14x128xbf16>
    %c0_3 = arith.constant 0 : index
    %c0_4 = arith.constant 0 : index
    %c0_5 = arith.constant 0 : index
    %4 = vector.load %arg8[%c0_3, %c0_4, %c0_5] : memref<9x128x128xbf16, #tpu.memory_space<vmem>>, vector<1x128x128xbf16>
    %5 = vector.shape_cast %4 : vector<1x128x128xbf16> to vector<128x128xbf16>
    %cst_6 = arith.constant dense<0.000000e+00> : vector<14x128xf32>
    %6 = tpu.matmul %3, %5, %cst_6 {dimension_numbers = #tpu.dot_dimension_numbers<[1], [0], [0], [1], [0, 0, 1, 1], [], []>} : vector<14x128xbf16>, vector<128x128xbf16>, vector<14x128xf32> -> vector<14x128xf32>
    %7 = arith.addf %0, %6 : vector<14x128xf32>
    %8 = vector.extract_strided_slice %2 {offsets = [3, 0], sizes = [14, 128], strides = [1, 1]} : vector<20x128xbf16> to vector<14x128xbf16>
    %c1 = arith.constant 1 : index
    %c0_7 = arith.constant 0 : index
    %c0_8 = arith.constant 0 : index
    %9 = vector.load %arg8[%c1, %c0_7, %c0_8] : memref<9x128x128xbf16, #tpu.memory_space<vmem>>, vector<1x128x128xbf16>
    %10 = vector.shape_cast %9 : vector<1x128x128xbf16> to vector<128x128xbf16>
    %cst_9 = arith.constant dense<0.000000e+00> : vector<14x128xf32>
    %11 = tpu.matmul %8, %10, %cst_9 {dimension_numbers = #tpu.dot_dimension_numbers<[1], [0], [0], [1], [0, 0, 1, 1], [], []>} : vector<14x128xbf16>, vector<128x128xbf16>, vector<14x128xf32> -> vector<14x128xf32>
    %12 = arith.addf %7, %11 : vector<14x128xf32>
    %13 = vector.extract_strided_slice %2 {offsets = [4, 0], sizes = [14, 128], strides = [1, 1]} : vector<20x128xbf16> to vector<14x128xbf16>
    %c2 = arith.constant 2 : index
    %c0_10 = arith.constant 0 : index
    %c0_11 = arith.constant 0 : index
    %14 = vector.load %arg8[%c2, %c0_10, %c0_11] : memref<9x128x128xbf16, #tpu.memory_space<vmem>>, vector<1x128x128xbf16>
    %15 = vector.shape_cast %14 : vector<1x128x128xbf16> to vector<128x128xbf16>
    %cst_12 = arith.constant dense<0.000000e+00> : vector<14x128xf32>
    %16 = tpu.matmul %13, %15, %cst_12 {dimension_numbers = #tpu.dot_dimension_numbers<[1], [0], [0], [1], [0, 0, 1, 1], [], []>} : vector<14x128xbf16>, vector<128x128xbf16>, vector<14x128xf32> -> vector<14x128xf32>
    %17 = arith.addf %12, %16 : vector<14x128xf32>
    %c0_13 = arith.constant 0 : index
    %c0_14 = arith.constant 0 : index
    %c0_15 = arith.constant 0 : index
    %c0_16 = arith.constant 0 : index
    %18 = vector.load %arg3[%c0_13, %c0_14, %c0_15, %c0_16] : memref<1x1x20x128xbf16, #tpu.memory_space<vmem>>, vector<1x1x20x128xbf16>
    %19 = vector.shape_cast %18 : vector<1x1x20x128xbf16> to vector<20x128xbf16>
    %20 = vector.extract_strided_slice %19 {offsets = [2, 0], sizes = [14, 128], strides = [1, 1]} : vector<20x128xbf16> to vector<14x128xbf16>
    %c3 = arith.constant 3 : index
    %c0_17 = arith.constant 0 : index
    %c0_18 = arith.constant 0 : index
    %21 = vector.load %arg8[%c3, %c0_17, %c0_18] : memref<9x128x128xbf16, #tpu.memory_space<vmem>>, vector<1x128x128xbf16>
    %22 = vector.shape_cast %21 : vector<1x128x128xbf16> to vector<128x128xbf16>
    %cst_19 = arith.constant dense<0.000000e+00> : vector<14x128xf32>
    %23 = tpu.matmul %20, %22, %cst_19 {dimension_numbers = #tpu.dot_dimension_numbers<[1], [0], [0], [1], [0, 0, 1, 1], [], []>} : vector<14x128xbf16>, vector<128x128xbf16>, vector<14x128xf32> -> vector<14x128xf32>
    %24 = arith.addf %17, %23 : vector<14x128xf32>
    %25 = vector.extract_strided_slice %19 {offsets = [3, 0], sizes = [14, 128], strides = [1, 1]} : vector<20x128xbf16> to vector<14x128xbf16>
    %c4 = arith.constant 4 : index
    %c0_20 = arith.constant 0 : index
    %c0_21 = arith.constant 0 : index
    %26 = vector.load %arg8[%c4, %c0_20, %c0_21] : memref<9x128x128xbf16, #tpu.memory_space<vmem>>, vector<1x128x128xbf16>
    %27 = vector.shape_cast %26 : vector<1x128x128xbf16> to vector<128x128xbf16>
    %cst_22 = arith.constant dense<0.000000e+00> : vector<14x128xf32>
    %28 = tpu.matmul %25, %27, %cst_22 {dimension_numbers = #tpu.dot_dimension_numbers<[1], [0], [0], [1], [0, 0, 1, 1], [], []>} : vector<14x128xbf16>, vector<128x128xbf16>, vector<14x128xf32> -> vector<14x128xf32>
    %29 = arith.addf %24, %28 : vector<14x128xf32>
    %30 = vector.extract_strided_slice %19 {offsets = [4, 0], sizes = [14, 128], strides = [1, 1]} : vector<20x128xbf16> to vector<14x128xbf16>
    %c5 = arith.constant 5 : index
    %c0_23 = arith.constant 0 : index
    %c0_24 = arith.constant 0 : index
    %31 = vector.load %arg8[%c5, %c0_23, %c0_24] : memref<9x128x128xbf16, #tpu.memory_space<vmem>>, vector<1x128x128xbf16>
    %32 = vector.shape_cast %31 : vector<1x128x128xbf16> to vector<128x128xbf16>
    %cst_25 = arith.constant dense<0.000000e+00> : vector<14x128xf32>
    %33 = tpu.matmul %30, %32, %cst_25 {dimension_numbers = #tpu.dot_dimension_numbers<[1], [0], [0], [1], [0, 0, 1, 1], [], []>} : vector<14x128xbf16>, vector<128x128xbf16>, vector<14x128xf32> -> vector<14x128xf32>
    %34 = arith.addf %29, %33 : vector<14x128xf32>
    %c0_26 = arith.constant 0 : index
    %c0_27 = arith.constant 0 : index
    %c0_28 = arith.constant 0 : index
    %c0_29 = arith.constant 0 : index
    %35 = vector.load %arg4[%c0_26, %c0_27, %c0_28, %c0_29] : memref<1x1x20x128xbf16, #tpu.memory_space<vmem>>, vector<1x1x20x128xbf16>
    %36 = vector.shape_cast %35 : vector<1x1x20x128xbf16> to vector<20x128xbf16>
    %37 = vector.extract_strided_slice %36 {offsets = [2, 0], sizes = [14, 128], strides = [1, 1]} : vector<20x128xbf16> to vector<14x128xbf16>
    %c6 = arith.constant 6 : index
    %c0_30 = arith.constant 0 : index
    %c0_31 = arith.constant 0 : index
    %38 = vector.load %arg8[%c6, %c0_30, %c0_31] : memref<9x128x128xbf16, #tpu.memory_space<vmem>>, vector<1x128x128xbf16>
    %39 = vector.shape_cast %38 : vector<1x128x128xbf16> to vector<128x128xbf16>
    %cst_32 = arith.constant dense<0.000000e+00> : vector<14x128xf32>
    %40 = tpu.matmul %37, %39, %cst_32 {dimension_numbers = #tpu.dot_dimension_numbers<[1], [0], [0], [1], [0, 0, 1, 1], [], []>} : vector<14x128xbf16>, vector<128x128xbf16>, vector<14x128xf32> -> vector<14x128xf32>
    %41 = arith.addf %34, %40 : vector<14x128xf32>
    %42 = vector.extract_strided_slice %36 {offsets = [3, 0], sizes = [14, 128], strides = [1, 1]} : vector<20x128xbf16> to vector<14x128xbf16>
    %c7 = arith.constant 7 : index
    %c0_33 = arith.constant 0 : index
    %c0_34 = arith.constant 0 : index
    %43 = vector.load %arg8[%c7, %c0_33, %c0_34] : memref<9x128x128xbf16, #tpu.memory_space<vmem>>, vector<1x128x128xbf16>
    %44 = vector.shape_cast %43 : vector<1x128x128xbf16> to vector<128x128xbf16>
    %cst_35 = arith.constant dense<0.000000e+00> : vector<14x128xf32>
    %45 = tpu.matmul %42, %44, %cst_35 {dimension_numbers = #tpu.dot_dimension_numbers<[1], [0], [0], [1], [0, 0, 1, 1], [], []>} : vector<14x128xbf16>, vector<128x128xbf16>, vector<14x128xf32> -> vector<14x128xf32>
    %46 = arith.addf %41, %45 : vector<14x128xf32>
    %47 = vector.extract_strided_slice %36 {offsets = [4, 0], sizes = [14, 128], strides = [1, 1]} : vector<20x128xbf16> to vector<14x128xbf16>
    %c8 = arith.constant 8 : index
    %c0_36 = arith.constant 0 : index
    %c0_37 = arith.constant 0 : index
    %48 = vector.load %arg8[%c8, %c0_36, %c0_37] : memref<9x128x128xbf16, #tpu.memory_space<vmem>>, vector<1x128x128xbf16>
    %49 = vector.shape_cast %48 : vector<1x128x128xbf16> to vector<128x128xbf16>
    %cst_38 = arith.constant dense<0.000000e+00> : vector<14x128xf32>
    %50 = tpu.matmul %47, %49, %cst_38 {dimension_numbers = #tpu.dot_dimension_numbers<[1], [0], [0], [1], [0, 0, 1, 1], [], []>} : vector<14x128xbf16>, vector<128x128xbf16>, vector<14x128xf32> -> vector<14x128xf32>
    %51 = arith.addf %46, %50 : vector<14x128xf32>
    %c0_39 = arith.constant 0 : index
    %c0_40 = arith.constant 0 : index
    %c0_41 = arith.constant 0 : index
    %c0_42 = arith.constant 0 : index
    %52 = vector.load %arg5[%c0_39, %c0_40, %c0_41, %c0_42] : memref<1x1x16x128xbf16, #tpu.memory_space<vmem>>, vector<1x1x16x128xbf16>
    %53 = vector.shape_cast %52 : vector<1x1x16x128xbf16> to vector<16x128xbf16>
    %54 = vector.extract_strided_slice %53 {offsets = [0, 0], sizes = [14, 128], strides = [1, 1]} : vector<16x128xbf16> to vector<14x128xbf16>
    %c0_43 = arith.constant 0 : index
    %c0_44 = arith.constant 0 : index
    %c0_45 = arith.constant 0 : index
    %55 = vector.load %arg9[%c0_43, %c0_44, %c0_45] : memref<9x128x128xbf16, #tpu.memory_space<vmem>>, vector<1x128x128xbf16>
    %56 = vector.shape_cast %55 : vector<1x128x128xbf16> to vector<128x128xbf16>
    %cst_46 = arith.constant dense<0.000000e+00> : vector<14x128xf32>
    %57 = tpu.matmul %54, %56, %cst_46 {dimension_numbers = #tpu.dot_dimension_numbers<[1], [0], [0], [1], [0, 0, 1, 1], [], []>} : vector<14x128xbf16>, vector<128x128xbf16>, vector<14x128xf32> -> vector<14x128xf32>
    %58 = arith.addf %51, %57 : vector<14x128xf32>
    %59 = vector.extract_strided_slice %53 {offsets = [1, 0], sizes = [14, 128], strides = [1, 1]} : vector<16x128xbf16> to vector<14x128xbf16>
    %c1_47 = arith.constant 1 : index
    %c0_48 = arith.constant 0 : index
    %c0_49 = arith.constant 0 : index
    %60 = vector.load %arg9[%c1_47, %c0_48, %c0_49] : memref<9x128x128xbf16, #tpu.memory_space<vmem>>, vector<1x128x128xbf16>
    %61 = vector.shape_cast %60 : vector<1x128x128xbf16> to vector<128x128xbf16>
    %cst_50 = arith.constant dense<0.000000e+00> : vector<14x128xf32>
    %62 = tpu.matmul %59, %61, %cst_50 {dimension_numbers = #tpu.dot_dimension_numbers<[1], [0], [0], [1], [0, 0, 1, 1], [], []>} : vector<14x128xbf16>, vector<128x128xbf16>, vector<14x128xf32> -> vector<14x128xf32>
    %63 = arith.addf %58, %62 : vector<14x128xf32>
    %64 = vector.extract_strided_slice %53 {offsets = [2, 0], sizes = [14, 128], strides = [1, 1]} : vector<16x128xbf16> to vector<14x128xbf16>
    %c2_51 = arith.constant 2 : index
    %c0_52 = arith.constant 0 : index
    %c0_53 = arith.constant 0 : index
    %65 = vector.load %arg9[%c2_51, %c0_52, %c0_53] : memref<9x128x128xbf16, #tpu.memory_space<vmem>>, vector<1x128x128xbf16>
    %66 = vector.shape_cast %65 : vector<1x128x128xbf16> to vector<128x128xbf16>
    %cst_54 = arith.constant dense<0.000000e+00> : vector<14x128xf32>
    %67 = tpu.matmul %64, %66, %cst_54 {dimension_numbers = #tpu.dot_dimension_numbers<[1], [0], [0], [1], [0, 0, 1, 1], [], []>} : vector<14x128xbf16>, vector<128x128xbf16>, vector<14x128xf32> -> vector<14x128xf32>
    %68 = arith.addf %63, %67 : vector<14x128xf32>
    %c0_55 = arith.constant 0 : index
    %c0_56 = arith.constant 0 : index
    %c0_57 = arith.constant 0 : index
    %c0_58 = arith.constant 0 : index
    %69 = vector.load %arg6[%c0_55, %c0_56, %c0_57, %c0_58] : memref<1x1x16x128xbf16, #tpu.memory_space<vmem>>, vector<1x1x16x128xbf16>
    %70 = vector.shape_cast %69 : vector<1x1x16x128xbf16> to vector<16x128xbf16>
    %71 = vector.extract_strided_slice %70 {offsets = [0, 0], sizes = [14, 128], strides = [1, 1]} : vector<16x128xbf16> to vector<14x128xbf16>
    %c3_59 = arith.constant 3 : index
    %c0_60 = arith.constant 0 : index
    %c0_61 = arith.constant 0 : index
    %72 = vector.load %arg9[%c3_59, %c0_60, %c0_61] : memref<9x128x128xbf16, #tpu.memory_space<vmem>>, vector<1x128x128xbf16>
    %73 = vector.shape_cast %72 : vector<1x128x128xbf16> to vector<128x128xbf16>
    %cst_62 = arith.constant dense<0.000000e+00> : vector<14x128xf32>
    %74 = tpu.matmul %71, %73, %cst_62 {dimension_numbers = #tpu.dot_dimension_numbers<[1], [0], [0], [1], [0, 0, 1, 1], [], []>} : vector<14x128xbf16>, vector<128x128xbf16>, vector<14x128xf32> -> vector<14x128xf32>
    %75 = arith.addf %68, %74 : vector<14x128xf32>
    %76 = vector.extract_strided_slice %70 {offsets = [1, 0], sizes = [14, 128], strides = [1, 1]} : vector<16x128xbf16> to vector<14x128xbf16>
    %c4_63 = arith.constant 4 : index
    %c0_64 = arith.constant 0 : index
    %c0_65 = arith.constant 0 : index
    %77 = vector.load %arg9[%c4_63, %c0_64, %c0_65] : memref<9x128x128xbf16, #tpu.memory_space<vmem>>, vector<1x128x128xbf16>
    %78 = vector.shape_cast %77 : vector<1x128x128xbf16> to vector<128x128xbf16>
    %cst_66 = arith.constant dense<0.000000e+00> : vector<14x128xf32>
    %79 = tpu.matmul %76, %78, %cst_66 {dimension_numbers = #tpu.dot_dimension_numbers<[1], [0], [0], [1], [0, 0, 1, 1], [], []>} : vector<14x128xbf16>, vector<128x128xbf16>, vector<14x128xf32> -> vector<14x128xf32>
    %80 = arith.addf %75, %79 : vector<14x128xf32>
    %81 = vector.extract_strided_slice %70 {offsets = [2, 0], sizes = [14, 128], strides = [1, 1]} : vector<16x128xbf16> to vector<14x128xbf16>
    %c5_67 = arith.constant 5 : index
    %c0_68 = arith.constant 0 : index
    %c0_69 = arith.constant 0 : index
    %82 = vector.load %arg9[%c5_67, %c0_68, %c0_69] : memref<9x128x128xbf16, #tpu.memory_space<vmem>>, vector<1x128x128xbf16>
    %83 = vector.shape_cast %82 : vector<1x128x128xbf16> to vector<128x128xbf16>
    %cst_70 = arith.constant dense<0.000000e+00> : vector<14x128xf32>
    %84 = tpu.matmul %81, %83, %cst_70 {dimension_numbers = #tpu.dot_dimension_numbers<[1], [0], [0], [1], [0, 0, 1, 1], [], []>} : vector<14x128xbf16>, vector<128x128xbf16>, vector<14x128xf32> -> vector<14x128xf32>
    %85 = arith.addf %80, %84 : vector<14x128xf32>
    %c0_71 = arith.constant 0 : index
    %c0_72 = arith.constant 0 : index
    %c0_73 = arith.constant 0 : index
    %c0_74 = arith.constant 0 : index
    %86 = vector.load %arg7[%c0_71, %c0_72, %c0_73, %c0_74] : memref<1x1x16x128xbf16, #tpu.memory_space<vmem>>, vector<1x1x16x128xbf16>
    %87 = vector.shape_cast %86 : vector<1x1x16x128xbf16> to vector<16x128xbf16>
    %88 = vector.extract_strided_slice %87 {offsets = [0, 0], sizes = [14, 128], strides = [1, 1]} : vector<16x128xbf16> to vector<14x128xbf16>
    %c6_75 = arith.constant 6 : index
    %c0_76 = arith.constant 0 : index
    %c0_77 = arith.constant 0 : index
    %89 = vector.load %arg9[%c6_75, %c0_76, %c0_77] : memref<9x128x128xbf16, #tpu.memory_space<vmem>>, vector<1x128x128xbf16>
    %90 = vector.shape_cast %89 : vector<1x128x128xbf16> to vector<128x128xbf16>
    %cst_78 = arith.constant dense<0.000000e+00> : vector<14x128xf32>
    %91 = tpu.matmul %88, %90, %cst_78 {dimension_numbers = #tpu.dot_dimension_numbers<[1], [0], [0], [1], [0, 0, 1, 1], [], []>} : vector<14x128xbf16>, vector<128x128xbf16>, vector<14x128xf32> -> vector<14x128xf32>
    %92 = arith.addf %85, %91 : vector<14x128xf32>
    %93 = vector.extract_strided_slice %87 {offsets = [1, 0], sizes = [14, 128], strides = [1, 1]} : vector<16x128xbf16> to vector<14x128xbf16>
    %c7_79 = arith.constant 7 : index
    %c0_80 = arith.constant 0 : index
    %c0_81 = arith.constant 0 : index
    %94 = vector.load %arg9[%c7_79, %c0_80, %c0_81] : memref<9x128x128xbf16, #tpu.memory_space<vmem>>, vector<1x128x128xbf16>
    %95 = vector.shape_cast %94 : vector<1x128x128xbf16> to vector<128x128xbf16>
    %cst_82 = arith.constant dense<0.000000e+00> : vector<14x128xf32>
    %96 = tpu.matmul %93, %95, %cst_82 {dimension_numbers = #tpu.dot_dimension_numbers<[1], [0], [0], [1], [0, 0, 1, 1], [], []>} : vector<14x128xbf16>, vector<128x128xbf16>, vector<14x128xf32> -> vector<14x128xf32>
    %97 = arith.addf %92, %96 : vector<14x128xf32>
    %98 = vector.extract_strided_slice %87 {offsets = [2, 0], sizes = [14, 128], strides = [1, 1]} : vector<16x128xbf16> to vector<14x128xbf16>
    %c8_83 = arith.constant 8 : index
    %c0_84 = arith.constant 0 : index
    %c0_85 = arith.constant 0 : index
    %99 = vector.load %arg9[%c8_83, %c0_84, %c0_85] : memref<9x128x128xbf16, #tpu.memory_space<vmem>>, vector<1x128x128xbf16>
    %100 = vector.shape_cast %99 : vector<1x128x128xbf16> to vector<128x128xbf16>
    %cst_86 = arith.constant dense<0.000000e+00> : vector<14x128xf32>
    %101 = tpu.matmul %98, %100, %cst_86 {dimension_numbers = #tpu.dot_dimension_numbers<[1], [0], [0], [1], [0, 0, 1, 1], [], []>} : vector<14x128xbf16>, vector<128x128xbf16>, vector<14x128xf32> -> vector<14x128xf32>
    %102 = arith.addf %97, %101 : vector<14x128xf32>
    %c0_87 = arith.constant 0 : index
    %c0_88 = arith.constant 0 : index
    %103 = vector.load %arg10[%c0_87, %c0_88] : memref<1x128xf32, #tpu.memory_space<vmem>>, vector<1x128xf32>
    %104 = vector.broadcast %103 : vector<1x128xf32> to vector<14x128xf32>
    %105 = arith.addf %102, %104 : vector<14x128xf32>
    %cst_89 = arith.constant 0.000000e+00 : f32
    %106 = vector.broadcast %cst_89 : f32 to vector<14x128xf32>
    %107 = arith.maximumf %105, %106 : vector<14x128xf32>
    %108 = arith.truncf %107 : vector<14x128xf32> to vector<14x128xbf16>
    %c0_90 = arith.constant 0 : index
    %c0_91 = arith.constant 0 : index
    %c0_92 = arith.constant 0 : index
    %c0_93 = arith.constant 0 : index
    %109 = vector.load %arg11[%c0_90, %c0_91, %c0_92, %c0_93] : memref<1x1x14x128xbf16, #tpu.memory_space<vmem>>, vector<1x1x14x128xbf16>
    %110 = vector.shape_cast %109 : vector<1x1x14x128xbf16> to vector<14x128xbf16>
    %111 = vector.shape_cast %108 : vector<14x128xbf16> to vector<1x1x14x128xbf16>
    tpu.vector_store %arg11[%c0_90, %c0_91, %c0_92, %c0_93], %111 {strides = array<i32>} : memref<1x1x14x128xbf16, #tpu.memory_space<vmem>>, vector<1x1x14x128xbf16>,
    return
  }
  func.func @transform_0(%arg0: i32, %arg1: i32) -> (i32, i32, i32, i32) {
    %c2_i32 = arith.constant 2 : i32
    %0 = arith.addi %c2_i32, %arg1 : i32
    %c0_i32 = arith.constant 0 : i32
    %1 = arith.addi %0, %c0_i32 : i32
    %c0_i32_0 = arith.constant 0 : i32
    %c0_i32_1 = arith.constant 0 : i32
    %c0_i32_2 = arith.constant 0 : i32
    return %arg0, %1, %c0_i32_0, %c0_i32_1 : i32, i32, i32, i32
  }
  func.func @transform_1(%arg0: i32, %arg1: i32) -> (i32, i32, i32, i32) {
    %c2_i32 = arith.constant 2 : i32
    %0 = arith.addi %c2_i32, %arg1 : i32
    %c1_i32 = arith.constant 1 : i32
    %1 = arith.addi %0, %c1_i32 : i32
    %c0_i32 = arith.constant 0 : i32
    %c0_i32_0 = arith.constant 0 : i32
    %c0_i32_1 = arith.constant 0 : i32
    return %arg0, %1, %c0_i32, %c0_i32_0 : i32, i32, i32, i32
  }
  func.func @transform_2(%arg0: i32, %arg1: i32) -> (i32, i32, i32, i32) {
    %c2_i32 = arith.constant 2 : i32
    %0 = arith.addi %c2_i32, %arg1 : i32
    %c2_i32_0 = arith.constant 2 : i32
    %1 = arith.addi %0, %c2_i32_0 : i32
    %c0_i32 = arith.constant 0 : i32
    %c0_i32_1 = arith.constant 0 : i32
    %c0_i32_2 = arith.constant 0 : i32
    return %arg0, %1, %c0_i32, %c0_i32_1 : i32, i32, i32, i32
  }
  func.func @transform_3(%arg0: i32, %arg1: i32) -> (i32, i32, i32, i32) {
    %c0_i32 = arith.constant 0 : i32
    %0 = arith.addi %c0_i32, %arg1 : i32
    %c0_i32_0 = arith.constant 0 : i32
    %1 = arith.addi %0, %c0_i32_0 : i32
    %c0_i32_1 = arith.constant 0 : i32
    %c0_i32_2 = arith.constant 0 : i32
    %c0_i32_3 = arith.constant 0 : i32
    return %arg0, %1, %c0_i32_1, %c0_i32_2 : i32, i32, i32, i32
  }
  func.func @transform_4(%arg0: i32, %arg1: i32) -> (i32, i32, i32, i32) {
    %c0_i32 = arith.constant 0 : i32
    %0 = arith.addi %c0_i32, %arg1 : i32
    %c1_i32 = arith.constant 1 : i32
    %1 = arith.addi %0, %c1_i32 : i32
    %c0_i32_0 = arith.constant 0 : i32
    %c0_i32_1 = arith.constant 0 : i32
    %c0_i32_2 = arith.constant 0 : i32
    return %arg0, %1, %c0_i32_0, %c0_i32_1 : i32, i32, i32, i32
  }
  func.func @transform_5(%arg0: i32, %arg1: i32) -> (i32, i32, i32, i32) {
    %c0_i32 = arith.constant 0 : i32
    %0 = arith.addi %c0_i32, %arg1 : i32
    %c2_i32 = arith.constant 2 : i32
    %1 = arith.addi %0, %c2_i32 : i32
    %c0_i32_0 = arith.constant 0 : i32
    %c0_i32_1 = arith.constant 0 : i32
    %c0_i32_2 = arith.constant 0 : i32
    return %arg0, %1, %c0_i32_0, %c0_i32_1 : i32, i32, i32, i32
  }
  func.func @transform_6(%arg0: i32, %arg1: i32) -> (i32, i32, i32) {
    %c0_i32 = arith.constant 0 : i32
    %c0_i32_0 = arith.constant 0 : i32
    %c0_i32_1 = arith.constant 0 : i32
    %c0_i32_2 = arith.constant 0 : i32
    return %c0_i32, %c0_i32_0, %c0_i32_1 : i32, i32, i32
  }
  func.func @transform_7(%arg0: i32, %arg1: i32) -> (i32, i32, i32) {
    %c0_i32 = arith.constant 0 : i32
    %c0_i32_0 = arith.constant 0 : i32
    %c0_i32_1 = arith.constant 0 : i32
    %c0_i32_2 = arith.constant 0 : i32
    return %c0_i32, %c0_i32_0, %c0_i32_1 : i32, i32, i32
  }
  func.func @transform_8(%arg0: i32, %arg1: i32) -> (i32, i32) {
    %c0_i32 = arith.constant 0 : i32
    %c0_i32_0 = arith.constant 0 : i32
    %c0_i32_1 = arith.constant 0 : i32
    return %c0_i32, %c0_i32_0 : i32, i32
  }
  func.func @transform_9(%arg0: i32, %arg1: i32) -> (i32, i32, i32, i32) {
    %c0_i32 = arith.constant 0 : i32
    %c0_i32_0 = arith.constant 0 : i32
    %c0_i32_1 = arith.constant 0 : i32
    return %arg0, %arg1, %c0_i32, %c0_i32_0 : i32, i32, i32, i32
  }
}

module attributes {stable_mosaic.version = 11 : i64} {
  func.func @kernel(%arg0: i32, %arg1: i32, %arg2: memref<1x1x14x128xbf16, #tpu.memory_space<vmem>>, %arg3: memref<1x1x14x128xbf16, #tpu.memory_space<vmem>>, %arg4: memref<1x1x14x128xbf16, #tpu.memory_space<vmem>>, %arg5: memref<9x128x128xbf16, #tpu.memory_space<vmem>>, %arg6: memref<1x128xf32, #tpu.memory_space<vmem>>, %arg7: memref<1x1x12x128xbf16, #tpu.memory_space<vmem>>) attributes {dimension_semantics = [#tpu.dimension_semantics<parallel>, #tpu.dimension_semantics<parallel>], iteration_bounds = array<i64: 2, 12>, scalar_prefetch = 0 : i64, scratch_operands = 0 : i64, tpu.core_type = #tpu.core_type<tc>, window_params = [{transform_indices = @transform_0, window_bounds = array<i64: 1, 1, 14, 128>}, {transform_indices = @transform_1, window_bounds = array<i64: 1, 1, 14, 128>}, {transform_indices = @transform_2, window_bounds = array<i64: 1, 1, 14, 128>}, {pipeline_mode = #tpu.pipeline_mode<synchronous>, transform_indices = @transform_3, window_bounds = array<i64: 9, 128, 128>}, {pipeline_mode = #tpu.pipeline_mode<synchronous>, transform_indices = @transform_4, window_bounds = array<i64: 1, 128>}, {transform_indices = @transform_5, window_bounds = array<i64: 1, 1, 12, 128>}]} {
    %cst = arith.constant 0.000000e+00 : f32
    %0 = vector.broadcast %cst : f32 to vector<12x128xf32>
    %c0 = arith.constant 0 : index
    %c0_0 = arith.constant 0 : index
    %c0_1 = arith.constant 0 : index
    %c0_2 = arith.constant 0 : index
    %1 = vector.load %arg2[%c0, %c0_0, %c0_1, %c0_2] : memref<1x1x14x128xbf16, #tpu.memory_space<vmem>>, vector<1x1x14x128xbf16>
    %2 = vector.shape_cast %1 : vector<1x1x14x128xbf16> to vector<14x128xbf16>
    %3 = vector.extract_strided_slice %2 {offsets = [0, 0], sizes = [12, 128], strides = [1, 1]} : vector<14x128xbf16> to vector<12x128xbf16>
    %c0_3 = arith.constant 0 : index
    %c0_4 = arith.constant 0 : index
    %c0_5 = arith.constant 0 : index
    %4 = vector.load %arg5[%c0_3, %c0_4, %c0_5] : memref<9x128x128xbf16, #tpu.memory_space<vmem>>, vector<1x128x128xbf16>
    %5 = vector.shape_cast %4 : vector<1x128x128xbf16> to vector<128x128xbf16>
    %cst_6 = arith.constant dense<0.000000e+00> : vector<12x128xf32>
    %6 = tpu.matmul %3, %5, %cst_6 {dimension_numbers = #tpu.dot_dimension_numbers<[1], [0], [0], [1], [0, 0, 1, 1], [], []>} : vector<12x128xbf16>, vector<128x128xbf16>, vector<12x128xf32> -> vector<12x128xf32>
    %7 = arith.addf %0, %6 : vector<12x128xf32>
    %8 = vector.extract_strided_slice %2 {offsets = [1, 0], sizes = [12, 128], strides = [1, 1]} : vector<14x128xbf16> to vector<12x128xbf16>
    %c1 = arith.constant 1 : index
    %c0_7 = arith.constant 0 : index
    %c0_8 = arith.constant 0 : index
    %9 = vector.load %arg5[%c1, %c0_7, %c0_8] : memref<9x128x128xbf16, #tpu.memory_space<vmem>>, vector<1x128x128xbf16>
    %10 = vector.shape_cast %9 : vector<1x128x128xbf16> to vector<128x128xbf16>
    %cst_9 = arith.constant dense<0.000000e+00> : vector<12x128xf32>
    %11 = tpu.matmul %8, %10, %cst_9 {dimension_numbers = #tpu.dot_dimension_numbers<[1], [0], [0], [1], [0, 0, 1, 1], [], []>} : vector<12x128xbf16>, vector<128x128xbf16>, vector<12x128xf32> -> vector<12x128xf32>
    %12 = arith.addf %7, %11 : vector<12x128xf32>
    %13 = vector.extract_strided_slice %2 {offsets = [2, 0], sizes = [12, 128], strides = [1, 1]} : vector<14x128xbf16> to vector<12x128xbf16>
    %c2 = arith.constant 2 : index
    %c0_10 = arith.constant 0 : index
    %c0_11 = arith.constant 0 : index
    %14 = vector.load %arg5[%c2, %c0_10, %c0_11] : memref<9x128x128xbf16, #tpu.memory_space<vmem>>, vector<1x128x128xbf16>
    %15 = vector.shape_cast %14 : vector<1x128x128xbf16> to vector<128x128xbf16>
    %cst_12 = arith.constant dense<0.000000e+00> : vector<12x128xf32>
    %16 = tpu.matmul %13, %15, %cst_12 {dimension_numbers = #tpu.dot_dimension_numbers<[1], [0], [0], [1], [0, 0, 1, 1], [], []>} : vector<12x128xbf16>, vector<128x128xbf16>, vector<12x128xf32> -> vector<12x128xf32>
    %17 = arith.addf %12, %16 : vector<12x128xf32>
    %c0_13 = arith.constant 0 : index
    %c0_14 = arith.constant 0 : index
    %c0_15 = arith.constant 0 : index
    %c0_16 = arith.constant 0 : index
    %18 = vector.load %arg3[%c0_13, %c0_14, %c0_15, %c0_16] : memref<1x1x14x128xbf16, #tpu.memory_space<vmem>>, vector<1x1x14x128xbf16>
    %19 = vector.shape_cast %18 : vector<1x1x14x128xbf16> to vector<14x128xbf16>
    %20 = vector.extract_strided_slice %19 {offsets = [0, 0], sizes = [12, 128], strides = [1, 1]} : vector<14x128xbf16> to vector<12x128xbf16>
    %c3 = arith.constant 3 : index
    %c0_17 = arith.constant 0 : index
    %c0_18 = arith.constant 0 : index
    %21 = vector.load %arg5[%c3, %c0_17, %c0_18] : memref<9x128x128xbf16, #tpu.memory_space<vmem>>, vector<1x128x128xbf16>
    %22 = vector.shape_cast %21 : vector<1x128x128xbf16> to vector<128x128xbf16>
    %cst_19 = arith.constant dense<0.000000e+00> : vector<12x128xf32>
    %23 = tpu.matmul %20, %22, %cst_19 {dimension_numbers = #tpu.dot_dimension_numbers<[1], [0], [0], [1], [0, 0, 1, 1], [], []>} : vector<12x128xbf16>, vector<128x128xbf16>, vector<12x128xf32> -> vector<12x128xf32>
    %24 = arith.addf %17, %23 : vector<12x128xf32>
    %25 = vector.extract_strided_slice %19 {offsets = [1, 0], sizes = [12, 128], strides = [1, 1]} : vector<14x128xbf16> to vector<12x128xbf16>
    %c4 = arith.constant 4 : index
    %c0_20 = arith.constant 0 : index
    %c0_21 = arith.constant 0 : index
    %26 = vector.load %arg5[%c4, %c0_20, %c0_21] : memref<9x128x128xbf16, #tpu.memory_space<vmem>>, vector<1x128x128xbf16>
    %27 = vector.shape_cast %26 : vector<1x128x128xbf16> to vector<128x128xbf16>
    %cst_22 = arith.constant dense<0.000000e+00> : vector<12x128xf32>
    %28 = tpu.matmul %25, %27, %cst_22 {dimension_numbers = #tpu.dot_dimension_numbers<[1], [0], [0], [1], [0, 0, 1, 1], [], []>} : vector<12x128xbf16>, vector<128x128xbf16>, vector<12x128xf32> -> vector<12x128xf32>
    %29 = arith.addf %24, %28 : vector<12x128xf32>
    %30 = vector.extract_strided_slice %19 {offsets = [2, 0], sizes = [12, 128], strides = [1, 1]} : vector<14x128xbf16> to vector<12x128xbf16>
    %c5 = arith.constant 5 : index
    %c0_23 = arith.constant 0 : index
    %c0_24 = arith.constant 0 : index
    %31 = vector.load %arg5[%c5, %c0_23, %c0_24] : memref<9x128x128xbf16, #tpu.memory_space<vmem>>, vector<1x128x128xbf16>
    %32 = vector.shape_cast %31 : vector<1x128x128xbf16> to vector<128x128xbf16>
    %cst_25 = arith.constant dense<0.000000e+00> : vector<12x128xf32>
    %33 = tpu.matmul %30, %32, %cst_25 {dimension_numbers = #tpu.dot_dimension_numbers<[1], [0], [0], [1], [0, 0, 1, 1], [], []>} : vector<12x128xbf16>, vector<128x128xbf16>, vector<12x128xf32> -> vector<12x128xf32>
    %34 = arith.addf %29, %33 : vector<12x128xf32>
    %c0_26 = arith.constant 0 : index
    %c0_27 = arith.constant 0 : index
    %c0_28 = arith.constant 0 : index
    %c0_29 = arith.constant 0 : index
    %35 = vector.load %arg4[%c0_26, %c0_27, %c0_28, %c0_29] : memref<1x1x14x128xbf16, #tpu.memory_space<vmem>>, vector<1x1x14x128xbf16>
    %36 = vector.shape_cast %35 : vector<1x1x14x128xbf16> to vector<14x128xbf16>
    %37 = vector.extract_strided_slice %36 {offsets = [0, 0], sizes = [12, 128], strides = [1, 1]} : vector<14x128xbf16> to vector<12x128xbf16>
    %c6 = arith.constant 6 : index
    %c0_30 = arith.constant 0 : index
    %c0_31 = arith.constant 0 : index
    %38 = vector.load %arg5[%c6, %c0_30, %c0_31] : memref<9x128x128xbf16, #tpu.memory_space<vmem>>, vector<1x128x128xbf16>
    %39 = vector.shape_cast %38 : vector<1x128x128xbf16> to vector<128x128xbf16>
    %cst_32 = arith.constant dense<0.000000e+00> : vector<12x128xf32>
    %40 = tpu.matmul %37, %39, %cst_32 {dimension_numbers = #tpu.dot_dimension_numbers<[1], [0], [0], [1], [0, 0, 1, 1], [], []>} : vector<12x128xbf16>, vector<128x128xbf16>, vector<12x128xf32> -> vector<12x128xf32>
    %41 = arith.addf %34, %40 : vector<12x128xf32>
    %42 = vector.extract_strided_slice %36 {offsets = [1, 0], sizes = [12, 128], strides = [1, 1]} : vector<14x128xbf16> to vector<12x128xbf16>
    %c7 = arith.constant 7 : index
    %c0_33 = arith.constant 0 : index
    %c0_34 = arith.constant 0 : index
    %43 = vector.load %arg5[%c7, %c0_33, %c0_34] : memref<9x128x128xbf16, #tpu.memory_space<vmem>>, vector<1x128x128xbf16>
    %44 = vector.shape_cast %43 : vector<1x128x128xbf16> to vector<128x128xbf16>
    %cst_35 = arith.constant dense<0.000000e+00> : vector<12x128xf32>
    %45 = tpu.matmul %42, %44, %cst_35 {dimension_numbers = #tpu.dot_dimension_numbers<[1], [0], [0], [1], [0, 0, 1, 1], [], []>} : vector<12x128xbf16>, vector<128x128xbf16>, vector<12x128xf32> -> vector<12x128xf32>
    %46 = arith.addf %41, %45 : vector<12x128xf32>
    %47 = vector.extract_strided_slice %36 {offsets = [2, 0], sizes = [12, 128], strides = [1, 1]} : vector<14x128xbf16> to vector<12x128xbf16>
    %c8 = arith.constant 8 : index
    %c0_36 = arith.constant 0 : index
    %c0_37 = arith.constant 0 : index
    %48 = vector.load %arg5[%c8, %c0_36, %c0_37] : memref<9x128x128xbf16, #tpu.memory_space<vmem>>, vector<1x128x128xbf16>
    %49 = vector.shape_cast %48 : vector<1x128x128xbf16> to vector<128x128xbf16>
    %cst_38 = arith.constant dense<0.000000e+00> : vector<12x128xf32>
    %50 = tpu.matmul %47, %49, %cst_38 {dimension_numbers = #tpu.dot_dimension_numbers<[1], [0], [0], [1], [0, 0, 1, 1], [], []>} : vector<12x128xbf16>, vector<128x128xbf16>, vector<12x128xf32> -> vector<12x128xf32>
    %51 = arith.addf %46, %50 : vector<12x128xf32>
    %c0_39 = arith.constant 0 : index
    %c0_40 = arith.constant 0 : index
    %52 = vector.load %arg6[%c0_39, %c0_40] : memref<1x128xf32, #tpu.memory_space<vmem>>, vector<1x128xf32>
    %53 = vector.broadcast %52 : vector<1x128xf32> to vector<12x128xf32>
    %54 = arith.addf %51, %53 : vector<12x128xf32>
    %cst_41 = arith.constant 0.000000e+00 : f32
    %55 = vector.broadcast %cst_41 : f32 to vector<12x128xf32>
    %56 = arith.maximumf %54, %55 : vector<12x128xf32>
    %57 = arith.truncf %56 : vector<12x128xf32> to vector<12x128xbf16>
    %c0_42 = arith.constant 0 : index
    %c0_43 = arith.constant 0 : index
    %c0_44 = arith.constant 0 : index
    %c0_45 = arith.constant 0 : index
    %58 = vector.load %arg7[%c0_42, %c0_43, %c0_44, %c0_45] : memref<1x1x12x128xbf16, #tpu.memory_space<vmem>>, vector<1x1x12x128xbf16>
    %59 = vector.shape_cast %58 : vector<1x1x12x128xbf16> to vector<12x128xbf16>
    %60 = vector.shape_cast %57 : vector<12x128xbf16> to vector<1x1x12x128xbf16>
    tpu.vector_store %arg7[%c0_42, %c0_43, %c0_44, %c0_45], %60 {strides = array<i32>} : memref<1x1x12x128xbf16, #tpu.memory_space<vmem>>, vector<1x1x12x128xbf16>,
    return
  }
  func.func @transform_0(%arg0: i32, %arg1: i32) -> (i32, i32, i32, i32) {
    %c0_i32 = arith.constant 0 : i32
    %0 = arith.addi %c0_i32, %arg1 : i32
    %c0_i32_0 = arith.constant 0 : i32
    %1 = arith.addi %0, %c0_i32_0 : i32
    %c0_i32_1 = arith.constant 0 : i32
    %c0_i32_2 = arith.constant 0 : i32
    %c0_i32_3 = arith.constant 0 : i32
    return %arg0, %1, %c0_i32_1, %c0_i32_2 : i32, i32, i32, i32
  }
  func.func @transform_1(%arg0: i32, %arg1: i32) -> (i32, i32, i32, i32) {
    %c0_i32 = arith.constant 0 : i32
    %0 = arith.addi %c0_i32, %arg1 : i32
    %c1_i32 = arith.constant 1 : i32
    %1 = arith.addi %0, %c1_i32 : i32
    %c0_i32_0 = arith.constant 0 : i32
    %c0_i32_1 = arith.constant 0 : i32
    %c0_i32_2 = arith.constant 0 : i32
    return %arg0, %1, %c0_i32_0, %c0_i32_1 : i32, i32, i32, i32
  }
  func.func @transform_2(%arg0: i32, %arg1: i32) -> (i32, i32, i32, i32) {
    %c0_i32 = arith.constant 0 : i32
    %0 = arith.addi %c0_i32, %arg1 : i32
    %c2_i32 = arith.constant 2 : i32
    %1 = arith.addi %0, %c2_i32 : i32
    %c0_i32_0 = arith.constant 0 : i32
    %c0_i32_1 = arith.constant 0 : i32
    %c0_i32_2 = arith.constant 0 : i32
    return %arg0, %1, %c0_i32_0, %c0_i32_1 : i32, i32, i32, i32
  }
  func.func @transform_3(%arg0: i32, %arg1: i32) -> (i32, i32, i32) {
    %c0_i32 = arith.constant 0 : i32
    %c0_i32_0 = arith.constant 0 : i32
    %c0_i32_1 = arith.constant 0 : i32
    %c0_i32_2 = arith.constant 0 : i32
    return %c0_i32, %c0_i32_0, %c0_i32_1 : i32, i32, i32
  }
  func.func @transform_4(%arg0: i32, %arg1: i32) -> (i32, i32) {
    %c0_i32 = arith.constant 0 : i32
    %c0_i32_0 = arith.constant 0 : i32
    %c0_i32_1 = arith.constant 0 : i32
    return %c0_i32, %c0_i32_0 : i32, i32
  }
  func.func @transform_5(%arg0: i32, %arg1: i32) -> (i32, i32, i32, i32) {
    %c0_i32 = arith.constant 0 : i32
    %c0_i32_0 = arith.constant 0 : i32
    %c0_i32_1 = arith.constant 0 : i32
    return %arg0, %arg1, %c0_i32, %c0_i32_0 : i32, i32, i32, i32
  }
}

</mosaic_0001>

<llo_original>
// kernel: tile.8
$region0: #{tile.8}
  #allocation0 [shape = 's32[1]{0}', space=sflag, size = 0x4, scoped, tag = 'scoped memory for tile.8']
  %s0 = inlined_call_operand.vmem [shape: f32[128], index: 0, kind: input, shape index: {}]
  %s1 = inlined_call_operand.vmem [shape: f32[2,128], index: 1, kind: output, shape index: {}]
  // Predicated region
  $region2: #{tile.8} parent=0 // pred_check
    _
  $region3: #{tile.8} parent=0 // pred_check_branch
    %3 = sbr.rel (0) target = $region5
  $region4: #{tile.8} parent=0 // pred_region
    _
  $region5: #{tile.8} parent=0 // pred_fallthru
    _
  %v4 = vld [vmem:[%s0] ss:$0 sm:$0xff]
  %5 = vst [vmem:[%s1] sm:$0x3] %v4

// kernel: _lambda_.3
$region0: #{_lambda_.3}
  #allocation0 [shape = 'u32[]', space=smem, size = 0x4, offset = 0x4, fixed_abs, tag = 'smem constant byte address 0x4 - core index']
  #allocation1 [shape = 'u32[144,128]{1,0:T(1,128)}', space=vmem, size = 0x12000, scoped, tag = 'internal scratch']
  %s0 = inlined_call_operand.vmem [shape: bf16[2,8,8,128], index: 0, kind: input, shape index: {}]
  %s1 = inlined_call_operand.vmem [shape: bf16[2,128,256], index: 1, kind: input, shape index: {}]
  %s2 = inlined_call_operand.vmem [shape: f32[1,256], index: 2, kind: input, shape index: {}]
  %s3 = inlined_call_operand.vmem [shape: bf16[2,8,2,8,256], index: 3, kind: output, shape index: {}]
  %s4 = sld [smem:[#allocation0]]
  $region79: #{_lambda_.3} parent=0
    _
  %s6 = ssub.s32 1, %s4
  %s7 = scalar_select 0, %s6, %s4
  $region1: #{_lambda_.3} parent=0
    #allocation2 [shape = 'u8[65536]{0}', space=vmem, size = 0x10000, scoped, tag = 'output window, operand 0']
    loop: start=0, step=1, limit=6
    $region2: #{_lambda_.3} parent=1 // loop_pre_header
      _
    $region3: #{_lambda_.3} parent=1 // loop_header
      %s9 = sphi 0, %s13
      %p10 = scmp.ge.s32.totalorder %s9, 6
      %s16 = sphi 0, %s35
      %s17 = sphi 0, %s31
      %s18 = sphi 0, %s27
      %s19 = sphi 0, %s16
      %s20 = sphi 0, %s17
      %s21 = sphi 0, %s18
      %s22 = sphi 0, %s19
      %s23 = sphi 0, %s20
      %s24 = sphi 0, %s21
      %s40 = sphi 0, %s42
      %s43 = sphi 0, %s40
      %s44 = sphi 0, %s43
      %s60 = sphi 0, %s44
      %s66 = sphi 0, %s68
      %s69 = sphi 0, %s66
      %s70 = sphi 0, %s69
      %s86 = sphi 0, %s70
      %s90 = sphi 0, %s90
      %s92 = sphi 0, %s90
      %s93 = sphi 0, %s92
      %s107 = sphi 0, %s93
      %s117 = sphi 0, %s119
      %s120 = sphi 0, %s117
      %s121 = sphi 0, %s120
      %s137 = sphi 0, %s121
    $region4: #{_lambda_.3} parent=1 // loop_header_branch
      %12 = sbr.rel (%p10) target = $region8
    $region5: #{_lambda_.3} parent=1 // loop_body
      %s14 = ssub.s32 %s9, 1
      %s15 = ssub.s32 %s9, 2
      %s25 = sadd.s32 1, %s18
      %p26 = scmp.ge.s32.totalorder %s25, 1
      %s27 = scalar_select %p26, 0, %s25
      %s28 = sadd.s32 1, %s17
      %s29 = scalar_select %p26, %s28, %s17
      %p30 = scmp.ge.s32.totalorder %s29, 2
      %s31 = scalar_select %p30, 0, %s29
      %s32 = sadd.s32 1, %s16
      %s33 = scalar_select %p30, %s32, %s16
      %p34 = scmp.ge.s32.totalorder %s33, 2
      %s35 = scalar_select %p34, 0, %s33
      %s36 = ssub.s32 %s16, %s35
      %s37 = ssub.s32 %s18, %s27
      %s38 = sor.u32 %s36, %s37
      %p39 = scmp.eq.s32.totalorder %s38, 0
      %s41 = sadd.s32 %s40, 1
      %s42 = scalar_select %p39, %s40, %s41
      %p45 = pneg %p39
      %p46 = scmp.eq.s32.totalorder %s9, 3
      %p47 = por %p45, %p46
      %p48 = scmp.ne.s32.totalorder %s40, %s43
      %p49 = scmp.eq.s32.totalorder %s9, 0
      %p50 = por %p48, %p49
      %p51 = scmp.ne.s32.totalorder %s40, %s43
      %p52 = scmp.eq.s32.totalorder %s14, 3
      %p53 = por %p51, %p52
      %p54 = scmp.ne.s32.totalorder %s43, %s44
      %p55 = scmp.eq.s32.totalorder %s14, 0
      %p56 = por %p54, %p55
      %p57 = scmp.ne.s32.totalorder %s43, %s44
      %p58 = scmp.eq.s32.totalorder %s15, 3
      %p59 = por %p57, %p58
      %p61 = scmp.ne.s32.totalorder %s44, %s60
      %p62 = scmp.eq.s32.totalorder %s15, 0
      %p63 = por %p61, %p62
      %s64 = ssub.s32 %s17, %s31
      %p65 = scmp.eq.s32.totalorder %s64, 0
      %s67 = sadd.s32 %s66, 1
      %s68 = scalar_select %p65, %s66, %s67
      %p71 = pneg %p65
      %p72 = scmp.eq.s32.totalorder %s9, 3
      %p73 = por %p71, %p72
      %p74 = scmp.ne.s32.totalorder %s66, %s69
      %p75 = scmp.eq.s32.totalorder %s9, 0
      %p76 = por %p74, %p75
      %p77 = scmp.ne.s32.totalorder %s66, %s69
      %p78 = scmp.eq.s32.totalorder %s14, 3
      %p79 = por %p77, %p78
      %p80 = scmp.ne.s32.totalorder %s69, %s70
      %p81 = scmp.eq.s32.totalorder %s14, 0
      %p82 = por %p80, %p81
      %p83 = scmp.ne.s32.totalorder %s69, %s70
      %p84 = scmp.eq.s32.totalorder %s15, 3
      %p85 = por %p83, %p84
      %p87 = scmp.ne.s32.totalorder %s70, %s86
      %p88 = scmp.eq.s32.totalorder %s15, 0
      %p89 = por %p87, %p88
      %s91 = sadd.s32 %s90, 1
      %p94 = scmp.eq.s32.totalorder %s9, 3
      %p95 = scmp.ne.s32.totalorder %s90, %s92
      %p96 = scmp.eq.s32.totalorder %s9, 0
      %p97 = por %p95, %p96
      %p98 = scmp.ne.s32.totalorder %s90, %s92
      %p99 = scmp.eq.s32.totalorder %s14, 3
      %p100 = por %p98, %p99
      %p101 = scmp.ne.s32.totalorder %s92, %s93
      %p102 = scmp.eq.s32.totalorder %s14, 0
      %p103 = por %p101, %p102
      %p104 = scmp.ne.s32.totalorder %s92, %s93
      %p105 = scmp.eq.s32.totalorder %s15, 3
      %p106 = por %p104, %p105
      %p108 = scmp.ne.s32.totalorder %s93, %s107
      %p109 = scmp.eq.s32.totalorder %s15, 0
      %p110 = por %p108, %p109
      %s111 = ssub.s32 %s16, %s35
      %s112 = ssub.s32 %s18, %s27
      %s113 = sor.u32 %s111, %s112
      %s114 = ssub.s32 %s17, %s31
      %s115 = sor.u32 %s113, %s114
      %p116 = scmp.eq.s32.totalorder %s115, 0
      %s118 = sadd.s32 %s117, 1
      %s119 = scalar_select %p116, %s117, %s118
      %p122 = pneg %p116
      %p123 = scmp.eq.s32.totalorder %s9, 3
      %p124 = por %p122, %p123
      %p125 = scmp.ne.s32.totalorder %s117, %s120
      %p126 = scmp.eq.s32.totalorder %s9, 0
      %p127 = por %p125, %p126
      %p128 = scmp.ne.s32.totalorder %s117, %s120
      %p129 = scmp.eq.s32.totalorder %s14, 3
      %p130 = por %p128, %p129
      %p131 = scmp.ne.s32.totalorder %s120, %s121
      %p132 = scmp.eq.s32.totalorder %s14, 0
      %p133 = por %p131, %p132
      %p134 = scmp.ne.s32.totalorder %s120, %s121
      %p135 = scmp.eq.s32.totalorder %s15, 3
      %p136 = por %p134, %p135
      %p138 = scmp.ne.s32.totalorder %s121, %s137
      %p139 = scmp.eq.s32.totalorder %s15, 0
      %p140 = por %p138, %p139
      %p141 = scmp.le.s32.totalorder 1, %s9
      %p142 = scmp.lt.s32.totalorder %s9, 5
      %p143 = pnand %p141, %p142
      %p144 = pneg %p143
      // Predicated region
      $region9: #{_lambda_.3} parent=5 // pred_check
        _
      $region10: #{_lambda_.3} parent=5 // pred_check_branch
        %146 = sbr.rel (%p143) target = $region12
      $region11: #{_lambda_.3} parent=5 // pred_region
        %s147 = ssub.s32 %s9, 1
        // Predicated region
        $region13: #{_lambda_.3} parent=11 // pred_check
          %p148 = pneg %p103
        $region14: #{_lambda_.3} parent=11 // pred_check_branch
          %150 = sbr.rel (%p148) target = $region16
        $region15: #{_lambda_.3} parent=11 // pred_region
          _
        $region16: #{_lambda_.3} parent=11 // pred_fallthru
          _
      $region12: #{_lambda_.3} parent=5 // pred_fallthru
        _
      %p151 = scmp.lt.s32.totalorder %s9, 4
      // Predicated region
      $region17: #{_lambda_.3} parent=5 // pred_check
        %p152 = pneg %p151
      $region18: #{_lambda_.3} parent=5 // pred_check_branch
        %154 = sbr.rel (%p152) target = $region20
      $region19: #{_lambda_.3} parent=5 // pred_region
        // Predicated region
        $region21: #{_lambda_.3} parent=19 // pred_check
          %p155 = pneg %p50
        $region22: #{_lambda_.3} parent=19 // pred_check_branch
          %157 = sbr.rel (%p155) target = $region24
        $region23: #{_lambda_.3} parent=19 // pred_region
          %s158 = smul.u32 8, %s18
          %p159 = scmp.lt.s32.totalorder %s16, 1
          %s160 = scalar_select %p159, %s16, 1
          %p161 = scmp.lt.s32.totalorder %s158, 7
          %s162 = scalar_select %p161, %s158, 7
          %s163 = smul.addr %s160, 8
          %s164 = sadd.s32 %s162, %s163
          %s165 = smul.addr %s164, 4
          %s166 = scalar_lea.vmem %s0, %s165
          %s167 = smul.u32 8, %s18
        $region24: #{_lambda_.3} parent=19 // pred_fallthru
          _
        // Predicated region
        $region25: #{_lambda_.3} parent=19 // pred_check
          %p168 = pneg %p76
        $region26: #{_lambda_.3} parent=19 // pred_check_branch
          %170 = sbr.rel (%p168) target = $region28
        $region27: #{_lambda_.3} parent=19 // pred_region
          %p171 = scmp.lt.s32.totalorder %s17, 1
          %s172 = scalar_select %p171, %s17, 1
          %s173 = smul.addr %s172, 32
          %s174 = smul.addr %s173, 4
          %s175 = scalar_lea.vmem %s1, %s174
        $region28: #{_lambda_.3} parent=19 // pred_fallthru
          _
      $region20: #{_lambda_.3} parent=5 // pred_fallthru
        _
      %p176 = scmp.le.s32.totalorder 1, %s9
      %p177 = scmp.lt.s32.totalorder %s9, 5
      %p178 = pnand %p176, %p177
      %p179 = pneg %p178
      // Predicated region
      $region29: #{_lambda_.3} parent=5 // pred_check
        _
      $region30: #{_lambda_.3} parent=5 // pred_check_branch
        %181 = sbr.rel (%p178) target = $region32
      $region31: #{_lambda_.3} parent=5 // pred_region
        %s182 = ssub.s32 %s9, 1
        %s183 = smul.u32 8, %s21
        %p184 = scmp.lt.s32.totalorder %s19, 1
        %s185 = scalar_select %p184, %s19, 1
        %p186 = scmp.lt.s32.totalorder %s183, 7
        %s187 = scalar_select %p186, %s183, 7
        %s188 = smul.addr %s185, 8
        %s189 = sadd.s32 %s187, %s188
        %s190 = smul.addr %s189, 4
        %s191 = scalar_lea.vmem %s0, %s190
        %p192 = pneg %p56
        %p193 = pneg %p53
        %p194 = scmp.lt.s32.totalorder %s20, 1
        %s195 = scalar_select %p194, %s20, 1
        %s196 = smul.addr %s195, 32
        %s197 = smul.addr %s196, 4
        %s198 = scalar_lea.vmem %s1, %s197
        %p199 = pneg %p82
        %p200 = pneg %p79
        %p201 = pneg %p103
        %p202 = pneg %p100
        %p203 = pneg %p133
        %p204 = pneg %p130
        %s205 = sand.u32 %s120, 1
        %s206 = sand.u32 %s120, 1
        %s207 = smul.addr %s206, 64
        %s208 = scalar_lea.vmem [#allocation2], %s207
        %s209 = smul.u32 8, %s21
        %p210 = scmp.lt.s32.totalorder %s19, 1
        %s211 = scalar_select %p210, %s19, 1
        %p212 = scmp.lt.s32.totalorder %s209, 7
        %s213 = scalar_select %p212, %s209, 7
        %s214 = smul.addr %s211, 8
        %s215 = sadd.s32 %s213, %s214
        %s216 = smul.addr %s215, 4
        %s217 = scalar_lea.vmem %s0, %s216
        %s218 = smul.u32 8, %s21
        %p219 = scmp.lt.s32.totalorder %s20, 1
        %s220 = scalar_select %p219, %s20, 1
        %s221 = smul.addr %s220, 32
        %s222 = smul.addr %s221, 4
        %s223 = scalar_lea.vmem %s1, %s222
        %s224 = smul.u32 8, %s21
        %v226 = vld [vmem:[%s223] sm:$0xff]
        %v227 = vld [vmem:[%s223 + $0x8] sm:$0xff]
        %v228 = vld [vmem:[%s223 + $0x10] sm:$0xff]
        %v229 = vld [vmem:[%s223 + $0x18] sm:$0xff]
        %v230 = vld [vmem:[%s223 + $0x20] sm:$0xff]
        %v231 = vld [vmem:[%s223 + $0x28] sm:$0xff]
        %v232 = vld [vmem:[%s223 + $0x30] sm:$0xff]
        %v233 = vld [vmem:[%s223 + $0x38] sm:$0xff]
        %v234 = vld [vmem:[%s223 + $0x40] sm:$0xff]
        %v235 = vld [vmem:[%s223 + $0x48] sm:$0xff]
        %v236 = vld [vmem:[%s223 + $0x50] sm:$0xff]
        %v237 = vld [vmem:[%s223 + $0x58] sm:$0xff]
        %v238 = vld [vmem:[%s223 + $0x60] sm:$0xff]
        %v239 = vld [vmem:[%s223 + $0x68] sm:$0xff]
        %v240 = vld [vmem:[%s223 + $0x70] sm:$0xff]
        %v241 = vld [vmem:[%s223 + $0x78] sm:$0xff]
        %v242 = vld [vmem:[%s2] sm:$0x3]
        %v243 = vld [vmem:[%s217] sm:$0xf]
        %v245 = vlaneseq
        %v246 = vshrl.u32 %v245, 7
        %v247 = vsub.s32 0, %v246
        %v248 = vrot.slane %v242, %v247
        %v249 = vlaneseq
        %v250 = vshrl.u32 %v249, 7
        %v251 = vsub.s32 1, %v250
        %v252 = vrot.slane %v242, %v251
        %v271 = vunpack.c.l.b16 %v226
        %v272 = vunpack.c.h.b16 %v226
        %v273 = vunpack.c.l.b16 %v227
        %v274 = vunpack.c.h.b16 %v227
        %v275 = vunpack.c.l.b16 %v228
        %v276 = vunpack.c.h.b16 %v228
        %v277 = vunpack.c.l.b16 %v229
        %v278 = vunpack.c.h.b16 %v229
        %v279 = vunpack.c.l.b16 %v230
        %v280 = vunpack.c.h.b16 %v230
        %v281 = vunpack.c.l.b16 %v231
        %v282 = vunpack.c.h.b16 %v231
        %v283 = vunpack.c.l.b16 %v232
        %v284 = vunpack.c.h.b16 %v232
        %v285 = vunpack.c.l.b16 %v233
        %v286 = vunpack.c.h.b16 %v233
        %v287 = vunpack.c.l.b16 %v234
        %v288 = vunpack.c.h.b16 %v234
        %v289 = vunpack.c.l.b16 %v235
        %v290 = vunpack.c.h.b16 %v235
        %v291 = vunpack.c.l.b16 %v236
        %v292 = vunpack.c.h.b16 %v236
        %v293 = vunpack.c.l.b16 %v237
        %v294 = vunpack.c.h.b16 %v237
        %v295 = vunpack.c.l.b16 %v238
        %v296 = vunpack.c.h.b16 %v238
        %v297 = vunpack.c.l.b16 %v239
        %v298 = vunpack.c.h.b16 %v239
        %v299 = vunpack.c.l.b16 %v240
        %v300 = vunpack.c.h.b16 %v240
        %v301 = vunpack.c.l.b16 %v241
        %v302 = vunpack.c.h.b16 %v241
        %v303 = vpack.c.b16 %v273, %v271
        %v304 = vpack.c.b16 %v274, %v272
        %v305 = vpack.c.b16 %v277, %v275
        %v306 = vpack.c.b16 %v278, %v276
        %v307 = vpack.c.b16 %v281, %v279
        %v308 = vpack.c.b16 %v282, %v280
        %v309 = vpack.c.b16 %v285, %v283
        %v310 = vpack.c.b16 %v286, %v284
        %v311 = vpack.c.b16 %v289, %v287
        %v312 = vpack.c.b16 %v290, %v288
        %v313 = vpack.c.b16 %v293, %v291
        %v314 = vpack.c.b16 %v294, %v292
        %v315 = vpack.c.b16 %v297, %v295
        %v316 = vpack.c.b16 %v298, %v296
        %v317 = vpack.c.b16 %v301, %v299
        %v318 = vpack.c.b16 %v302, %v300
        %335 = vmatprep.subr.bf16.mxu0 %v304
        %336 = vmatpush1.bf16.msra.mxu0 %v303
        %337 = vmatprep.subr.bf16.mxu0 %v306
        %338 = vmatpush1.bf16.msra.mxu0 %v305
        %339 = vmatprep.subr.bf16.mxu0 %v308
        %340 = vmatpush1.bf16.msra.mxu0 %v307
        %341 = vmatprep.subr.bf16.mxu0 %v310
        %342 = vmatpush1.bf16.msra.mxu0 %v309
        %343 = vmatprep.subr.bf16.mxu0 %v312
        %344 = vmatpush1.bf16.msra.mxu0 %v311
        %345 = vmatprep.subr.bf16.mxu0 %v314
        %346 = vmatpush1.bf16.msra.mxu0 %v313
        %347 = vmatprep.subr.bf16.mxu0 %v316
        %348 = vmatpush1.bf16.msra.mxu0 %v315
        %349 = vmatprep.subr.bf16.mxu0 %v318
        %350 = vmatpush1.bf16.msra.mxu0 %v317
        %351 = vmatprep.subr.bf16.mxu0 0
        %352 = vmatpush1.bf16.msra.mxu0 0
        %353 = vmatprep.subr.bf16.mxu0 0
        %354 = vmatpush1.bf16.msra.mxu0 0
        %355 = vmatprep.subr.bf16.mxu0 0
        %356 = vmatpush1.bf16.msra.mxu0 0
        %357 = vmatprep.subr.bf16.mxu0 0
        %358 = vmatpush1.bf16.msra.mxu0 0
        %359 = vmatprep.subr.bf16.mxu0 0
        %360 = vmatpush1.bf16.msra.mxu0 0
        %361 = vmatprep.subr.bf16.mxu0 0
        %362 = vmatpush1.bf16.msra.mxu0 0
        %363 = vmatprep.subr.bf16.mxu0 0
        %364 = vmatpush1.bf16.msra.mxu0 0
        %365 = vmatprep.subr.bf16.mxu0 0
        %366 = vmatpush1.bf16.msra.mxu0 0
        %367 = vmatprep.mubr.bf16.mxu0 0
        %368 = vmatmul.mubr.bf16.gmra.mrb[0].mxu0 %v243
        %v369 = vpop.f32.mrb[0].mxu0
        %v370 = vadd.f32 %v248, %v369
        %v371 = vpop.f32.mrb[0].mxu0
        %v372 = vadd.f32 %v252, %v371
        %v373 = vpop.f32.mrb[0].mxu0
        %v374 = vpop.f32.mrb[0].mxu0
        %375 = vdwg.mxu0
        %v376 = vpack.c.bf16 %v370, %v370
        %v377 = vpack.c.bf16 %v372, %v372
        %v380 = vunpack.c.l.b16 %v376
        %v381 = vunpack.c.l.b16 %v377
        %v382 = vpack.c.b16 %v381, %v380
        %384 = vst [vmem:[%s208] sm:$0xff] %v382
        %s385 = scalar_lea.vmem %s217, 4
        %v386 = vld [vmem:[%s385] sm:$0xf]
        %387 = vmatprep.subr.bf16.mxu0 %v304
        %388 = vmatpush1.bf16.msra.mxu0 %v303
        %389 = vmatprep.subr.bf16.mxu0 %v306
        %390 = vmatpush1.bf16.msra.mxu0 %v305
        %391 = vmatprep.subr.bf16.mxu0 %v308
        %392 = vmatpush1.bf16.msra.mxu0 %v307
        %393 = vmatprep.subr.bf16.mxu0 %v310
        %394 = vmatpush1.bf16.msra.mxu0 %v309
        %395 = vmatprep.subr.bf16.mxu0 %v312
        %396 = vmatpush1.bf16.msra.mxu0 %v311
        %397 = vmatprep.subr.bf16.mxu0 %v314
        %398 = vmatpush1.bf16.msra.mxu0 %v313
        %399 = vmatprep.subr.bf16.mxu0 %v316
        %400 = vmatpush1.bf16.msra.mxu0 %v315
        %401 = vmatprep.subr.bf16.mxu0 %v318
        %402 = vmatpush1.bf16.msra.mxu0 %v317
        %403 = vmatprep.subr.bf16.mxu0 0
        %404 = vmatpush1.bf16.msra.mxu0 0
        %405 = vmatprep.subr.bf16.mxu0 0
        %406 = vmatpush1.bf16.msra.mxu0 0
        %407 = vmatprep.subr.bf16.mxu0 0
        %408 = vmatpush1.bf16.msra.mxu0 0
        %409 = vmatprep.subr.bf16.mxu0 0
        %410 = vmatpush1.bf16.msra.mxu0 0
        %411 = vmatprep.subr.bf16.mxu0 0
        %412 = vmatpush1.bf16.msra.mxu0 0
        %413 = vmatprep.subr.bf16.mxu0 0
        %414 = vmatpush1.bf16.msra.mxu0 0
        %415 = vmatprep.subr.bf16.mxu0 0
        %416 = vmatpush1.bf16.msra.mxu0 0
        %417 = vmatprep.subr.bf16.mxu0 0
        %418 = vmatpush1.bf16.msra.mxu0 0
        %419 = vmatprep.mubr.bf16.mxu0 0
        %420 = vmatmul.mubr.bf16.gmra.mrb[0].mxu0 %v386
        %v421 = vpop.f32.mrb[0].mxu0
        %v422 = vadd.f32 %v248, %v421
        %v423 = vpop.f32.mrb[0].mxu0
        %v424 = vadd.f32 %v252, %v423
        %v425 = vpop.f32.mrb[0].mxu0
        %v426 = vpop.f32.mrb[0].mxu0
        %427 = vdwg.mxu0
        %v428 = vpack.c.bf16 %v422, %v422
        %v429 = vpack.c.bf16 %v424, %v424
        %v432 = vunpack.c.l.b16 %v428
        %v433 = vunpack.c.l.b16 %v429
        %v434 = vpack.c.b16 %v433, %v432
        %s436 = scalar_lea.vmem %s208, 8 [#allocation2]
        %437 = vst [vmem:[%s436] sm:$0xff] %v434
        %s438 = scalar_lea.vmem %s217, 8
        %v439 = vld [vmem:[%s438] sm:$0xf]
        %440 = vmatprep.subr.bf16.mxu0 %v304
        %441 = vmatpush1.bf16.msra.mxu0 %v303
        %442 = vmatprep.subr.bf16.mxu0 %v306
        %443 = vmatpush1.bf16.msra.mxu0 %v305
        %444 = vmatprep.subr.bf16.mxu0 %v308
        %445 = vmatpush1.bf16.msra.mxu0 %v307
        %446 = vmatprep.subr.bf16.mxu0 %v310
        %447 = vmatpush1.bf16.msra.mxu0 %v309
        %448 = vmatprep.subr.bf16.mxu0 %v312
        %449 = vmatpush1.bf16.msra.mxu0 %v311
        %450 = vmatprep.subr.bf16.mxu0 %v314
        %451 = vmatpush1.bf16.msra.mxu0 %v313
        %452 = vmatprep.subr.bf16.mxu0 %v316
        %453 = vmatpush1.bf16.msra.mxu0 %v315
        %454 = vmatprep.subr.bf16.mxu0 %v318
        %455 = vmatpush1.bf16.msra.mxu0 %v317
        %456 = vmatprep.subr.bf16.mxu0 0
        %457 = vmatpush1.bf16.msra.mxu0 0
        %458 = vmatprep.subr.bf16.mxu0 0
        %459 = vmatpush1.bf16.msra.mxu0 0
        %460 = vmatprep.subr.bf16.mxu0 0
        %461 = vmatpush1.bf16.msra.mxu0 0
        %462 = vmatprep.subr.bf16.mxu0 0
        %463 = vmatpush1.bf16.msra.mxu0 0
        %464 = vmatprep.subr.bf16.mxu0 0
        %465 = vmatpush1.bf16.msra.mxu0 0
        %466 = vmatprep.subr.bf16.mxu0 0
        %467 = vmatpush1.bf16.msra.mxu0 0
        %468 = vmatprep.subr.bf16.mxu0 0
        %469 = vmatpush1.bf16.msra.mxu0 0
        %470 = vmatprep.subr.bf16.mxu0 0
        %471 = vmatpush1.bf16.msra.mxu0 0
        %472 = vmatprep.mubr.bf16.mxu0 0
        %473 = vmatmul.mubr.bf16.gmra.mrb[0].mxu0 %v439
        %v474 = vpop.f32.mrb[0].mxu0
        %v475 = vadd.f32 %v248, %v474
        %v476 = vpop.f32.mrb[0].mxu0
        %v477 = vadd.f32 %v252, %v476
        %v478 = vpop.f32.mrb[0].mxu0
        %v479 = vpop.f32.mrb[0].mxu0
        %480 = vdwg.mxu0
        %v481 = vpack.c.bf16 %v475, %v475
        %v482 = vpack.c.bf16 %v477, %v477
        %v485 = vunpack.c.l.b16 %v481
        %v486 = vunpack.c.l.b16 %v482
        %v487 = vpack.c.b16 %v486, %v485
        %s489 = scalar_lea.vmem %s208, 16 [#allocation2]
        %490 = vst [vmem:[%s489] sm:$0xff] %v487
        %s491 = scalar_lea.vmem %s217, 12
        %v492 = vld [vmem:[%s491] sm:$0xf]
        %493 = vmatprep.subr.bf16.mxu0 %v304
        %494 = vmatpush1.bf16.msra.mxu0 %v303
        %495 = vmatprep.subr.bf16.mxu0 %v306
        %496 = vmatpush1.bf16.msra.mxu0 %v305
        %497 = vmatprep.subr.bf16.mxu0 %v308
        %498 = vmatpush1.bf16.msra.mxu0 %v307
        %499 = vmatprep.subr.bf16.mxu0 %v310
        %500 = vmatpush1.bf16.msra.mxu0 %v309
        %501 = vmatprep.subr.bf16.mxu0 %v312
        %502 = vmatpush1.bf16.msra.mxu0 %v311
        %503 = vmatprep.subr.bf16.mxu0 %v314
        %504 = vmatpush1.bf16.msra.mxu0 %v313
        %505 = vmatprep.subr.bf16.mxu0 %v316
        %506 = vmatpush1.bf16.msra.mxu0 %v315
        %507 = vmatprep.subr.bf16.mxu0 %v318
        %508 = vmatpush1.bf16.msra.mxu0 %v317
        %509 = vmatprep.subr.bf16.mxu0 0
        %510 = vmatpush1.bf16.msra.mxu0 0
        %511 = vmatprep.subr.bf16.mxu0 0
        %512 = vmatpush1.bf16.msra.mxu0 0
        %513 = vmatprep.subr.bf16.mxu0 0
        %514 = vmatpush1.bf16.msra.mxu0 0
        %515 = vmatprep.subr.bf16.mxu0 0
        %516 = vmatpush1.bf16.msra.mxu0 0
        %517 = vmatprep.subr.bf16.mxu0 0
        %518 = vmatpush1.bf16.msra.mxu0 0
        %519 = vmatprep.subr.bf16.mxu0 0
        %520 = vmatpush1.bf16.msra.mxu0 0
        %521 = vmatprep.subr.bf16.mxu0 0
        %522 = vmatpush1.bf16.msra.mxu0 0
        %523 = vmatprep.subr.bf16.mxu0 0
        %524 = vmatpush1.bf16.msra.mxu0 0
        %525 = vmatprep.mubr.bf16.mxu0 0
        %526 = vmatmul.mubr.bf16.gmra.mrb[0].mxu0 %v492
        %v527 = vpop.f32.mrb[0].mxu0
        %v528 = vadd.f32 %v248, %v527
        %v529 = vpop.f32.mrb[0].mxu0
        %v530 = vadd.f32 %v252, %v529
        %v531 = vpop.f32.mrb[0].mxu0
        %v532 = vpop.f32.mrb[0].mxu0
        %533 = vdwg.mxu0
        %v534 = vpack.c.bf16 %v528, %v528
        %v535 = vpack.c.bf16 %v530, %v530
        %v538 = vunpack.c.l.b16 %v534
        %v539 = vunpack.c.l.b16 %v535
        %v540 = vpack.c.b16 %v539, %v538
        %s542 = scalar_lea.vmem %s208, 24 [#allocation2]
        %543 = vst [vmem:[%s542] sm:$0xff] %v540
        %s544 = scalar_lea.vmem %s217, 16
        %v545 = vld [vmem:[%s544] sm:$0xf]
        %546 = vmatprep.subr.bf16.mxu0 %v304
        %547 = vmatpush1.bf16.msra.mxu0 %v303
        %548 = vmatprep.subr.bf16.mxu0 %v306
        %549 = vmatpush1.bf16.msra.mxu0 %v305
        %550 = vmatprep.subr.bf16.mxu0 %v308
        %551 = vmatpush1.bf16.msra.mxu0 %v307
        %552 = vmatprep.subr.bf16.mxu0 %v310
        %553 = vmatpush1.bf16.msra.mxu0 %v309
        %554 = vmatprep.subr.bf16.mxu0 %v312
        %555 = vmatpush1.bf16.msra.mxu0 %v311
        %556 = vmatprep.subr.bf16.mxu0 %v314
        %557 = vmatpush1.bf16.msra.mxu0 %v313
        %558 = vmatprep.subr.bf16.mxu0 %v316
        %559 = vmatpush1.bf16.msra.mxu0 %v315
        %560 = vmatprep.subr.bf16.mxu0 %v318
        %561 = vmatpush1.bf16.msra.mxu0 %v317
        %562 = vmatprep.subr.bf16.mxu0 0
        %563 = vmatpush1.bf16.msra.mxu0 0
        %564 = vmatprep.subr.bf16.mxu0 0
        %565 = vmatpush1.bf16.msra.mxu0 0
        %566 = vmatprep.subr.bf16.mxu0 0
        %567 = vmatpush1.bf16.msra.mxu0 0
        %568 = vmatprep.subr.bf16.mxu0 0
        %569 = vmatpush1.bf16.msra.mxu0 0
        %570 = vmatprep.subr.bf16.mxu0 0
        %571 = vmatpush1.bf16.msra.mxu0 0
        %572 = vmatprep.subr.bf16.mxu0 0
        %573 = vmatpush1.bf16.msra.mxu0 0
        %574 = vmatprep.subr.bf16.mxu0 0
        %575 = vmatpush1.bf16.msra.mxu0 0
        %576 = vmatprep.subr.bf16.mxu0 0
        %577 = vmatpush1.bf16.msra.mxu0 0
        %578 = vmatprep.mubr.bf16.mxu0 0
        %579 = vmatmul.mubr.bf16.gmra.mrb[0].mxu0 %v545
        %v580 = vpop.f32.mrb[0].mxu0
        %v581 = vadd.f32 %v248, %v580
        %v582 = vpop.f32.mrb[0].mxu0
        %v583 = vadd.f32 %v252, %v582
        %v584 = vpop.f32.mrb[0].mxu0
        %v585 = vpop.f32.mrb[0].mxu0
        %586 = vdwg.mxu0
        %v587 = vpack.c.bf16 %v581, %v581
        %v588 = vpack.c.bf16 %v583, %v583
        %v591 = vunpack.c.l.b16 %v587
        %v592 = vunpack.c.l.b16 %v588
        %v593 = vpack.c.b16 %v592, %v591
        %s595 = scalar_lea.vmem %s208, 32 [#allocation2]
        %596 = vst [vmem:[%s595] sm:$0xff] %v593
        %s597 = scalar_lea.vmem %s217, 20
        %v598 = vld [vmem:[%s597] sm:$0xf]
        %599 = vmatprep.subr.bf16.mxu0 %v304
        %600 = vmatpush1.bf16.msra.mxu0 %v303
        %601 = vmatprep.subr.bf16.mxu0 %v306
        %602 = vmatpush1.bf16.msra.mxu0 %v305
        %603 = vmatprep.subr.bf16.mxu0 %v308
        %604 = vmatpush1.bf16.msra.mxu0 %v307
        %605 = vmatprep.subr.bf16.mxu0 %v310
        %606 = vmatpush1.bf16.msra.mxu0 %v309
        %607 = vmatprep.subr.bf16.mxu0 %v312
        %608 = vmatpush1.bf16.msra.mxu0 %v311
        %609 = vmatprep.subr.bf16.mxu0 %v314
        %610 = vmatpush1.bf16.msra.mxu0 %v313
        %611 = vmatprep.subr.bf16.mxu0 %v316
        %612 = vmatpush1.bf16.msra.mxu0 %v315
        %613 = vmatprep.subr.bf16.mxu0 %v318
        %614 = vmatpush1.bf16.msra.mxu0 %v317
        %615 = vmatprep.subr.bf16.mxu0 0
        %616 = vmatpush1.bf16.msra.mxu0 0
        %617 = vmatprep.subr.bf16.mxu0 0
        %618 = vmatpush1.bf16.msra.mxu0 0
        %619 = vmatprep.subr.bf16.mxu0 0
        %620 = vmatpush1.bf16.msra.mxu0 0
        %621 = vmatprep.subr.bf16.mxu0 0
        %622 = vmatpush1.bf16.msra.mxu0 0
        %623 = vmatprep.subr.bf16.mxu0 0
        %624 = vmatpush1.bf16.msra.mxu0 0
        %625 = vmatprep.subr.bf16.mxu0 0
        %626 = vmatpush1.bf16.msra.mxu0 0
        %627 = vmatprep.subr.bf16.mxu0 0
        %628 = vmatpush1.bf16.msra.mxu0 0
        %629 = vmatprep.subr.bf16.mxu0 0
        %630 = vmatpush1.bf16.msra.mxu0 0
        %631 = vmatprep.mubr.bf16.mxu0 0
        %632 = vmatmul.mubr.bf16.gmra.mrb[0].mxu0 %v598
        %v633 = vpop.f32.mrb[0].mxu0
        %v634 = vadd.f32 %v248, %v633
        %v635 = vpop.f32.mrb[0].mxu0
        %v636 = vadd.f32 %v252, %v635
        %v637 = vpop.f32.mrb[0].mxu0
        %v638 = vpop.f32.mrb[0].mxu0
        %639 = vdwg.mxu0
        %v640 = vpack.c.bf16 %v634, %v634
        %v641 = vpack.c.bf16 %v636, %v636
        %v644 = vunpack.c.l.b16 %v640
        %v645 = vunpack.c.l.b16 %v641
        %v646 = vpack.c.b16 %v645, %v644
        %s648 = scalar_lea.vmem %s208, 40 [#allocation2]
        %649 = vst [vmem:[%s648] sm:$0xff] %v646
        %s650 = scalar_lea.vmem %s217, 24
        %v651 = vld [vmem:[%s650] sm:$0xf]
        %652 = vmatprep.subr.bf16.mxu0 %v304
        %653 = vmatpush1.bf16.msra.mxu0 %v303
        %654 = vmatprep.subr.bf16.mxu0 %v306
        %655 = vmatpush1.bf16.msra.mxu0 %v305
        %656 = vmatprep.subr.bf16.mxu0 %v308
        %657 = vmatpush1.bf16.msra.mxu0 %v307
        %658 = vmatprep.subr.bf16.mxu0 %v310
        %659 = vmatpush1.bf16.msra.mxu0 %v309
        %660 = vmatprep.subr.bf16.mxu0 %v312
        %661 = vmatpush1.bf16.msra.mxu0 %v311
        %662 = vmatprep.subr.bf16.mxu0 %v314
        %663 = vmatpush1.bf16.msra.mxu0 %v313
        %664 = vmatprep.subr.bf16.mxu0 %v316
        %665 = vmatpush1.bf16.msra.mxu0 %v315
        %666 = vmatprep.subr.bf16.mxu0 %v318
        %667 = vmatpush1.bf16.msra.mxu0 %v317
        %668 = vmatprep.subr.bf16.mxu0 0
        %669 = vmatpush1.bf16.msra.mxu0 0
        %670 = vmatprep.subr.bf16.mxu0 0
        %671 = vmatpush1.bf16.msra.mxu0 0
        %672 = vmatprep.subr.bf16.mxu0 0
        %673 = vmatpush1.bf16.msra.mxu0 0
        %674 = vmatprep.subr.bf16.mxu0 0
        %675 = vmatpush1.bf16.msra.mxu0 0
        %676 = vmatprep.subr.bf16.mxu0 0
        %677 = vmatpush1.bf16.msra.mxu0 0
        %678 = vmatprep.subr.bf16.mxu0 0
        %679 = vmatpush1.bf16.msra.mxu0 0
        %680 = vmatprep.subr.bf16.mxu0 0
        %681 = vmatpush1.bf16.msra.mxu0 0
        %682 = vmatprep.subr.bf16.mxu0 0
        %683 = vmatpush1.bf16.msra.mxu0 0
        %684 = vmatprep.mubr.bf16.mxu0 0
        %685 = vmatmul.mubr.bf16.gmra.mrb[0].mxu0 %v651
        %v686 = vpop.f32.mrb[0].mxu0
        %v687 = vadd.f32 %v248, %v686
        %v688 = vpop.f32.mrb[0].mxu0
        %v689 = vadd.f32 %v252, %v688
        %v690 = vpop.f32.mrb[0].mxu0
        %v691 = vpop.f32.mrb[0].mxu0
        %692 = vdwg.mxu0
        %v693 = vpack.c.bf16 %v687, %v687
        %v694 = vpack.c.bf16 %v689, %v689
        %v697 = vunpack.c.l.b16 %v693
        %v698 = vunpack.c.l.b16 %v694
        %v699 = vpack.c.b16 %v698, %v697
        %s701 = scalar_lea.vmem %s208, 48 [#allocation2]
        %702 = vst [vmem:[%s701] sm:$0xff] %v699
        %s703 = scalar_lea.vmem %s217, 28
        %v704 = vld [vmem:[%s703] sm:$0xf]
        %705 = vmatprep.subr.bf16.mxu0 %v304
        %706 = vmatpush1.bf16.msra.mxu0 %v303
        %707 = vmatprep.subr.bf16.mxu0 %v306
        %708 = vmatpush1.bf16.msra.mxu0 %v305
        %709 = vmatprep.subr.bf16.mxu0 %v308
        %710 = vmatpush1.bf16.msra.mxu0 %v307
        %711 = vmatprep.subr.bf16.mxu0 %v310
        %712 = vmatpush1.bf16.msra.mxu0 %v309
        %713 = vmatprep.subr.bf16.mxu0 %v312
        %714 = vmatpush1.bf16.msra.mxu0 %v311
        %715 = vmatprep.subr.bf16.mxu0 %v314
        %716 = vmatpush1.bf16.msra.mxu0 %v313
        %717 = vmatprep.subr.bf16.mxu0 %v316
        %718 = vmatpush1.bf16.msra.mxu0 %v315
        %719 = vmatprep.subr.bf16.mxu0 %v318
        %720 = vmatpush1.bf16.msra.mxu0 %v317
        %721 = vmatprep.subr.bf16.mxu0 0
        %722 = vmatpush1.bf16.msra.mxu0 0
        %723 = vmatprep.subr.bf16.mxu0 0
        %724 = vmatpush1.bf16.msra.mxu0 0
        %725 = vmatprep.subr.bf16.mxu0 0
        %726 = vmatpush1.bf16.msra.mxu0 0
        %727 = vmatprep.subr.bf16.mxu0 0
        %728 = vmatpush1.bf16.msra.mxu0 0
        %729 = vmatprep.subr.bf16.mxu0 0
        %730 = vmatpush1.bf16.msra.mxu0 0
        %731 = vmatprep.subr.bf16.mxu0 0
        %732 = vmatpush1.bf16.msra.mxu0 0
        %733 = vmatprep.subr.bf16.mxu0 0
        %734 = vmatpush1.bf16.msra.mxu0 0
        %735 = vmatprep.subr.bf16.mxu0 0
        %736 = vmatpush1.bf16.msra.mxu0 0
        %737 = vmatprep.mubr.bf16.mxu0 0
        %738 = vmatmul.mubr.bf16.gmra.mrb[0].mxu0 %v704
        %v739 = vpop.f32.mrb[0].mxu0
        %v740 = vadd.f32 %v248, %v739
        %v741 = vpop.f32.mrb[0].mxu0
        %v742 = vadd.f32 %v252, %v741
        %v743 = vpop.f32.mrb[0].mxu0
        %v744 = vpop.f32.mrb[0].mxu0
        %745 = vdwg.mxu0
        %v746 = vpack.c.bf16 %v740, %v740
        %v747 = vpack.c.bf16 %v742, %v742
        %v750 = vunpack.c.l.b16 %v746
        %v751 = vunpack.c.l.b16 %v747
        %v752 = vpack.c.b16 %v751, %v750
        %s754 = scalar_lea.vmem %s208, 56 [#allocation2]
        %755 = vst [vmem:[%s754] sm:$0xff] %v752
        %s756 = sand.u32 %s120, 1
        %s757 = sand.u32 %s120, 1
        %s758 = smul.addr %s757, 64
        %s759 = scalar_lea.vmem [#allocation2], %s758
        // Predicated region
        $region33: #{_lambda_.3} parent=31 // pred_check
          %p760 = pneg %p130
        $region34: #{_lambda_.3} parent=31 // pred_check_branch
          %762 = sbr.rel (%p760) target = $region36
        $region35: #{_lambda_.3} parent=31 // pred_region
          %s763 = smul.u32 8, %s21
          %s764 = smul.addr %s20, 2
          %s765 = smul.addr %s763, 4
          %s766 = sadd.s32 %s764, %s765
          %s767 = smul.addr %s19, 32
          %s768 = sadd.s32 %s766, %s767
          %s769 = smul.addr %s768, 4
          %s770 = scalar_lea.vmem %s3, %s769
          // Predicated region
          $region37: #{_lambda_.3} parent=35 // pred_check
            _
          $region38: #{_lambda_.3} parent=35 // pred_check_branch
            %772 = sbr.rel (0) target = $region40
          $region39: #{_lambda_.3} parent=35 // pred_region
            // Predicated region
            $region41: #{_lambda_.3} parent=39 // pred_check
              _
            $region42: #{_lambda_.3} parent=39 // pred_check_branch
              %774 = sbr.rel (0) target = $region44
            $region43: #{_lambda_.3} parent=39 // pred_region
              // Predicated region
              $region56: #{_lambda_.3} parent=43 // pred_check
                _
              $region57: #{_lambda_.3} parent=43 // pred_check_branch
                %803 = sbr.rel (0) target = $region59
              $region58: #{_lambda_.3} parent=43 // pred_region
                loop: start=0, step=1, limit=1
                $region60: #{_lambda_.3} parent=58 // loop_pre_header
                  _
                $region61: #{_lambda_.3} parent=58 // loop_header
                  %s805 = sphi 0, %s809
                  %p806 = scmp.ge.s32.totalorder %s805, 1
                  %s810 = sphi %s759, %s759
                  %s811 = sphi %s770, %s770
                $region62: #{_lambda_.3} parent=58 // loop_header_branch
                  %808 = sbr.rel (%p806) target = $region66
                $region63: #{_lambda_.3} parent=58 // loop_body
                  %v812 = vld [vmem:[%s810] sm:$0xff]
                  %813 = vst [vmem:[%s811] sm:$0xff] %v812
                  %v814 = vld [vmem:[%s810 + $0x8] sm:$0xff]
                  %815 = vst [vmem:[%s811 + $0x10] sm:$0xff] %v814
                  %v816 = vld [vmem:[%s810 + $0x10] sm:$0xff]
                  %817 = vst [vmem:[%s811 + $0x20] sm:$0xff] %v816
                  %v818 = vld [vmem:[%s810 + $0x18] sm:$0xff]
                  %819 = vst [vmem:[%s811 + $0x30] sm:$0xff] %v818
                  %v820 = vld [vmem:[%s810 + $0x20] sm:$0xff]
                  %821 = vst [vmem:[%s811 + $0x40] sm:$0xff] %v820
                  %v822 = vld [vmem:[%s810 + $0x28] sm:$0xff]
                  %823 = vst [vmem:[%s811 + $0x50] sm:$0xff] %v822
                  %v824 = vld [vmem:[%s810 + $0x30] sm:$0xff]
                  %825 = vst [vmem:[%s811 + $0x60] sm:$0xff] %v824
                  %v826 = vld [vmem:[%s810 + $0x38] sm:$0xff]
                  %827 = vst [vmem:[%s811 + $0x70] sm:$0xff] %v826
                $region64: #{_lambda_.3} parent=58 // loop_footer
                  %s809 = sadd.s32 1, %s805
                $region65: #{_lambda_.3} parent=58 // loop_footer_branch
                  %804 = sbr.rel target = $region61
                $region66: #{_lambda_.3} parent=58 // loop_exit
                  _
              $region59: #{_lambda_.3} parent=43 // pred_fallthru
                _
              // Predicated region
              $region67: #{_lambda_.3} parent=43 // pred_check
                _
              $region68: #{_lambda_.3} parent=43 // pred_check_branch
                %829 = sbr.rel target = $region70
              $region69: #{_lambda_.3} parent=43 // pred_region
                _
              $region70: #{_lambda_.3} parent=43 // pred_fallthru
                _
            $region44: #{_lambda_.3} parent=39 // pred_fallthru
              _
            // Predicated region
            $region45: #{_lambda_.3} parent=39 // pred_check
              _
            $region46: #{_lambda_.3} parent=39 // pred_check_branch
              %776 = sbr.rel target = $region48
            $region47: #{_lambda_.3} parent=39 // pred_region
              loop: start=0, step=1, limit=1
              $region49: #{_lambda_.3} parent=47 // loop_pre_header
                _
              $region50: #{_lambda_.3} parent=47 // loop_header
                %s779 = sphi 0, %s783
                %p780 = scmp.ge.s32.totalorder %s779, 1
                %s784 = sphi %s759, %s759
                %s785 = sphi %s770, %s770
              $region51: #{_lambda_.3} parent=47 // loop_header_branch
                %782 = sbr.rel (%p780) target = $region55
              $region52: #{_lambda_.3} parent=47 // loop_body
                %v786 = vld [vmem:[%s784] sm:$0xff]
                %787 = vst [vmem:[%s785] sm:$0xff] %v786
                %v788 = vld [vmem:[%s784 + $0x8] sm:$0xff]
                %789 = vst [vmem:[%s785 + $0x10] sm:$0xff] %v788
                %v790 = vld [vmem:[%s784 + $0x10] sm:$0xff]
                %791 = vst [vmem:[%s785 + $0x20] sm:$0xff] %v790
                %v792 = vld [vmem:[%s784 + $0x18] sm:$0xff]
                %793 = vst [vmem:[%s785 + $0x30] sm:$0xff] %v792
                %v794 = vld [vmem:[%s784 + $0x20] sm:$0xff]
                %795 = vst [vmem:[%s785 + $0x40] sm:$0xff] %v794
                %v796 = vld [vmem:[%s784 + $0x28] sm:$0xff]
                %797 = vst [vmem:[%s785 + $0x50] sm:$0xff] %v796
                %v798 = vld [vmem:[%s784 + $0x30] sm:$0xff]
                %799 = vst [vmem:[%s785 + $0x60] sm:$0xff] %v798
                %v800 = vld [vmem:[%s784 + $0x38] sm:$0xff]
                %801 = vst [vmem:[%s785 + $0x70] sm:$0xff] %v800
              $region53: #{_lambda_.3} parent=47 // loop_footer
                %s783 = sadd.s32 1, %s779
              $region54: #{_lambda_.3} parent=47 // loop_footer_branch
                %778 = sbr.rel target = $region50
              $region55: #{_lambda_.3} parent=47 // loop_exit
                _
            $region48: #{_lambda_.3} parent=39 // pred_fallthru
              _
          $region40: #{_lambda_.3} parent=35 // pred_fallthru
            _
          %830 = vnop
        $region36: #{_lambda_.3} parent=31 // pred_fallthru
          _
      $region32: #{_lambda_.3} parent=5 // pred_fallthru
        _
      %p831 = scmp.le.s32.totalorder 2, %s9
      // Predicated region
      $region71: #{_lambda_.3} parent=5 // pred_check
        %p832 = pneg %p831
      $region72: #{_lambda_.3} parent=5 // pred_check_branch
        %834 = sbr.rel (%p832) target = $region74
      $region73: #{_lambda_.3} parent=5 // pred_region
        %s835 = ssub.s32 %s9, 2
        // Predicated region
        $region75: #{_lambda_.3} parent=73 // pred_check
          %p836 = pneg %p136
        $region76: #{_lambda_.3} parent=73 // pred_check_branch
          %838 = sbr.rel (%p836) target = $region78
        $region77: #{_lambda_.3} parent=73 // pred_region
          %s839 = sand.u32 %s121, 1
          %s840 = sand.u32 %s121, 1
          %s841 = smul.addr %s840, 64
          %s842 = scalar_lea.vmem [#allocation2], %s841
        $region78: #{_lambda_.3} parent=73 // pred_fallthru
          _
      $region74: #{_lambda_.3} parent=5 // pred_fallthru
        _
    $region6: #{_lambda_.3} parent=1 // loop_footer
      %s13 = sadd.s32 1, %s9
    $region7: #{_lambda_.3} parent=1 // loop_footer_branch
      %8 = sbr.rel target = $region3
    $region8: #{_lambda_.3} parent=1 // loop_exit
      _

// kernel: _lambda_.5
$region0: #{_lambda_.5}
  #allocation0 [shape = 'u32[]', space=smem, size = 0x4, offset = 0x4, fixed_abs, tag = 'smem constant byte address 0x4 - core index']
  #allocation1 [shape = 'u32[144,128]{1,0:T(1,128)}', space=vmem, size = 0x12000, scoped, tag = 'internal scratch']
  %s0 = inlined_call_operand.vmem [shape: bf16[2,14,14,128], index: 0, kind: input, shape index: {}, may-alias: {0,1,2}]
  %s1 = inlined_call_operand.vmem [shape: bf16[2,14,14,128], index: 1, kind: input, shape index: {}, may-alias: {0,1,2}]
  %s2 = inlined_call_operand.vmem [shape: bf16[2,14,14,128], index: 2, kind: input, shape index: {}, may-alias: {0,1,2}]
  %s3 = inlined_call_operand.vmem [shape: bf16[9,128,128], index: 3, kind: input, shape index: {}]
  %s4 = inlined_call_operand.vmem [shape: f32[1,128], index: 4, kind: input, shape index: {}]
  %s5 = inlined_call_operand.vmem [shape: bf16[2,12,12,128], index: 5, kind: output, shape index: {}]
  %s6 = sld [smem:[#allocation0]]
  $region53: #{_lambda_.5} parent=0
    _
  %s8 = ssub.s32 1, %s6
  %s9 = scalar_select 0, %s8, %s6
  loop: start=0, step=1, limit=26
  $region2: #{_lambda_.5} parent=0 // loop_pre_header
    _
  $region3: #{_lambda_.5} parent=0 // loop_header
    %s11 = sphi 0, %s15
    %p12 = scmp.ge.s32.totalorder %s11, 26
    %s18 = sphi 0, %s30
    %s19 = sphi 0, %s26
    %s20 = sphi 0, %s18
    %s21 = sphi 0, %s19
    %s22 = sphi 0, %s20
    %s23 = sphi 0, %s21
    %s35 = sphi 0, %s37
    %s38 = sphi 0, %s35
    %s39 = sphi 0, %s38
    %s55 = sphi 0, %s39
    %s65 = sphi 0, %s67
    %s68 = sphi 0, %s65
    %s69 = sphi 0, %s68
    %s85 = sphi 0, %s69
    %s95 = sphi 0, %s97
    %s98 = sphi 0, %s95
    %s99 = sphi 0, %s98
    %s115 = sphi 0, %s99
    %s119 = sphi 0, %s119
    %s121 = sphi 0, %s119
    %s122 = sphi 0, %s121
    %s136 = sphi 0, %s122
    %s140 = sphi 0, %s140
    %s142 = sphi 0, %s140
    %s143 = sphi 0, %s142
    %s157 = sphi 0, %s143
    %s165 = sphi 0, %s167
    %s168 = sphi 0, %s165
    %s169 = sphi 0, %s168
    %s185 = sphi 0, %s169
  $region4: #{_lambda_.5} parent=0 // loop_header_branch
    %14 = sbr.rel (%p12) target = $region8
  $region5: #{_lambda_.5} parent=0 // loop_body
    %s16 = ssub.s32 %s11, 1
    %s17 = ssub.s32 %s11, 2
    %s24 = sadd.s32 1, %s19
    %p25 = scmp.ge.s32.totalorder %s24, 12
    %s26 = scalar_select %p25, 0, %s24
    %s27 = sadd.s32 1, %s18
    %s28 = scalar_select %p25, %s27, %s18
    %p29 = scmp.ge.s32.totalorder %s28, 2
    %s30 = scalar_select %p29, 0, %s28
    %s31 = ssub.s32 %s18, %s30
    %s32 = ssub.s32 %s19, %s26
    %s33 = sor.u32 %s31, %s32
    %p34 = scmp.eq.s32.totalorder %s33, 0
    %s36 = sadd.s32 %s35, 1
    %s37 = scalar_select %p34, %s35, %s36
    %p40 = pneg %p34
    %p41 = scmp.eq.s32.totalorder %s11, 23
    %p42 = por %p40, %p41
    %p43 = scmp.ne.s32.totalorder %s35, %s38
    %p44 = scmp.eq.s32.totalorder %s11, 0
    %p45 = por %p43, %p44
    %p46 = scmp.ne.s32.totalorder %s35, %s38
    %p47 = scmp.eq.s32.totalorder %s16, 23
    %p48 = por %p46, %p47
    %p49 = scmp.ne.s32.totalorder %s38, %s39
    %p50 = scmp.eq.s32.totalorder %s16, 0
    %p51 = por %p49, %p50
    %p52 = scmp.ne.s32.totalorder %s38, %s39
    %p53 = scmp.eq.s32.totalorder %s17, 23
    %p54 = por %p52, %p53
    %p56 = scmp.ne.s32.totalorder %s39, %s55
    %p57 = scmp.eq.s32.totalorder %s17, 0
    %p58 = por %p56, %p57
    %s59 = sadd.s32 %s19, 1
    %s60 = sadd.s32 %s26, 1
    %s61 = ssub.s32 %s18, %s30
    %s62 = ssub.s32 %s59, %s60
    %s63 = sor.u32 %s61, %s62
    %p64 = scmp.eq.s32.totalorder %s63, 0
    %s66 = sadd.s32 %s65, 1
    %s67 = scalar_select %p64, %s65, %s66
    %p70 = pneg %p64
    %p71 = scmp.eq.s32.totalorder %s11, 23
    %p72 = por %p70, %p71
    %p73 = scmp.ne.s32.totalorder %s65, %s68
    %p74 = scmp.eq.s32.totalorder %s11, 0
    %p75 = por %p73, %p74
    %p76 = scmp.ne.s32.totalorder %s65, %s68
    %p77 = scmp.eq.s32.totalorder %s16, 23
    %p78 = por %p76, %p77
    %p79 = scmp.ne.s32.totalorder %s68, %s69
    %p80 = scmp.eq.s32.totalorder %s16, 0
    %p81 = por %p79, %p80
    %p82 = scmp.ne.s32.totalorder %s68, %s69
    %p83 = scmp.eq.s32.totalorder %s17, 23
    %p84 = por %p82, %p83
    %p86 = scmp.ne.s32.totalorder %s69, %s85
    %p87 = scmp.eq.s32.totalorder %s17, 0
    %p88 = por %p86, %p87
    %s89 = sadd.s32 %s19, 2
    %s90 = sadd.s32 %s26, 2
    %s91 = ssub.s32 %s18, %s30
    %s92 = ssub.s32 %s89, %s90
    %s93 = sor.u32 %s91, %s92
    %p94 = scmp.eq.s32.totalorder %s93, 0
    %s96 = sadd.s32 %s95, 1
    %s97 = scalar_select %p94, %s95, %s96
    %p100 = pneg %p94
    %p101 = scmp.eq.s32.totalorder %s11, 23
    %p102 = por %p100, %p101
    %p103 = scmp.ne.s32.totalorder %s95, %s98
    %p104 = scmp.eq.s32.totalorder %s11, 0
    %p105 = por %p103, %p104
    %p106 = scmp.ne.s32.totalorder %s95, %s98
    %p107 = scmp.eq.s32.totalorder %s16, 23
    %p108 = por %p106, %p107
    %p109 = scmp.ne.s32.totalorder %s98, %s99
    %p110 = scmp.eq.s32.totalorder %s16, 0
    %p111 = por %p109, %p110
    %p112 = scmp.ne.s32.totalorder %s98, %s99
    %p113 = scmp.eq.s32.totalorder %s17, 23
    %p114 = por %p112, %p113
    %p116 = scmp.ne.s32.totalorder %s99, %s115
    %p117 = scmp.eq.s32.totalorder %s17, 0
    %p118 = por %p116, %p117
    %s120 = sadd.s32 %s119, 1
    %p123 = scmp.eq.s32.totalorder %s11, 23
    %p124 = scmp.ne.s32.totalorder %s119, %s121
    %p125 = scmp.eq.s32.totalorder %s11, 0
    %p126 = por %p124, %p125
    %p127 = scmp.ne.s32.totalorder %s119, %s121
    %p128 = scmp.eq.s32.totalorder %s16, 23
    %p129 = por %p127, %p128
    %p130 = scmp.ne.s32.totalorder %s121, %s122
    %p131 = scmp.eq.s32.totalorder %s16, 0
    %p132 = por %p130, %p131
    %p133 = scmp.ne.s32.totalorder %s121, %s122
    %p134 = scmp.eq.s32.totalorder %s17, 23
    %p135 = por %p133, %p134
    %p137 = scmp.ne.s32.totalorder %s122, %s136
    %p138 = scmp.eq.s32.totalorder %s17, 0
    %p139 = por %p137, %p138
    %s141 = sadd.s32 %s140, 1
    %p144 = scmp.eq.s32.totalorder %s11, 23
    %p145 = scmp.ne.s32.totalorder %s140, %s142
    %p146 = scmp.eq.s32.totalorder %s11, 0
    %p147 = por %p145, %p146
    %p148 = scmp.ne.s32.totalorder %s140, %s142
    %p149 = scmp.eq.s32.totalorder %s16, 23
    %p150 = por %p148, %p149
    %p151 = scmp.ne.s32.totalorder %s142, %s143
    %p152 = scmp.eq.s32.totalorder %s16, 0
    %p153 = por %p151, %p152
    %p154 = scmp.ne.s32.totalorder %s142, %s143
    %p155 = scmp.eq.s32.totalorder %s17, 23
    %p156 = por %p154, %p155
    %p158 = scmp.ne.s32.totalorder %s143, %s157
    %p159 = scmp.eq.s32.totalorder %s17, 0
    %p160 = por %p158, %p159
    %s161 = ssub.s32 %s18, %s30
    %s162 = ssub.s32 %s19, %s26
    %s163 = sor.u32 %s161, %s162
    %p164 = scmp.eq.s32.totalorder %s163, 0
    %s166 = sadd.s32 %s165, 1
    %s167 = scalar_select %p164, %s165, %s166
    %p170 = pneg %p164
    %p171 = scmp.eq.s32.totalorder %s11, 23
    %p172 = por %p170, %p171
    %p173 = scmp.ne.s32.totalorder %s165, %s168
    %p174 = scmp.eq.s32.totalorder %s11, 0
    %p175 = por %p173, %p174
    %p176 = scmp.ne.s32.totalorder %s165, %s168
    %p177 = scmp.eq.s32.totalorder %s16, 23
    %p178 = por %p176, %p177
    %p179 = scmp.ne.s32.totalorder %s168, %s169
    %p180 = scmp.eq.s32.totalorder %s16, 0
    %p181 = por %p179, %p180
    %p182 = scmp.ne.s32.totalorder %s168, %s169
    %p183 = scmp.eq.s32.totalorder %s17, 23
    %p184 = por %p182, %p183
    %p186 = scmp.ne.s32.totalorder %s169, %s185
    %p187 = scmp.eq.s32.totalorder %s17, 0
    %p188 = por %p186, %p187
    %p189 = scmp.le.s32.totalorder 1, %s11
    %p190 = scmp.lt.s32.totalorder %s11, 25
    %p191 = pnand %p189, %p190
    %p192 = pneg %p191
    // Predicated region
    $region9: #{_lambda_.5} parent=5 // pred_check
      _
    $region10: #{_lambda_.5} parent=5 // pred_check_branch
      %194 = sbr.rel (%p191) target = $region12
    $region11: #{_lambda_.5} parent=5 // pred_region
      %s195 = ssub.s32 %s11, 1
      // Predicated region
      $region13: #{_lambda_.5} parent=11 // pred_check
        %p196 = pneg %p132
      $region14: #{_lambda_.5} parent=11 // pred_check_branch
        %198 = sbr.rel (%p196) target = $region16
      $region15: #{_lambda_.5} parent=11 // pred_region
        _
      $region16: #{_lambda_.5} parent=11 // pred_fallthru
        _
      // Predicated region
      $region17: #{_lambda_.5} parent=11 // pred_check
        %p199 = pneg %p153
      $region18: #{_lambda_.5} parent=11 // pred_check_branch
        %201 = sbr.rel (%p199) target = $region20
      $region19: #{_lambda_.5} parent=11 // pred_region
        _
      $region20: #{_lambda_.5} parent=11 // pred_fallthru
        _
    $region12: #{_lambda_.5} parent=5 // pred_fallthru
      _
    %p202 = scmp.lt.s32.totalorder %s11, 24
    // Predicated region
    $region21: #{_lambda_.5} parent=5 // pred_check
      %p203 = pneg %p202
    $region22: #{_lambda_.5} parent=5 // pred_check_branch
      %205 = sbr.rel (%p203) target = $region24
    $region23: #{_lambda_.5} parent=5 // pred_region
      // Predicated region
      $region25: #{_lambda_.5} parent=23 // pred_check
        %p206 = pneg %p45
      $region26: #{_lambda_.5} parent=23 // pred_check_branch
        %208 = sbr.rel (%p206) target = $region28
      $region27: #{_lambda_.5} parent=23 // pred_region
        %p209 = scmp.lt.s32.totalorder %s18, 1
        %s210 = scalar_select %p209, %s18, 1
        %p211 = scmp.lt.s32.totalorder %s19, 13
        %s212 = scalar_select %p211, %s19, 13
        %s213 = smul.addr %s212, 2
        %s214 = smul.addr %s210, 28
        %s215 = sadd.s32 %s213, %s214
        %s216 = smul.addr %s215, 4
        %s217 = scalar_lea.vmem %s0, %s216
      $region28: #{_lambda_.5} parent=23 // pred_fallthru
        _
      // Predicated region
      $region29: #{_lambda_.5} parent=23 // pred_check
        %p218 = pneg %p75
      $region30: #{_lambda_.5} parent=23 // pred_check_branch
        %220 = sbr.rel (%p218) target = $region32
      $region31: #{_lambda_.5} parent=23 // pred_region
        %s221 = sadd.s32 %s19, 1
        %p222 = scmp.lt.s32.totalorder %s18, 1
        %s223 = scalar_select %p222, %s18, 1
        %p224 = scmp.lt.s32.totalorder %s221, 13
        %s225 = scalar_select %p224, %s221, 13
        %s226 = smul.addr %s225, 2
        %s227 = smul.addr %s223, 28
        %s228 = sadd.s32 %s226, %s227
        %s229 = smul.addr %s228, 4
        %s230 = scalar_lea.vmem %s1, %s229
        %s231 = sadd.s32 %s19, 1
      $region32: #{_lambda_.5} parent=23 // pred_fallthru
        _
      // Predicated region
      $region33: #{_lambda_.5} parent=23 // pred_check
        %p232 = pneg %p105
      $region34: #{_lambda_.5} parent=23 // pred_check_branch
        %234 = sbr.rel (%p232) target = $region36
      $region35: #{_lambda_.5} parent=23 // pred_region
        %s235 = sadd.s32 %s19, 2
        %p236 = scmp.lt.s32.totalorder %s18, 1
        %s237 = scalar_select %p236, %s18, 1
        %p238 = scmp.lt.s32.totalorder %s235, 13
        %s239 = scalar_select %p238, %s235, 13
        %s240 = smul.addr %s239, 2
        %s241 = smul.addr %s237, 28
        %s242 = sadd.s32 %s240, %s241
        %s243 = smul.addr %s242, 4
        %s244 = scalar_lea.vmem %s2, %s243
        %s245 = sadd.s32 %s19, 2
      $region36: #{_lambda_.5} parent=23 // pred_fallthru
        _
    $region24: #{_lambda_.5} parent=5 // pred_fallthru
      _
    %p246 = scmp.le.s32.totalorder 1, %s11
    %p247 = scmp.lt.s32.totalorder %s11, 25
    %p248 = pnand %p246, %p247
    %p249 = pneg %p248
    // Predicated region
    $region37: #{_lambda_.5} parent=5 // pred_check
      _
    $region38: #{_lambda_.5} parent=5 // pred_check_branch
      %251 = sbr.rel (%p248) target = $region40
    $region39: #{_lambda_.5} parent=5 // pred_region
      %s252 = ssub.s32 %s11, 1
      %p253 = scmp.lt.s32.totalorder %s20, 1
      %s254 = scalar_select %p253, %s20, 1
      %p255 = scmp.lt.s32.totalorder %s21, 13
      %s256 = scalar_select %p255, %s21, 13
      %s257 = smul.addr %s256, 2
      %s258 = smul.addr %s254, 28
      %s259 = sadd.s32 %s257, %s258
      %s260 = smul.addr %s259, 4
      %s261 = scalar_lea.vmem %s0, %s260
      %p262 = pneg %p51
      %p263 = pneg %p48
      %s264 = sadd.s32 %s21, 1
      %p265 = scmp.lt.s32.totalorder %s20, 1
      %s266 = scalar_select %p265, %s20, 1
      %p267 = scmp.lt.s32.totalorder %s264, 13
      %s268 = scalar_select %p267, %s264, 13
      %s269 = smul.addr %s268, 2
      %s270 = smul.addr %s266, 28
      %s271 = sadd.s32 %s269, %s270
      %s272 = smul.addr %s271, 4
      %s273 = scalar_lea.vmem %s1, %s272
      %p274 = pneg %p81
      %p275 = pneg %p78
      %s276 = sadd.s32 %s21, 2
      %p277 = scmp.lt.s32.totalorder %s20, 1
      %s278 = scalar_select %p277, %s20, 1
      %p279 = scmp.lt.s32.totalorder %s276, 13
      %s280 = scalar_select %p279, %s276, 13
      %s281 = smul.addr %s280, 2
      %s282 = smul.addr %s278, 28
      %s283 = sadd.s32 %s281, %s282
      %s284 = smul.addr %s283, 4
      %s285 = scalar_lea.vmem %s2, %s284
      %p286 = pneg %p111
      %p287 = pneg %p108
      %p288 = pneg %p132
      %p289 = pneg %p129
      %p290 = pneg %p153
      %p291 = pneg %p150
      %p292 = pneg %p181
      %p293 = pneg %p178
      %p294 = scmp.lt.s32.totalorder %s20, 1
      %s295 = scalar_select %p294, %s20, 1
      %p296 = scmp.lt.s32.totalorder %s21, 11
      %s297 = scalar_select %p296, %s21, 11
      %s298 = smul.addr %s297, 2
      %s299 = smul.addr %s295, 24
      %s300 = sadd.s32 %s298, %s299
      %s301 = smul.addr %s300, 4
      %s302 = scalar_lea.vmem %s5, %s301
      %p303 = scmp.lt.s32.totalorder %s20, 1
      %s304 = scalar_select %p303, %s20, 1
      %p305 = scmp.lt.s32.totalorder %s21, 13
      %s306 = scalar_select %p305, %s21, 13
      %s307 = smul.addr %s306, 2
      %s308 = smul.addr %s304, 28
      %s309 = sadd.s32 %s307, %s308
      %s310 = smul.addr %s309, 4
      %s311 = scalar_lea.vmem %s0, %s310
      %s312 = sadd.s32 %s21, 1
      %p313 = scmp.lt.s32.totalorder %s20, 1
      %s314 = scalar_select %p313, %s20, 1
      %p315 = scmp.lt.s32.totalorder %s312, 13
      %s316 = scalar_select %p315, %s312, 13
      %s317 = smul.addr %s316, 2
      %s318 = smul.addr %s314, 28
      %s319 = sadd.s32 %s317, %s318
      %s320 = smul.addr %s319, 4
      %s321 = scalar_lea.vmem %s1, %s320
      %s322 = sadd.s32 %s21, 1
      %s323 = sadd.s32 %s21, 2
      %p324 = scmp.lt.s32.totalorder %s20, 1
      %s325 = scalar_select %p324, %s20, 1
      %p326 = scmp.lt.s32.totalorder %s323, 13
      %s327 = scalar_select %p326, %s323, 13
      %s328 = smul.addr %s327, 2
      %s329 = smul.addr %s325, 28
      %s330 = sadd.s32 %s328, %s329
      %s331 = smul.addr %s330, 4
      %s332 = scalar_lea.vmem %s2, %s331
      %s333 = sadd.s32 %s21, 2
      %p334 = scmp.lt.s32.totalorder %s20, 1
      %s335 = scalar_select %p334, %s20, 1
      %p336 = scmp.lt.s32.totalorder %s21, 11
      %s337 = scalar_select %p336, %s21, 11
      %s338 = smul.addr %s337, 2
      %s339 = smul.addr %s335, 24
      %s340 = sadd.s32 %s338, %s339
      %s341 = smul.addr %s340, 4
      %s342 = scalar_lea.vmem %s5, %s341
      %v344 = vld [vmem:[%s311] sm:$0xf]
      %v345 = vld [vmem:[%s311 + $0x4] sm:$0x7]
      %v346 = vld [vmem:[%s3] sm:$0xf]
      %v347 = vld [vmem:[%s3 + $0x4] sm:$0xf]
      %v348 = vld [vmem:[%s3 + $0x8] sm:$0xf]
      %v349 = vld [vmem:[%s3 + $0xc] sm:$0xf]
      %v350 = vld [vmem:[%s3 + $0x10] sm:$0xf]
      %v351 = vld [vmem:[%s3 + $0x14] sm:$0xf]
      %v352 = vld [vmem:[%s3 + $0x18] sm:$0xf]
      %v353 = vld [vmem:[%s3 + $0x1c] sm:$0xf]
      %v354 = vld [vmem:[%s3 + $0x20] sm:$0xf]
      %v355 = vld [vmem:[%s3 + $0x24] sm:$0xf]
      %v356 = vld [vmem:[%s3 + $0x28] sm:$0xf]
      %v357 = vld [vmem:[%s3 + $0x2c] sm:$0xf]
      %v358 = vld [vmem:[%s3 + $0x30] sm:$0xf]
      %v359 = vld [vmem:[%s3 + $0x34] sm:$0xf]
      %v360 = vld [vmem:[%s3 + $0x38] sm:$0xf]
      %v361 = vld [vmem:[%s3 + $0x3c] sm:$0xf]
      %s362 = scalar_lea.vmem %s3, 64
      %v363 = vld [vmem:[%s362] sm:$0xf]
      %v364 = vld [vmem:[%s362 + $0x4] sm:$0xf]
      %v365 = vld [vmem:[%s362 + $0x8] sm:$0xf]
      %v366 = vld [vmem:[%s362 + $0xc] sm:$0xf]
      %v367 = vld [vmem:[%s362 + $0x10] sm:$0xf]
      %v368 = vld [vmem:[%s362 + $0x14] sm:$0xf]
      %v369 = vld [vmem:[%s362 + $0x18] sm:$0xf]
      %v370 = vld [vmem:[%s362 + $0x1c] sm:$0xf]
      %v371 = vld [vmem:[%s362 + $0x20] sm:$0xf]
      %v372 = vld [vmem:[%s362 + $0x24] sm:$0xf]
      %v373 = vld [vmem:[%s362 + $0x28] sm:$0xf]
      %v374 = vld [vmem:[%s362 + $0x2c] sm:$0xf]
      %v375 = vld [vmem:[%s362 + $0x30] sm:$0xf]
      %v376 = vld [vmem:[%s362 + $0x34] sm:$0xf]
      %v377 = vld [vmem:[%s362 + $0x38] sm:$0xf]
      %v378 = vld [vmem:[%s362 + $0x3c] sm:$0xf]
      %v381 = vunpack.c.l.b16 %v344
      %v382 = vunpack.c.l.b16 %v345
      %v383 = vpack.c.b16 %v382, %v381
      %v385 = vshrl.u32 %v383, 16
      %v387 = vshll.u32 %v383, 16
      %v389 = vrot.slane %v387, 1
      %v390 = vor.u32 %v385, %v389
      %v408 = vunpack.c.l.b16 %v363
      %v409 = vunpack.c.l.b16 %v364
      %v410 = vunpack.c.l.b16 %v365
      %v411 = vunpack.c.l.b16 %v366
      %v412 = vunpack.c.l.b16 %v367
      %v413 = vunpack.c.l.b16 %v368
      %v414 = vunpack.c.l.b16 %v369
      %v415 = vunpack.c.l.b16 %v370
      %v416 = vunpack.c.l.b16 %v371
      %v417 = vunpack.c.l.b16 %v372
      %v418 = vunpack.c.l.b16 %v373
      %v419 = vunpack.c.l.b16 %v374
      %v420 = vunpack.c.l.b16 %v375
      %v421 = vunpack.c.l.b16 %v376
      %v422 = vunpack.c.l.b16 %v377
      %v423 = vunpack.c.l.b16 %v378
      %v424 = vpack.c.b16 %v409, %v408
      %v425 = vpack.c.b16 %v411, %v410
      %v426 = vpack.c.b16 %v413, %v412
      %v427 = vpack.c.b16 %v415, %v414
      %v428 = vpack.c.b16 %v417, %v416
      %v429 = vpack.c.b16 %v419, %v418
      %v430 = vpack.c.b16 %v421, %v420
      %v431 = vpack.c.b16 %v423, %v422
      %440 = vmatprep.subr.bf16.mxu0 0
      %441 = vmatpush1.bf16.msra.mxu0 %v424
      %442 = vmatprep.subr.bf16.mxu0 0
      %443 = vmatpush1.bf16.msra.mxu0 %v425
      %444 = vmatprep.subr.bf16.mxu0 0
      %445 = vmatpush1.bf16.msra.mxu0 %v426
      %446 = vmatprep.subr.bf16.mxu0 0
      %447 = vmatpush1.bf16.msra.mxu0 %v427
      %448 = vmatprep.subr.bf16.mxu0 0
      %449 = vmatpush1.bf16.msra.mxu0 %v428
      %450 = vmatprep.subr.bf16.mxu0 0
      %451 = vmatpush1.bf16.msra.mxu0 %v429
      %452 = vmatprep.subr.bf16.mxu0 0
      %453 = vmatpush1.bf16.msra.mxu0 %v430
      %454 = vmatprep.subr.bf16.mxu0 0
      %455 = vmatpush1.bf16.msra.mxu0 %v431
      %456 = vmatprep.subr.bf16.mxu0 0
      %457 = vmatpush1.bf16.msra.mxu0 0
      %458 = vmatprep.subr.bf16.mxu0 0
      %459 = vmatpush1.bf16.msra.mxu0 0
      %460 = vmatprep.subr.bf16.mxu0 0
      %461 = vmatpush1.bf16.msra.mxu0 0
      %462 = vmatprep.subr.bf16.mxu0 0
      %463 = vmatpush1.bf16.msra.mxu0 0
      %464 = vmatprep.subr.bf16.mxu0 0
      %465 = vmatpush1.bf16.msra.mxu0 0
      %466 = vmatprep.subr.bf16.mxu0 0
      %467 = vmatpush1.bf16.msra.mxu0 0
      %468 = vmatprep.subr.bf16.mxu0 0
      %469 = vmatpush1.bf16.msra.mxu0 0
      %470 = vmatprep.subr.bf16.mxu0 0
      %471 = vmatpush1.bf16.msra.mxu0 0
      %472 = vmatprep.mubr.bf16.mxu0 0
      %473 = vmatmul.mubr.bf16.gmra.mrb[0].mxu0 %v390
      %v474 = vpop.f32.mrb[0].mxu0
      %v475 = vadd.f32 0.0, %v474
      %v476 = vpop.f32.mrb[0].mxu0
      %v477 = vpop.f32.mrb[0].mxu0
      %v478 = vadd.f32 0.0, %v477
      %v479 = vpop.f32.mrb[0].mxu0
      %480 = vdwg.mxu0
      %v498 = vunpack.c.l.b16 %v346
      %v499 = vunpack.c.l.b16 %v347
      %v500 = vunpack.c.l.b16 %v348
      %v501 = vunpack.c.l.b16 %v349
      %v502 = vunpack.c.l.b16 %v350
      %v503 = vunpack.c.l.b16 %v351
      %v504 = vunpack.c.l.b16 %v352
      %v505 = vunpack.c.l.b16 %v353
      %v506 = vunpack.c.l.b16 %v354
      %v507 = vunpack.c.l.b16 %v355
      %v508 = vunpack.c.l.b16 %v356
      %v509 = vunpack.c.l.b16 %v357
      %v510 = vunpack.c.l.b16 %v358
      %v511 = vunpack.c.l.b16 %v359
      %v512 = vunpack.c.l.b16 %v360
      %v513 = vunpack.c.l.b16 %v361
      %v514 = vpack.c.b16 %v499, %v498
      %v515 = vpack.c.b16 %v501, %v500
      %v516 = vpack.c.b16 %v503, %v502
      %v517 = vpack.c.b16 %v505, %v504
      %v518 = vpack.c.b16 %v507, %v506
      %v519 = vpack.c.b16 %v509, %v508
      %v520 = vpack.c.b16 %v511, %v510
      %v521 = vpack.c.b16 %v513, %v512
      %530 = vmatprep.subr.bf16.mxu0 0
      %531 = vmatpush1.bf16.msra.mxu0 %v514
      %532 = vmatprep.subr.bf16.mxu0 0
      %533 = vmatpush1.bf16.msra.mxu0 %v515
      %534 = vmatprep.subr.bf16.mxu0 0
      %535 = vmatpush1.bf16.msra.mxu0 %v516
      %536 = vmatprep.subr.bf16.mxu0 0
      %537 = vmatpush1.bf16.msra.mxu0 %v517
      %538 = vmatprep.subr.bf16.mxu0 0
      %539 = vmatpush1.bf16.msra.mxu0 %v518
      %540 = vmatprep.subr.bf16.mxu0 0
      %541 = vmatpush1.bf16.msra.mxu0 %v519
      %542 = vmatprep.subr.bf16.mxu0 0
      %543 = vmatpush1.bf16.msra.mxu0 %v520
      %544 = vmatprep.subr.bf16.mxu0 0
      %545 = vmatpush1.bf16.msra.mxu0 %v521
      %546 = vmatprep.subr.bf16.mxu0 0
      %547 = vmatpush1.bf16.msra.mxu0 0
      %548 = vmatprep.subr.bf16.mxu0 0
      %549 = vmatpush1.bf16.msra.mxu0 0
      %550 = vmatprep.subr.bf16.mxu0 0
      %551 = vmatpush1.bf16.msra.mxu0 0
      %552 = vmatprep.subr.bf16.mxu0 0
      %553 = vmatpush1.bf16.msra.mxu0 0
      %554 = vmatprep.subr.bf16.mxu0 0
      %555 = vmatpush1.bf16.msra.mxu0 0
      %556 = vmatprep.subr.bf16.mxu0 0
      %557 = vmatpush1.bf16.msra.mxu0 0
      %558 = vmatprep.subr.bf16.mxu0 0
      %559 = vmatpush1.bf16.msra.mxu0 0
      %560 = vmatprep.subr.bf16.mxu0 0
      %561 = vmatpush1.bf16.msra.mxu0 0
      %562 = vmatprep.mubr.bf16.mxu0 0
      %563 = vmatmul.mubr.bf16.gmra.mrb[0].mxu0 %v383
      %v564 = vpop.f32.mrb[0].mxu0
      %v565 = vadd.f32 %v475, %v564
      %v566 = vpop.f32.mrb[0].mxu0
      %v567 = vpop.f32.mrb[0].mxu0
      %v568 = vadd.f32 %v478, %v567
      %v569 = vpop.f32.mrb[0].mxu0
      %570 = vdwg.mxu0
      %s571 = scalar_lea.vmem %s3, 128
      %v572 = vld [vmem:[%s571] sm:$0xf]
      %v573 = vld [vmem:[%s571 + $0x4] sm:$0xf]
      %v574 = vld [vmem:[%s571 + $0x8] sm:$0xf]
      %v575 = vld [vmem:[%s571 + $0xc] sm:$0xf]
      %v576 = vld [vmem:[%s571 + $0x10] sm:$0xf]
      %v577 = vld [vmem:[%s571 + $0x14] sm:$0xf]
      %v578 = vld [vmem:[%s571 + $0x18] sm:$0xf]
      %v579 = vld [vmem:[%s571 + $0x1c] sm:$0xf]
      %v580 = vld [vmem:[%s571 + $0x20] sm:$0xf]
      %v581 = vld [vmem:[%s571 + $0x24] sm:$0xf]
      %v582 = vld [vmem:[%s571 + $0x28] sm:$0xf]
      %v583 = vld [vmem:[%s571 + $0x2c] sm:$0xf]
      %v584 = vld [vmem:[%s571 + $0x30] sm:$0xf]
      %v585 = vld [vmem:[%s571 + $0x34] sm:$0xf]
      %v586 = vld [vmem:[%s571 + $0x38] sm:$0xf]
      %v587 = vld [vmem:[%s571 + $0x3c] sm:$0xf]
      %v588 = vrot.slane %v383, 1
      %v606 = vunpack.c.l.b16 %v572
      %v607 = vunpack.c.l.b16 %v573
      %v608 = vunpack.c.l.b16 %v574
      %v609 = vunpack.c.l.b16 %v575
      %v610 = vunpack.c.l.b16 %v576
      %v611 = vunpack.c.l.b16 %v577
      %v612 = vunpack.c.l.b16 %v578
      %v613 = vunpack.c.l.b16 %v579
      %v614 = vunpack.c.l.b16 %v580
      %v615 = vunpack.c.l.b16 %v581
      %v616 = vunpack.c.l.b16 %v582
      %v617 = vunpack.c.l.b16 %v583
      %v618 = vunpack.c.l.b16 %v584
      %v619 = vunpack.c.l.b16 %v585
      %v620 = vunpack.c.l.b16 %v586
      %v621 = vunpack.c.l.b16 %v587
      %v622 = vpack.c.b16 %v607, %v606
      %v623 = vpack.c.b16 %v609, %v608
      %v624 = vpack.c.b16 %v611, %v610
      %v625 = vpack.c.b16 %v613, %v612
      %v626 = vpack.c.b16 %v615, %v614
      %v627 = vpack.c.b16 %v617, %v616
      %v628 = vpack.c.b16 %v619, %v618
      %v629 = vpack.c.b16 %v621, %v620
      %638 = vmatprep.subr.bf16.mxu0 0
      %639 = vmatpush1.bf16.msra.mxu0 %v622
      %640 = vmatprep.subr.bf16.mxu0 0
      %641 = vmatpush1.bf16.msra.mxu0 %v623
      %642 = vmatprep.subr.bf16.mxu0 0
      %643 = vmatpush1.bf16.msra.mxu0 %v624
      %644 = vmatprep.subr.bf16.mxu0 0
      %645 = vmatpush1.bf16.msra.mxu0 %v625
      %646 = vmatprep.subr.bf16.mxu0 0
      %647 = vmatpush1.bf16.msra.mxu0 %v626
      %648 = vmatprep.subr.bf16.mxu0 0
      %649 = vmatpush1.bf16.msra.mxu0 %v627
      %650 = vmatprep.subr.bf16.mxu0 0
      %651 = vmatpush1.bf16.msra.mxu0 %v628
      %652 = vmatprep.subr.bf16.mxu0 0
      %653 = vmatpush1.bf16.msra.mxu0 %v629
      %654 = vmatprep.subr.bf16.mxu0 0
      %655 = vmatpush1.bf16.msra.mxu0 0
      %656 = vmatprep.subr.bf16.mxu0 0
      %657 = vmatpush1.bf16.msra.mxu0 0
      %658 = vmatprep.subr.bf16.mxu0 0
      %659 = vmatpush1.bf16.msra.mxu0 0
      %660 = vmatprep.subr.bf16.mxu0 0
      %661 = vmatpush1.bf16.msra.mxu0 0
      %662 = vmatprep.subr.bf16.mxu0 0
      %663 = vmatpush1.bf16.msra.mxu0 0
      %664 = vmatprep.subr.bf16.mxu0 0
      %665 = vmatpush1.bf16.msra.mxu0 0
      %666 = vmatprep.subr.bf16.mxu0 0
      %667 = vmatpush1.bf16.msra.mxu0 0
      %668 = vmatprep.subr.bf16.mxu0 0
      %669 = vmatpush1.bf16.msra.mxu0 0
      %670 = vmatprep.mubr.bf16.mxu0 0
      %671 = vmatmul.mubr.bf16.gmra.mrb[0].mxu0 %v588
      %v672 = vpop.f32.mrb[0].mxu0
      %v673 = vadd.f32 0.0, %v672
      %v674 = vpop.f32.mrb[0].mxu0
      %v675 = vpop.f32.mrb[0].mxu0
      %v676 = vadd.f32 0.0, %v675
      %v677 = vpop.f32.mrb[0].mxu0
      %678 = vdwg.mxu0
      %v679 = vadd.f32 %v565, %v673
      %v680 = vadd.f32 %v568, %v676
      %v681 = vld [vmem:[%s321] sm:$0xf]
      %v682 = vld [vmem:[%s321 + $0x4] sm:$0x7]
      %s683 = scalar_lea.vmem %s3, 192
      %v684 = vld [vmem:[%s683] sm:$0xf]
      %v685 = vld [vmem:[%s683 + $0x4] sm:$0xf]
      %v686 = vld [vmem:[%s683 + $0x8] sm:$0xf]
      %v687 = vld [vmem:[%s683 + $0xc] sm:$0xf]
      %v688 = vld [vmem:[%s683 + $0x10] sm:$0xf]
      %v689 = vld [vmem:[%s683 + $0x14] sm:$0xf]
      %v690 = vld [vmem:[%s683 + $0x18] sm:$0xf]
      %v691 = vld [vmem:[%s683 + $0x1c] sm:$0xf]
      %v692 = vld [vmem:[%s683 + $0x20] sm:$0xf]
      %v693 = vld [vmem:[%s683 + $0x24] sm:$0xf]
      %v694 = vld [vmem:[%s683 + $0x28] sm:$0xf]
      %v695 = vld [vmem:[%s683 + $0x2c] sm:$0xf]
      %v696 = vld [vmem:[%s683 + $0x30] sm:$0xf]
      %v697 = vld [vmem:[%s683 + $0x34] sm:$0xf]
      %v698 = vld [vmem:[%s683 + $0x38] sm:$0xf]
      %v699 = vld [vmem:[%s683 + $0x3c] sm:$0xf]
      %v702 = vunpack.c.l.b16 %v681
      %v703 = vunpack.c.l.b16 %v682
      %v704 = vpack.c.b16 %v703, %v702
      %v722 = vunpack.c.l.b16 %v684
      %v723 = vunpack.c.l.b16 %v685
      %v724 = vunpack.c.l.b16 %v686
      %v725 = vunpack.c.l.b16 %v687
      %v726 = vunpack.c.l.b16 %v688
      %v727 = vunpack.c.l.b16 %v689
      %v728 = vunpack.c.l.b16 %v690
      %v729 = vunpack.c.l.b16 %v691
      %v730 = vunpack.c.l.b16 %v692
      %v731 = vunpack.c.l.b16 %v693
      %v732 = vunpack.c.l.b16 %v694
      %v733 = vunpack.c.l.b16 %v695
      %v734 = vunpack.c.l.b16 %v696
      %v735 = vunpack.c.l.b16 %v697
      %v736 = vunpack.c.l.b16 %v698
      %v737 = vunpack.c.l.b16 %v699
      %v738 = vpack.c.b16 %v723, %v722
      %v739 = vpack.c.b16 %v725, %v724
      %v740 = vpack.c.b16 %v727, %v726
      %v741 = vpack.c.b16 %v729, %v728
      %v742 = vpack.c.b16 %v731, %v730
      %v743 = vpack.c.b16 %v733, %v732
      %v744 = vpack.c.b16 %v735, %v734
      %v745 = vpack.c.b16 %v737, %v736
      %754 = vmatprep.subr.bf16.mxu0 0
      %755 = vmatpush1.bf16.msra.mxu0 %v738
      %756 = vmatprep.subr.bf16.mxu0 0
      %757 = vmatpush1.bf16.msra.mxu0 %v739
      %758 = vmatprep.subr.bf16.mxu0 0
      %759 = vmatpush1.bf16.msra.mxu0 %v740
      %760 = vmatprep.subr.bf16.mxu0 0
      %761 = vmatpush1.bf16.msra.mxu0 %v741
      %762 = vmatprep.subr.bf16.mxu0 0
      %763 = vmatpush1.bf16.msra.mxu0 %v742
      %764 = vmatprep.subr.bf16.mxu0 0
      %765 = vmatpush1.bf16.msra.mxu0 %v743
      %766 = vmatprep.subr.bf16.mxu0 0
      %767 = vmatpush1.bf16.msra.mxu0 %v744
      %768 = vmatprep.subr.bf16.mxu0 0
      %769 = vmatpush1.bf16.msra.mxu0 %v745
      %770 = vmatprep.subr.bf16.mxu0 0
      %771 = vmatpush1.bf16.msra.mxu0 0
      %772 = vmatprep.subr.bf16.mxu0 0
      %773 = vmatpush1.bf16.msra.mxu0 0
      %774 = vmatprep.subr.bf16.mxu0 0
      %775 = vmatpush1.bf16.msra.mxu0 0
      %776 = vmatprep.subr.bf16.mxu0 0
      %777 = vmatpush1.bf16.msra.mxu0 0
      %778 = vmatprep.subr.bf16.mxu0 0
      %779 = vmatpush1.bf16.msra.mxu0 0
      %780 = vmatprep.subr.bf16.mxu0 0
      %781 = vmatpush1.bf16.msra.mxu0 0
      %782 = vmatprep.subr.bf16.mxu0 0
      %783 = vmatpush1.bf16.msra.mxu0 0
      %784 = vmatprep.subr.bf16.mxu0 0
      %785 = vmatpush1.bf16.msra.mxu0 0
      %786 = vmatprep.mubr.bf16.mxu0 0
      %787 = vmatmul.mubr.bf16.gmra.mrb[0].mxu0 %v704
      %v788 = vpop.f32.mrb[0].mxu0
      %v789 = vadd.f32 0.0, %v788
      %v790 = vpop.f32.mrb[0].mxu0
      %v791 = vpop.f32.mrb[0].mxu0
      %v792 = vadd.f32 0.0, %v791
      %v793 = vpop.f32.mrb[0].mxu0
      %794 = vdwg.mxu0
      %v795 = vadd.f32 %v679, %v789
      %v796 = vadd.f32 %v680, %v792
      %s797 = scalar_lea.vmem %s3, 256
      %v798 = vld [vmem:[%s797] sm:$0xf]
      %v799 = vld [vmem:[%s797 + $0x4] sm:$0xf]
      %v800 = vld [vmem:[%s797 + $0x8] sm:$0xf]
      %v801 = vld [vmem:[%s797 + $0xc] sm:$0xf]
      %v802 = vld [vmem:[%s797 + $0x10] sm:$0xf]
      %v803 = vld [vmem:[%s797 + $0x14] sm:$0xf]
      %v804 = vld [vmem:[%s797 + $0x18] sm:$0xf]
      %v805 = vld [vmem:[%s797 + $0x1c] sm:$0xf]
      %v806 = vld [vmem:[%s797 + $0x20] sm:$0xf]
      %v807 = vld [vmem:[%s797 + $0x24] sm:$0xf]
      %v808 = vld [vmem:[%s797 + $0x28] sm:$0xf]
      %v809 = vld [vmem:[%s797 + $0x2c] sm:$0xf]
      %v810 = vld [vmem:[%s797 + $0x30] sm:$0xf]
      %v811 = vld [vmem:[%s797 + $0x34] sm:$0xf]
      %v812 = vld [vmem:[%s797 + $0x38] sm:$0xf]
      %v813 = vld [vmem:[%s797 + $0x3c] sm:$0xf]
      %v815 = vshrl.u32 %v704, 16
      %v817 = vshll.u32 %v704, 16
      %v819 = vrot.slane %v817, 1
      %v820 = vor.u32 %v815, %v819
      %v838 = vunpack.c.l.b16 %v798
      %v839 = vunpack.c.l.b16 %v799
      %v840 = vunpack.c.l.b16 %v800
      %v841 = vunpack.c.l.b16 %v801
      %v842 = vunpack.c.l.b16 %v802
      %v843 = vunpack.c.l.b16 %v803
      %v844 = vunpack.c.l.b16 %v804
      %v845 = vunpack.c.l.b16 %v805
      %v846 = vunpack.c.l.b16 %v806
      %v847 = vunpack.c.l.b16 %v807
      %v848 = vunpack.c.l.b16 %v808
      %v849 = vunpack.c.l.b16 %v809
      %v850 = vunpack.c.l.b16 %v810
      %v851 = vunpack.c.l.b16 %v811
      %v852 = vunpack.c.l.b16 %v812
      %v853 = vunpack.c.l.b16 %v813
      %v854 = vpack.c.b16 %v839, %v838
      %v855 = vpack.c.b16 %v841, %v840
      %v856 = vpack.c.b16 %v843, %v842
      %v857 = vpack.c.b16 %v845, %v844
      %v858 = vpack.c.b16 %v847, %v846
      %v859 = vpack.c.b16 %v849, %v848
      %v860 = vpack.c.b16 %v851, %v850
      %v861 = vpack.c.b16 %v853, %v852
      %870 = vmatprep.subr.bf16.mxu0 0
      %871 = vmatpush1.bf16.msra.mxu0 %v854
      %872 = vmatprep.subr.bf16.mxu0 0
      %873 = vmatpush1.bf16.msra.mxu0 %v855
      %874 = vmatprep.subr.bf16.mxu0 0
      %875 = vmatpush1.bf16.msra.mxu0 %v856
      %876 = vmatprep.subr.bf16.mxu0 0
      %877 = vmatpush1.bf16.msra.mxu0 %v857
      %878 = vmatprep.subr.bf16.mxu0 0
      %879 = vmatpush1.bf16.msra.mxu0 %v858
      %880 = vmatprep.subr.bf16.mxu0 0
      %881 = vmatpush1.bf16.msra.mxu0 %v859
      %882 = vmatprep.subr.bf16.mxu0 0
      %883 = vmatpush1.bf16.msra.mxu0 %v860
      %884 = vmatprep.subr.bf16.mxu0 0
      %885 = vmatpush1.bf16.msra.mxu0 %v861
      %886 = vmatprep.subr.bf16.mxu0 0
      %887 = vmatpush1.bf16.msra.mxu0 0
      %888 = vmatprep.subr.bf16.mxu0 0
      %889 = vmatpush1.bf16.msra.mxu0 0
      %890 = vmatprep.subr.bf16.mxu0 0
      %891 = vmatpush1.bf16.msra.mxu0 0
      %892 = vmatprep.subr.bf16.mxu0 0
      %893 = vmatpush1.bf16.msra.mxu0 0
      %894 = vmatprep.subr.bf16.mxu0 0
      %895 = vmatpush1.bf16.msra.mxu0 0
      %896 = vmatprep.subr.bf16.mxu0 0
      %897 = vmatpush1.bf16.msra.mxu0 0
      %898 = vmatprep.subr.bf16.mxu0 0
      %899 = vmatpush1.bf16.msra.mxu0 0
      %900 = vmatprep.subr.bf16.mxu0 0
      %901 = vmatpush1.bf16.msra.mxu0 0
      %902 = vmatprep.mubr.bf16.mxu0 0
      %903 = vmatmul.mubr.bf16.gmra.mrb[0].mxu0 %v820
      %v904 = vpop.f32.mrb[0].mxu0
      %v905 = vadd.f32 0.0, %v904
      %v906 = vpop.f32.mrb[0].mxu0
      %v907 = vpop.f32.mrb[0].mxu0
      %v908 = vadd.f32 0.0, %v907
      %v909 = vpop.f32.mrb[0].mxu0
      %910 = vdwg.mxu0
      %v911 = vadd.f32 %v795, %v905
      %v912 = vadd.f32 %v796, %v908
      %s913 = scalar_lea.vmem %s3, 320
      %v914 = vld [vmem:[%s913] sm:$0xf]
      %v915 = vld [vmem:[%s913 + $0x4] sm:$0xf]
      %v916 = vld [vmem:[%s913 + $0x8] sm:$0xf]
      %v917 = vld [vmem:[%s913 + $0xc] sm:$0xf]
      %v918 = vld [vmem:[%s913 + $0x10] sm:$0xf]
      %v919 = vld [vmem:[%s913 + $0x14] sm:$0xf]
      %v920 = vld [vmem:[%s913 + $0x18] sm:$0xf]
      %v921 = vld [vmem:[%s913 + $0x1c] sm:$0xf]
      %v922 = vld [vmem:[%s913 + $0x20] sm:$0xf]
      %v923 = vld [vmem:[%s913 + $0x24] sm:$0xf]
      %v924 = vld [vmem:[%s913 + $0x28] sm:$0xf]
      %v925 = vld [vmem:[%s913 + $0x2c] sm:$0xf]
      %v926 = vld [vmem:[%s913 + $0x30] sm:$0xf]
      %v927 = vld [vmem:[%s913 + $0x34] sm:$0xf]
      %v928 = vld [vmem:[%s913 + $0x38] sm:$0xf]
      %v929 = vld [vmem:[%s913 + $0x3c] sm:$0xf]
      %v930 = vrot.slane %v704, 1
      %v948 = vunpack.c.l.b16 %v914
      %v949 = vunpack.c.l.b16 %v915
      %v950 = vunpack.c.l.b16 %v916
      %v951 = vunpack.c.l.b16 %v917
      %v952 = vunpack.c.l.b16 %v918
      %v953 = vunpack.c.l.b16 %v919
      %v954 = vunpack.c.l.b16 %v920
      %v955 = vunpack.c.l.b16 %v921
      %v956 = vunpack.c.l.b16 %v922
      %v957 = vunpack.c.l.b16 %v923
      %v958 = vunpack.c.l.b16 %v924
      %v959 = vunpack.c.l.b16 %v925
      %v960 = vunpack.c.l.b16 %v926
      %v961 = vunpack.c.l.b16 %v927
      %v962 = vunpack.c.l.b16 %v928
      %v963 = vunpack.c.l.b16 %v929
      %v964 = vpack.c.b16 %v949, %v948
      %v965 = vpack.c.b16 %v951, %v950
      %v966 = vpack.c.b16 %v953, %v952
      %v967 = vpack.c.b16 %v955, %v954
      %v968 = vpack.c.b16 %v957, %v956
      %v969 = vpack.c.b16 %v959, %v958
      %v970 = vpack.c.b16 %v961, %v960
      %v971 = vpack.c.b16 %v963, %v962
      %980 = vmatprep.subr.bf16.mxu0 0
      %981 = vmatpush1.bf16.msra.mxu0 %v964
      %982 = vmatprep.subr.bf16.mxu0 0
      %983 = vmatpush1.bf16.msra.mxu0 %v965
      %984 = vmatprep.subr.bf16.mxu0 0
      %985 = vmatpush1.bf16.msra.mxu0 %v966
      %986 = vmatprep.subr.bf16.mxu0 0
      %987 = vmatpush1.bf16.msra.mxu0 %v967
      %988 = vmatprep.subr.bf16.mxu0 0
      %989 = vmatpush1.bf16.msra.mxu0 %v968
      %990 = vmatprep.subr.bf16.mxu0 0
      %991 = vmatpush1.bf16.msra.mxu0 %v969
      %992 = vmatprep.subr.bf16.mxu0 0
      %993 = vmatpush1.bf16.msra.mxu0 %v970
      %994 = vmatprep.subr.bf16.mxu0 0
      %995 = vmatpush1.bf16.msra.mxu0 %v971
      %996 = vmatprep.subr.bf16.mxu0 0
      %997 = vmatpush1.bf16.msra.mxu0 0
      %998 = vmatprep.subr.bf16.mxu0 0
      %999 = vmatpush1.bf16.msra.mxu0 0
      %1000 = vmatprep.subr.bf16.mxu0 0
      %1001 = vmatpush1.bf16.msra.mxu0 0
      %1002 = vmatprep.subr.bf16.mxu0 0
      %1003 = vmatpush1.bf16.msra.mxu0 0
      %1004 = vmatprep.subr.bf16.mxu0 0
      %1005 = vmatpush1.bf16.msra.mxu0 0
      %1006 = vmatprep.subr.bf16.mxu0 0
      %1007 = vmatpush1.bf16.msra.mxu0 0
      %1008 = vmatprep.subr.bf16.mxu0 0
      %1009 = vmatpush1.bf16.msra.mxu0 0
      %1010 = vmatprep.subr.bf16.mxu0 0
      %1011 = vmatpush1.bf16.msra.mxu0 0
      %1012 = vmatprep.mubr.bf16.mxu0 0
      %1013 = vmatmul.mubr.bf16.gmra.mrb[0].mxu0 %v930
      %v1014 = vpop.f32.mrb[0].mxu0
      %v1015 = vadd.f32 0.0, %v1014
      %v1016 = vpop.f32.mrb[0].mxu0
      %v1017 = vpop.f32.mrb[0].mxu0
      %v1018 = vadd.f32 0.0, %v1017
      %v1019 = vpop.f32.mrb[0].mxu0
      %1020 = vdwg.mxu0
      %v1021 = vadd.f32 %v911, %v1015
      %v1022 = vadd.f32 %v912, %v1018
      %v1023 = vld [vmem:[%s332] sm:$0xf]
      %v1024 = vld [vmem:[%s332 + $0x4] sm:$0x7]
      %s1025 = scalar_lea.vmem %s3, 384
      %v1026 = vld [vmem:[%s1025] sm:$0xf]
      %v1027 = vld [vmem:[%s1025 + $0x4] sm:$0xf]
      %v1028 = vld [vmem:[%s1025 + $0x8] sm:$0xf]
      %v1029 = vld [vmem:[%s1025 + $0xc] sm:$0xf]
      %v1030 = vld [vmem:[%s1025 + $0x10] sm:$0xf]
      %v1031 = vld [vmem:[%s1025 + $0x14] sm:$0xf]
      %v1032 = vld [vmem:[%s1025 + $0x18] sm:$0xf]
      %v1033 = vld [vmem:[%s1025 + $0x1c] sm:$0xf]
      %v1034 = vld [vmem:[%s1025 + $0x20] sm:$0xf]
      %v1035 = vld [vmem:[%s1025 + $0x24] sm:$0xf]
      %v1036 = vld [vmem:[%s1025 + $0x28] sm:$0xf]
      %v1037 = vld [vmem:[%s1025 + $0x2c] sm:$0xf]
      %v1038 = vld [vmem:[%s1025 + $0x30] sm:$0xf]
      %v1039 = vld [vmem:[%s1025 + $0x34] sm:$0xf]
      %v1040 = vld [vmem:[%s1025 + $0x38] sm:$0xf]
      %v1041 = vld [vmem:[%s1025 + $0x3c] sm:$0xf]
      %v1044 = vunpack.c.l.b16 %v1023
      %v1045 = vunpack.c.l.b16 %v1024
      %v1046 = vpack.c.b16 %v1045, %v1044
      %v1064 = vunpack.c.l.b16 %v1026
      %v1065 = vunpack.c.l.b16 %v1027
      %v1066 = vunpack.c.l.b16 %v1028
      %v1067 = vunpack.c.l.b16 %v1029
      %v1068 = vunpack.c.l.b16 %v1030
      %v1069 = vunpack.c.l.b16 %v1031
      %v1070 = vunpack.c.l.b16 %v1032
      %v1071 = vunpack.c.l.b16 %v1033
      %v1072 = vunpack.c.l.b16 %v1034
      %v1073 = vunpack.c.l.b16 %v1035
      %v1074 = vunpack.c.l.b16 %v1036
      %v1075 = vunpack.c.l.b16 %v1037
      %v1076 = vunpack.c.l.b16 %v1038
      %v1077 = vunpack.c.l.b16 %v1039
      %v1078 = vunpack.c.l.b16 %v1040
      %v1079 = vunpack.c.l.b16 %v1041
      %v1080 = vpack.c.b16 %v1065, %v1064
      %v1081 = vpack.c.b16 %v1067, %v1066
      %v1082 = vpack.c.b16 %v1069, %v1068
      %v1083 = vpack.c.b16 %v1071, %v1070
      %v1084 = vpack.c.b16 %v1073, %v1072
      %v1085 = vpack.c.b16 %v1075, %v1074
      %v1086 = vpack.c.b16 %v1077, %v1076
      %v1087 = vpack.c.b16 %v1079, %v1078
      %1096 = vmatprep.subr.bf16.mxu0 0
      %1097 = vmatpush1.bf16.msra.mxu0 %v1080
      %1098 = vmatprep.subr.bf16.mxu0 0
      %1099 = vmatpush1.bf16.msra.mxu0 %v1081
      %1100 = vmatprep.subr.bf16.mxu0 0
      %1101 = vmatpush1.bf16.msra.mxu0 %v1082
      %1102 = vmatprep.subr.bf16.mxu0 0
      %1103 = vmatpush1.bf16.msra.mxu0 %v1083
      %1104 = vmatprep.subr.bf16.mxu0 0
      %1105 = vmatpush1.bf16.msra.mxu0 %v1084
      %1106 = vmatprep.subr.bf16.mxu0 0
      %1107 = vmatpush1.bf16.msra.mxu0 %v1085
      %1108 = vmatprep.subr.bf16.mxu0 0
      %1109 = vmatpush1.bf16.msra.mxu0 %v1086
      %1110 = vmatprep.subr.bf16.mxu0 0
      %1111 = vmatpush1.bf16.msra.mxu0 %v1087
      %1112 = vmatprep.subr.bf16.mxu0 0
      %1113 = vmatpush1.bf16.msra.mxu0 0
      %1114 = vmatprep.subr.bf16.mxu0 0
      %1115 = vmatpush1.bf16.msra.mxu0 0
      %1116 = vmatprep.subr.bf16.mxu0 0
      %1117 = vmatpush1.bf16.msra.mxu0 0
      %1118 = vmatprep.subr.bf16.mxu0 0
      %1119 = vmatpush1.bf16.msra.mxu0 0
      %1120 = vmatprep.subr.bf16.mxu0 0
      %1121 = vmatpush1.bf16.msra.mxu0 0
      %1122 = vmatprep.subr.bf16.mxu0 0
      %1123 = vmatpush1.bf16.msra.mxu0 0
      %1124 = vmatprep.subr.bf16.mxu0 0
      %1125 = vmatpush1.bf16.msra.mxu0 0
      %1126 = vmatprep.subr.bf16.mxu0 0
      %1127 = vmatpush1.bf16.msra.mxu0 0
      %1128 = vmatprep.mubr.bf16.mxu0 0
      %1129 = vmatmul.mubr.bf16.gmra.mrb[0].mxu0 %v1046
      %v1130 = vpop.f32.mrb[0].mxu0
      %v1131 = vadd.f32 0.0, %v1130
      %v1132 = vpop.f32.mrb[0].mxu0
      %v1133 = vpop.f32.mrb[0].mxu0
      %v1134 = vadd.f32 0.0, %v1133
      %v1135 = vpop.f32.mrb[0].mxu0
      %1136 = vdwg.mxu0
      %v1137 = vadd.f32 %v1021, %v1131
      %v1138 = vadd.f32 %v1022, %v1134
      %s1139 = scalar_lea.vmem %s3, 448
      %v1140 = vld [vmem:[%s1139] sm:$0xf]
      %v1141 = vld [vmem:[%s1139 + $0x4] sm:$0xf]
      %v1142 = vld [vmem:[%s1139 + $0x8] sm:$0xf]
      %v1143 = vld [vmem:[%s1139 + $0xc] sm:$0xf]
      %v1144 = vld [vmem:[%s1139 + $0x10] sm:$0xf]
      %v1145 = vld [vmem:[%s1139 + $0x14] sm:$0xf]
      %v1146 = vld [vmem:[%s1139 + $0x18] sm:$0xf]
      %v1147 = vld [vmem:[%s1139 + $0x1c] sm:$0xf]
      %v1148 = vld [vmem:[%s1139 + $0x20] sm:$0xf]
      %v1149 = vld [vmem:[%s1139 + $0x24] sm:$0xf]
      %v1150 = vld [vmem:[%s1139 + $0x28] sm:$0xf]
      %v1151 = vld [vmem:[%s1139 + $0x2c] sm:$0xf]
      %v1152 = vld [vmem:[%s1139 + $0x30] sm:$0xf]
      %v1153 = vld [vmem:[%s1139 + $0x34] sm:$0xf]
      %v1154 = vld [vmem:[%s1139 + $0x38] sm:$0xf]
      %v1155 = vld [vmem:[%s1139 + $0x3c] sm:$0xf]
      %v1157 = vshrl.u32 %v1046, 16
      %v1159 = vshll.u32 %v1046, 16
      %v1161 = vrot.slane %v1159, 1
      %v1162 = vor.u32 %v1157, %v1161
      %v1180 = vunpack.c.l.b16 %v1140
      %v1181 = vunpack.c.l.b16 %v1141
      %v1182 = vunpack.c.l.b16 %v1142
      %v1183 = vunpack.c.l.b16 %v1143
      %v1184 = vunpack.c.l.b16 %v1144
      %v1185 = vunpack.c.l.b16 %v1145
      %v1186 = vunpack.c.l.b16 %v1146
      %v1187 = vunpack.c.l.b16 %v1147
      %v1188 = vunpack.c.l.b16 %v1148
      %v1189 = vunpack.c.l.b16 %v1149
      %v1190 = vunpack.c.l.b16 %v1150
      %v1191 = vunpack.c.l.b16 %v1151
      %v1192 = vunpack.c.l.b16 %v1152
      %v1193 = vunpack.c.l.b16 %v1153
      %v1194 = vunpack.c.l.b16 %v1154
      %v1195 = vunpack.c.l.b16 %v1155
      %v1196 = vpack.c.b16 %v1181, %v1180
      %v1197 = vpack.c.b16 %v1183, %v1182
      %v1198 = vpack.c.b16 %v1185, %v1184
      %v1199 = vpack.c.b16 %v1187, %v1186
      %v1200 = vpack.c.b16 %v1189, %v1188
      %v1201 = vpack.c.b16 %v1191, %v1190
      %v1202 = vpack.c.b16 %v1193, %v1192
      %v1203 = vpack.c.b16 %v1195, %v1194
      %1212 = vmatprep.subr.bf16.mxu0 0
      %1213 = vmatpush1.bf16.msra.mxu0 %v1196
      %1214 = vmatprep.subr.bf16.mxu0 0
      %1215 = vmatpush1.bf16.msra.mxu0 %v1197
      %1216 = vmatprep.subr.bf16.mxu0 0
      %1217 = vmatpush1.bf16.msra.mxu0 %v1198
      %1218 = vmatprep.subr.bf16.mxu0 0
      %1219 = vmatpush1.bf16.msra.mxu0 %v1199
      %1220 = vmatprep.subr.bf16.mxu0 0
      %1221 = vmatpush1.bf16.msra.mxu0 %v1200
      %1222 = vmatprep.subr.bf16.mxu0 0
      %1223 = vmatpush1.bf16.msra.mxu0 %v1201
      %1224 = vmatprep.subr.bf16.mxu0 0
      %1225 = vmatpush1.bf16.msra.mxu0 %v1202
      %1226 = vmatprep.subr.bf16.mxu0 0
      %1227 = vmatpush1.bf16.msra.mxu0 %v1203
      %1228 = vmatprep.subr.bf16.mxu0 0
      %1229 = vmatpush1.bf16.msra.mxu0 0
      %1230 = vmatprep.subr.bf16.mxu0 0
      %1231 = vmatpush1.bf16.msra.mxu0 0
      %1232 = vmatprep.subr.bf16.mxu0 0
      %1233 = vmatpush1.bf16.msra.mxu0 0
      %1234 = vmatprep.subr.bf16.mxu0 0
      %1235 = vmatpush1.bf16.msra.mxu0 0
      %1236 = vmatprep.subr.bf16.mxu0 0
      %1237 = vmatpush1.bf16.msra.mxu0 0
      %1238 = vmatprep.subr.bf16.mxu0 0
      %1239 = vmatpush1.bf16.msra.mxu0 0
      %1240 = vmatprep.subr.bf16.mxu0 0
      %1241 = vmatpush1.bf16.msra.mxu0 0
      %1242 = vmatprep.subr.bf16.mxu0 0
      %1243 = vmatpush1.bf16.msra.mxu0 0
      %1244 = vmatprep.mubr.bf16.mxu0 0
      %1245 = vmatmul.mubr.bf16.gmra.mrb[0].mxu0 %v1162
      %v1246 = vpop.f32.mrb[0].mxu0
      %v1247 = vadd.f32 0.0, %v1246
      %v1248 = vpop.f32.mrb[0].mxu0
      %v1249 = vpop.f32.mrb[0].mxu0
      %v1250 = vadd.f32 0.0, %v1249
      %v1251 = vpop.f32.mrb[0].mxu0
      %1252 = vdwg.mxu0
      %v1253 = vadd.f32 %v1137, %v1247
      %v1254 = vadd.f32 %v1138, %v1250
      %s1255 = scalar_lea.vmem %s3, 512
      %v1256 = vld [vmem:[%s1255] sm:$0xf]
      %v1257 = vld [vmem:[%s1255 + $0x4] sm:$0xf]
      %v1258 = vld [vmem:[%s1255 + $0x8] sm:$0xf]
      %v1259 = vld [vmem:[%s1255 + $0xc] sm:$0xf]
      %v1260 = vld [vmem:[%s1255 + $0x10] sm:$0xf]
      %v1261 = vld [vmem:[%s1255 + $0x14] sm:$0xf]
      %v1262 = vld [vmem:[%s1255 + $0x18] sm:$0xf]
      %v1263 = vld [vmem:[%s1255 + $0x1c] sm:$0xf]
      %v1264 = vld [vmem:[%s1255 + $0x20] sm:$0xf]
      %v1265 = vld [vmem:[%s1255 + $0x24] sm:$0xf]
      %v1266 = vld [vmem:[%s1255 + $0x28] sm:$0xf]
      %v1267 = vld [vmem:[%s1255 + $0x2c] sm:$0xf]
      %v1268 = vld [vmem:[%s1255 + $0x30] sm:$0xf]
      %v1269 = vld [vmem:[%s1255 + $0x34] sm:$0xf]
      %v1270 = vld [vmem:[%s1255 + $0x38] sm:$0xf]
      %v1271 = vld [vmem:[%s1255 + $0x3c] sm:$0xf]
      %v1272 = vrot.slane %v1046, 1
      %v1290 = vunpack.c.l.b16 %v1256
      %v1291 = vunpack.c.l.b16 %v1257
      %v1292 = vunpack.c.l.b16 %v1258
      %v1293 = vunpack.c.l.b16 %v1259
      %v1294 = vunpack.c.l.b16 %v1260
      %v1295 = vunpack.c.l.b16 %v1261
      %v1296 = vunpack.c.l.b16 %v1262
      %v1297 = vunpack.c.l.b16 %v1263
      %v1298 = vunpack.c.l.b16 %v1264
      %v1299 = vunpack.c.l.b16 %v1265
      %v1300 = vunpack.c.l.b16 %v1266
      %v1301 = vunpack.c.l.b16 %v1267
      %v1302 = vunpack.c.l.b16 %v1268
      %v1303 = vunpack.c.l.b16 %v1269
      %v1304 = vunpack.c.l.b16 %v1270
      %v1305 = vunpack.c.l.b16 %v1271
      %v1306 = vpack.c.b16 %v1291, %v1290
      %v1307 = vpack.c.b16 %v1293, %v1292
      %v1308 = vpack.c.b16 %v1295, %v1294
      %v1309 = vpack.c.b16 %v1297, %v1296
      %v1310 = vpack.c.b16 %v1299, %v1298
      %v1311 = vpack.c.b16 %v1301, %v1300
      %v1312 = vpack.c.b16 %v1303, %v1302
      %v1313 = vpack.c.b16 %v1305, %v1304
      %1322 = vmatprep.subr.bf16.mxu0 0
      %1323 = vmatpush1.bf16.msra.mxu0 %v1306
      %1324 = vmatprep.subr.bf16.mxu0 0
      %1325 = vmatpush1.bf16.msra.mxu0 %v1307
      %1326 = vmatprep.subr.bf16.mxu0 0
      %1327 = vmatpush1.bf16.msra.mxu0 %v1308
      %1328 = vmatprep.subr.bf16.mxu0 0
      %1329 = vmatpush1.bf16.msra.mxu0 %v1309
      %1330 = vmatprep.subr.bf16.mxu0 0
      %1331 = vmatpush1.bf16.msra.mxu0 %v1310
      %1332 = vmatprep.subr.bf16.mxu0 0
      %1333 = vmatpush1.bf16.msra.mxu0 %v1311
      %1334 = vmatprep.subr.bf16.mxu0 0
      %1335 = vmatpush1.bf16.msra.mxu0 %v1312
      %1336 = vmatprep.subr.bf16.mxu0 0
      %1337 = vmatpush1.bf16.msra.mxu0 %v1313
      %1338 = vmatprep.subr.bf16.mxu0 0
      %1339 = vmatpush1.bf16.msra.mxu0 0
      %1340 = vmatprep.subr.bf16.mxu0 0
      %1341 = vmatpush1.bf16.msra.mxu0 0
      %1342 = vmatprep.subr.bf16.mxu0 0
      %1343 = vmatpush1.bf16.msra.mxu0 0
      %1344 = vmatprep.subr.bf16.mxu0 0
      %1345 = vmatpush1.bf16.msra.mxu0 0
      %1346 = vmatprep.subr.bf16.mxu0 0
      %1347 = vmatpush1.bf16.msra.mxu0 0
      %1348 = vmatprep.subr.bf16.mxu0 0
      %1349 = vmatpush1.bf16.msra.mxu0 0
      %1350 = vmatprep.subr.bf16.mxu0 0
      %1351 = vmatpush1.bf16.msra.mxu0 0
      %1352 = vmatprep.subr.bf16.mxu0 0
      %1353 = vmatpush1.bf16.msra.mxu0 0
      %1354 = vmatprep.mubr.bf16.mxu0 0
      %1355 = vmatmul.mubr.bf16.gmra.mrb[0].mxu0 %v1272
      %v1356 = vpop.f32.mrb[0].mxu0
      %v1357 = vadd.f32 0.0, %v1356
      %v1358 = vpop.f32.mrb[0].mxu0
      %v1359 = vpop.f32.mrb[0].mxu0
      %v1360 = vadd.f32 0.0, %v1359
      %v1361 = vpop.f32.mrb[0].mxu0
      %1362 = vdwg.mxu0
      %v1363 = vadd.f32 %v1253, %v1357
      %v1364 = vadd.f32 %v1254, %v1360
      %v1365 = vld [vmem:[%s4] sm:$0x1]
      %v1367 = vlaneseq
      %v1368 = vshrl.u32 %v1367, 7
      %v1369 = vsub.s32 0, %v1368
      %v1370 = vrot.slane %v1365, %v1369
      %v1372 = vadd.f32 %v1363, %v1370
      %v1373 = vadd.f32 %v1364, %v1370
      %v1374 = vmax.f32 %v1372, 0.0
      %v1375 = vmax.f32 %v1373, 0.0
      %v1376 = vpack.c.bf16 %v1375, %v1374
      %v1378 = vunpack.c.l.b16 %v1376
      %v1379 = vunpack.c.h.b16 %v1376
      %v1380 = vpack.c.b16 %v1378, %v1378
      %v1381 = vpack.c.b16 %v1379, %v1379
      %1384 = vst [vmem:[%s342] sm:$0xf] %v1380
      %1385 = vst [vmem:[%s342 + $0x4] sm:$0x3] %v1381
      %p1386 = scmp.lt.s32.totalorder %s20, 1
      %s1387 = scalar_select %p1386, %s20, 1
      %p1388 = scmp.lt.s32.totalorder %s21, 11
      %s1389 = scalar_select %p1388, %s21, 11
      %s1390 = smul.addr %s1389, 2
      %s1391 = smul.addr %s1387, 24
      %s1392 = sadd.s32 %s1390, %s1391
      %s1393 = smul.addr %s1392, 4
      %s1394 = scalar_lea.vmem %s5, %s1393
      // Predicated region
      $region41: #{_lambda_.5} parent=39 // pred_check
        %p1395 = pneg %p178
      $region42: #{_lambda_.5} parent=39 // pred_check_branch
        %1397 = sbr.rel (%p1395) target = $region44
      $region43: #{_lambda_.5} parent=39 // pred_region
        _
      $region44: #{_lambda_.5} parent=39 // pred_fallthru
        _
    $region40: #{_lambda_.5} parent=5 // pred_fallthru
      _
    %p1398 = scmp.le.s32.totalorder 2, %s11
    // Predicated region
    $region45: #{_lambda_.5} parent=5 // pred_check
      %p1399 = pneg %p1398
    $region46: #{_lambda_.5} parent=5 // pred_check_branch
      %1401 = sbr.rel (%p1399) target = $region48
    $region47: #{_lambda_.5} parent=5 // pred_region
      %s1402 = ssub.s32 %s11, 2
      // Predicated region
      $region49: #{_lambda_.5} parent=47 // pred_check
        %p1403 = pneg %p184
      $region50: #{_lambda_.5} parent=47 // pred_check_branch
        %1405 = sbr.rel (%p1403) target = $region52
      $region51: #{_lambda_.5} parent=47 // pred_region
        %p1406 = scmp.lt.s32.totalorder %s22, 1
        %s1407 = scalar_select %p1406, %s22, 1
        %p1408 = scmp.lt.s32.totalorder %s23, 11
        %s1409 = scalar_select %p1408, %s23, 11
        %s1410 = smul.addr %s1409, 2
        %s1411 = smul.addr %s1407, 24
        %s1412 = sadd.s32 %s1410, %s1411
        %s1413 = smul.addr %s1412, 4
        %s1414 = scalar_lea.vmem %s5, %s1413
      $region52: #{_lambda_.5} parent=47 // pred_fallthru
        _
    $region48: #{_lambda_.5} parent=5 // pred_fallthru
      _
  $region6: #{_lambda_.5} parent=0 // loop_footer
    %s15 = sadd.s32 1, %s11
  $region7: #{_lambda_.5} parent=0 // loop_footer_branch
    %10 = sbr.rel target = $region3
  $region8: #{_lambda_.5} parent=0 // loop_exit
    _

// kernel: _lambda_.4
$region0: #{_lambda_.4}
  #allocation0 [shape = 'u32[]', space=smem, size = 0x4, offset = 0x4, fixed_abs, tag = 'smem constant byte address 0x4 - core index']
  #allocation1 [shape = 'u32[144,128]{1,0:T(1,128)}', space=vmem, size = 0x12000, scoped, tag = 'internal scratch']
  %s0 = inlined_call_operand.vmem [shape: bf16[2,20,20,128], index: 0, kind: input, shape index: {}, may-alias: {0,1,2}]
  %s1 = inlined_call_operand.vmem [shape: bf16[2,20,20,128], index: 1, kind: input, shape index: {}, may-alias: {0,1,2}]
  %s2 = inlined_call_operand.vmem [shape: bf16[2,20,20,128], index: 2, kind: input, shape index: {}, may-alias: {0,1,2}]
  %s3 = inlined_call_operand.vmem [shape: bf16[2,16,16,128], index: 3, kind: input, shape index: {}, may-alias: {3,4,5}]
  %s4 = inlined_call_operand.vmem [shape: bf16[2,16,16,128], index: 4, kind: input, shape index: {}, may-alias: {3,4,5}]
  %s5 = inlined_call_operand.vmem [shape: bf16[2,16,16,128], index: 5, kind: input, shape index: {}, may-alias: {3,4,5}]
  %s6 = inlined_call_operand.vmem [shape: bf16[9,128,128], index: 6, kind: input, shape index: {}]
  %s7 = inlined_call_operand.vmem [shape: bf16[9,128,128], index: 7, kind: input, shape index: {}]
  %s8 = inlined_call_operand.vmem [shape: f32[1,128], index: 8, kind: input, shape index: {}]
  %s9 = inlined_call_operand.vmem [shape: bf16[2,14,14,128], index: 9, kind: output, shape index: {}]
  %s10 = sld [smem:[#allocation0]]
  $region69: #{_lambda_.4} parent=0
    _
  %s12 = ssub.s32 1, %s10
  %s13 = scalar_select 0, %s12, %s10
  loop: start=0, step=1, limit=30
  $region2: #{_lambda_.4} parent=0 // loop_pre_header
    _
  $region3: #{_lambda_.4} parent=0 // loop_header
    %s15 = sphi 0, %s19
    %p16 = scmp.ge.s32.totalorder %s15, 30
    %s22 = sphi 0, %s34
    %s23 = sphi 0, %s30
    %s24 = sphi 0, %s22
    %s25 = sphi 0, %s23
    %s26 = sphi 0, %s24
    %s27 = sphi 0, %s25
    %s41 = sphi 0, %s43
    %s44 = sphi 0, %s41
    %s45 = sphi 0, %s44
    %s61 = sphi 0, %s45
    %s71 = sphi 0, %s73
    %s74 = sphi 0, %s71
    %s75 = sphi 0, %s74
    %s91 = sphi 0, %s75
    %s101 = sphi 0, %s103
    %s104 = sphi 0, %s101
    %s105 = sphi 0, %s104
    %s121 = sphi 0, %s105
    %s129 = sphi 0, %s131
    %s132 = sphi 0, %s129
    %s133 = sphi 0, %s132
    %s149 = sphi 0, %s133
    %s159 = sphi 0, %s161
    %s162 = sphi 0, %s159
    %s163 = sphi 0, %s162
    %s179 = sphi 0, %s163
    %s189 = sphi 0, %s191
    %s192 = sphi 0, %s189
    %s193 = sphi 0, %s192
    %s209 = sphi 0, %s193
    %s213 = sphi 0, %s213
    %s215 = sphi 0, %s213
    %s216 = sphi 0, %s215
    %s230 = sphi 0, %s216
    %s234 = sphi 0, %s234
    %s236 = sphi 0, %s234
    %s237 = sphi 0, %s236
    %s251 = sphi 0, %s237
    %s255 = sphi 0, %s255
    %s257 = sphi 0, %s255
    %s258 = sphi 0, %s257
    %s272 = sphi 0, %s258
    %s280 = sphi 0, %s282
    %s283 = sphi 0, %s280
    %s284 = sphi 0, %s283
    %s300 = sphi 0, %s284
  $region4: #{_lambda_.4} parent=0 // loop_header_branch
    %18 = sbr.rel (%p16) target = $region8
  $region5: #{_lambda_.4} parent=0 // loop_body
    %s20 = ssub.s32 %s15, 1
    %s21 = ssub.s32 %s15, 2
    %s28 = sadd.s32 1, %s23
    %p29 = scmp.ge.s32.totalorder %s28, 14
    %s30 = scalar_select %p29, 0, %s28
    %s31 = sadd.s32 1, %s22
    %s32 = scalar_select %p29, %s31, %s22
    %p33 = scmp.ge.s32.totalorder %s32, 2
    %s34 = scalar_select %p33, 0, %s32
    %s35 = sadd.s32 %s23, 2
    %s36 = sadd.s32 %s30, 2
    %s37 = ssub.s32 %s22, %s34
    %s38 = ssub.s32 %s35, %s36
    %s39 = sor.u32 %s37, %s38
    %p40 = scmp.eq.s32.totalorder %s39, 0
    %s42 = sadd.s32 %s41, 1
    %s43 = scalar_select %p40, %s41, %s42
    %p46 = pneg %p40
    %p47 = scmp.eq.s32.totalorder %s15, 27
    %p48 = por %p46, %p47
    %p49 = scmp.ne.s32.totalorder %s41, %s44
    %p50 = scmp.eq.s32.totalorder %s15, 0
    %p51 = por %p49, %p50
    %p52 = scmp.ne.s32.totalorder %s41, %s44
    %p53 = scmp.eq.s32.totalorder %s20, 27
    %p54 = por %p52, %p53
    %p55 = scmp.ne.s32.totalorder %s44, %s45
    %p56 = scmp.eq.s32.totalorder %s20, 0
    %p57 = por %p55, %p56
    %p58 = scmp.ne.s32.totalorder %s44, %s45
    %p59 = scmp.eq.s32.totalorder %s21, 27
    %p60 = por %p58, %p59
    %p62 = scmp.ne.s32.totalorder %s45, %s61
    %p63 = scmp.eq.s32.totalorder %s21, 0
    %p64 = por %p62, %p63
    %s65 = sadd.s32 %s23, 3
    %s66 = sadd.s32 %s30, 3
    %s67 = ssub.s32 %s22, %s34
    %s68 = ssub.s32 %s65, %s66
    %s69 = sor.u32 %s67, %s68
    %p70 = scmp.eq.s32.totalorder %s69, 0
    %s72 = sadd.s32 %s71, 1
    %s73 = scalar_select %p70, %s71, %s72
    %p76 = pneg %p70
    %p77 = scmp.eq.s32.totalorder %s15, 27
    %p78 = por %p76, %p77
    %p79 = scmp.ne.s32.totalorder %s71, %s74
    %p80 = scmp.eq.s32.totalorder %s15, 0
    %p81 = por %p79, %p80
    %p82 = scmp.ne.s32.totalorder %s71, %s74
    %p83 = scmp.eq.s32.totalorder %s20, 27
    %p84 = por %p82, %p83
    %p85 = scmp.ne.s32.totalorder %s74, %s75
    %p86 = scmp.eq.s32.totalorder %s20, 0
    %p87 = por %p85, %p86
    %p88 = scmp.ne.s32.totalorder %s74, %s75
    %p89 = scmp.eq.s32.totalorder %s21, 27
    %p90 = por %p88, %p89
    %p92 = scmp.ne.s32.totalorder %s75, %s91
    %p93 = scmp.eq.s32.totalorder %s21, 0
    %p94 = por %p92, %p93
    %s95 = sadd.s32 %s23, 4
    %s96 = sadd.s32 %s30, 4
    %s97 = ssub.s32 %s22, %s34
    %s98 = ssub.s32 %s95, %s96
    %s99 = sor.u32 %s97, %s98
    %p100 = scmp.eq.s32.totalorder %s99, 0
    %s102 = sadd.s32 %s101, 1
    %s103 = scalar_select %p100, %s101, %s102
    %p106 = pneg %p100
    %p107 = scmp.eq.s32.totalorder %s15, 27
    %p108 = por %p106, %p107
    %p109 = scmp.ne.s32.totalorder %s101, %s104
    %p110 = scmp.eq.s32.totalorder %s15, 0
    %p111 = por %p109, %p110
    %p112 = scmp.ne.s32.totalorder %s101, %s104
    %p113 = scmp.eq.s32.totalorder %s20, 27
    %p114 = por %p112, %p113
    %p115 = scmp.ne.s32.totalorder %s104, %s105
    %p116 = scmp.eq.s32.totalorder %s20, 0
    %p117 = por %p115, %p116
    %p118 = scmp.ne.s32.totalorder %s104, %s105
    %p119 = scmp.eq.s32.totalorder %s21, 27
    %p120 = por %p118, %p119
    %p122 = scmp.ne.s32.totalorder %s105, %s121
    %p123 = scmp.eq.s32.totalorder %s21, 0
    %p124 = por %p122, %p123
    %s125 = ssub.s32 %s22, %s34
    %s126 = ssub.s32 %s23, %s30
    %s127 = sor.u32 %s125, %s126
    %p128 = scmp.eq.s32.totalorder %s127, 0
    %s130 = sadd.s32 %s129, 1
    %s131 = scalar_select %p128, %s129, %s130
    %p134 = pneg %p128
    %p135 = scmp.eq.s32.totalorder %s15, 27
    %p136 = por %p134, %p135
    %p137 = scmp.ne.s32.totalorder %s129, %s132
    %p138 = scmp.eq.s32.totalorder %s15, 0
    %p139 = por %p137, %p138
    %p140 = scmp.ne.s32.totalorder %s129, %s132
    %p141 = scmp.eq.s32.totalorder %s20, 27
    %p142 = por %p140, %p141
    %p143 = scmp.ne.s32.totalorder %s132, %s133
    %p144 = scmp.eq.s32.totalorder %s20, 0
    %p145 = por %p143, %p144
    %p146 = scmp.ne.s32.totalorder %s132, %s133
    %p147 = scmp.eq.s32.totalorder %s21, 27
    %p148 = por %p146, %p147
    %p150 = scmp.ne.s32.totalorder %s133, %s149
    %p151 = scmp.eq.s32.totalorder %s21, 0
    %p152 = por %p150, %p151
    %s153 = sadd.s32 %s23, 1
    %s154 = sadd.s32 %s30, 1
    %s155 = ssub.s32 %s22, %s34
    %s156 = ssub.s32 %s153, %s154
    %s157 = sor.u32 %s155, %s156
    %p158 = scmp.eq.s32.totalorder %s157, 0
    %s160 = sadd.s32 %s159, 1
    %s161 = scalar_select %p158, %s159, %s160
    %p164 = pneg %p158
    %p165 = scmp.eq.s32.totalorder %s15, 27
    %p166 = por %p164, %p165
    %p167 = scmp.ne.s32.totalorder %s159, %s162
    %p168 = scmp.eq.s32.totalorder %s15, 0
    %p169 = por %p167, %p168
    %p170 = scmp.ne.s32.totalorder %s159, %s162
    %p171 = scmp.eq.s32.totalorder %s20, 27
    %p172 = por %p170, %p171
    %p173 = scmp.ne.s32.totalorder %s162, %s163
    %p174 = scmp.eq.s32.totalorder %s20, 0
    %p175 = por %p173, %p174
    %p176 = scmp.ne.s32.totalorder %s162, %s163
    %p177 = scmp.eq.s32.totalorder %s21, 27
    %p178 = por %p176, %p177
    %p180 = scmp.ne.s32.totalorder %s163, %s179
    %p181 = scmp.eq.s32.totalorder %s21, 0
    %p182 = por %p180, %p181
    %s183 = sadd.s32 %s23, 2
    %s184 = sadd.s32 %s30, 2
    %s185 = ssub.s32 %s22, %s34
    %s186 = ssub.s32 %s183, %s184
    %s187 = sor.u32 %s185, %s186
    %p188 = scmp.eq.s32.totalorder %s187, 0
    %s190 = sadd.s32 %s189, 1
    %s191 = scalar_select %p188, %s189, %s190
    %p194 = pneg %p188
    %p195 = scmp.eq.s32.totalorder %s15, 27
    %p196 = por %p194, %p195
    %p197 = scmp.ne.s32.totalorder %s189, %s192
    %p198 = scmp.eq.s32.totalorder %s15, 0
    %p199 = por %p197, %p198
    %p200 = scmp.ne.s32.totalorder %s189, %s192
    %p201 = scmp.eq.s32.totalorder %s20, 27
    %p202 = por %p200, %p201
    %p203 = scmp.ne.s32.totalorder %s192, %s193
    %p204 = scmp.eq.s32.totalorder %s20, 0
    %p205 = por %p203, %p204
    %p206 = scmp.ne.s32.totalorder %s192, %s193
    %p207 = scmp.eq.s32.totalorder %s21, 27
    %p208 = por %p206, %p207
    %p210 = scmp.ne.s32.totalorder %s193, %s209
    %p211 = scmp.eq.s32.totalorder %s21, 0
    %p212 = por %p210, %p211
    %s214 = sadd.s32 %s213, 1
    %p217 = scmp.eq.s32.totalorder %s15, 27
    %p218 = scmp.ne.s32.totalorder %s213, %s215
    %p219 = scmp.eq.s32.totalorder %s15, 0
    %p220 = por %p218, %p219
    %p221 = scmp.ne.s32.totalorder %s213, %s215
    %p222 = scmp.eq.s32.totalorder %s20, 27
    %p223 = por %p221, %p222
    %p224 = scmp.ne.s32.totalorder %s215, %s216
    %p225 = scmp.eq.s32.totalorder %s20, 0
    %p226 = por %p224, %p225
    %p227 = scmp.ne.s32.totalorder %s215, %s216
    %p228 = scmp.eq.s32.totalorder %s21, 27
    %p229 = por %p227, %p228
    %p231 = scmp.ne.s32.totalorder %s216, %s230
    %p232 = scmp.eq.s32.totalorder %s21, 0
    %p233 = por %p231, %p232
    %s235 = sadd.s32 %s234, 1
    %p238 = scmp.eq.s32.totalorder %s15, 27
    %p239 = scmp.ne.s32.totalorder %s234, %s236
    %p240 = scmp.eq.s32.totalorder %s15, 0
    %p241 = por %p239, %p240
    %p242 = scmp.ne.s32.totalorder %s234, %s236
    %p243 = scmp.eq.s32.totalorder %s20, 27
    %p244 = por %p242, %p243
    %p245 = scmp.ne.s32.totalorder %s236, %s237
    %p246 = scmp.eq.s32.totalorder %s20, 0
    %p247 = por %p245, %p246
    %p248 = scmp.ne.s32.totalorder %s236, %s237
    %p249 = scmp.eq.s32.totalorder %s21, 27
    %p250 = por %p248, %p249
    %p252 = scmp.ne.s32.totalorder %s237, %s251
    %p253 = scmp.eq.s32.totalorder %s21, 0
    %p254 = por %p252, %p253
    %s256 = sadd.s32 %s255, 1
    %p259 = scmp.eq.s32.totalorder %s15, 27
    %p260 = scmp.ne.s32.totalorder %s255, %s257
    %p261 = scmp.eq.s32.totalorder %s15, 0
    %p262 = por %p260, %p261
    %p263 = scmp.ne.s32.totalorder %s255, %s257
    %p264 = scmp.eq.s32.totalorder %s20, 27
    %p265 = por %p263, %p264
    %p266 = scmp.ne.s32.totalorder %s257, %s258
    %p267 = scmp.eq.s32.totalorder %s20, 0
    %p268 = por %p266, %p267
    %p269 = scmp.ne.s32.totalorder %s257, %s258
    %p270 = scmp.eq.s32.totalorder %s21, 27
    %p271 = por %p269, %p270
    %p273 = scmp.ne.s32.totalorder %s258, %s272
    %p274 = scmp.eq.s32.totalorder %s21, 0
    %p275 = por %p273, %p274
    %s276 = ssub.s32 %s22, %s34
    %s277 = ssub.s32 %s23, %s30
    %s278 = sor.u32 %s276, %s277
    %p279 = scmp.eq.s32.totalorder %s278, 0
    %s281 = sadd.s32 %s280, 1
    %s282 = scalar_select %p279, %s280, %s281
    %p285 = pneg %p279
    %p286 = scmp.eq.s32.totalorder %s15, 27
    %p287 = por %p285, %p286
    %p288 = scmp.ne.s32.totalorder %s280, %s283
    %p289 = scmp.eq.s32.totalorder %s15, 0
    %p290 = por %p288, %p289
    %p291 = scmp.ne.s32.totalorder %s280, %s283
    %p292 = scmp.eq.s32.totalorder %s20, 27
    %p293 = por %p291, %p292
    %p294 = scmp.ne.s32.totalorder %s283, %s284
    %p295 = scmp.eq.s32.totalorder %s20, 0
    %p296 = por %p294, %p295
    %p297 = scmp.ne.s32.totalorder %s283, %s284
    %p298 = scmp.eq.s32.totalorder %s21, 27
    %p299 = por %p297, %p298
    %p301 = scmp.ne.s32.totalorder %s284, %s300
    %p302 = scmp.eq.s32.totalorder %s21, 0
    %p303 = por %p301, %p302
    %p304 = scmp.le.s32.totalorder 1, %s15
    %p305 = scmp.lt.s32.totalorder %s15, 29
    %p306 = pnand %p304, %p305
    %p307 = pneg %p306
    // Predicated region
    $region9: #{_lambda_.4} parent=5 // pred_check
      _
    $region10: #{_lambda_.4} parent=5 // pred_check_branch
      %309 = sbr.rel (%p306) target = $region12
    $region11: #{_lambda_.4} parent=5 // pred_region
      %s310 = ssub.s32 %s15, 1
      // Predicated region
      $region13: #{_lambda_.4} parent=11 // pred_check
        %p311 = pneg %p226
      $region14: #{_lambda_.4} parent=11 // pred_check_branch
        %313 = sbr.rel (%p311) target = $region16
      $region15: #{_lambda_.4} parent=11 // pred_region
        _
      $region16: #{_lambda_.4} parent=11 // pred_fallthru
        _
      // Predicated region
      $region17: #{_lambda_.4} parent=11 // pred_check
        %p314 = pneg %p247
      $region18: #{_lambda_.4} parent=11 // pred_check_branch
        %316 = sbr.rel (%p314) target = $region20
      $region19: #{_lambda_.4} parent=11 // pred_region
        _
      $region20: #{_lambda_.4} parent=11 // pred_fallthru
        _
      // Predicated region
      $region21: #{_lambda_.4} parent=11 // pred_check
        %p317 = pneg %p268
      $region22: #{_lambda_.4} parent=11 // pred_check_branch
        %319 = sbr.rel (%p317) target = $region24
      $region23: #{_lambda_.4} parent=11 // pred_region
        _
      $region24: #{_lambda_.4} parent=11 // pred_fallthru
        _
    $region12: #{_lambda_.4} parent=5 // pred_fallthru
      _
    %p320 = scmp.lt.s32.totalorder %s15, 28
    // Predicated region
    $region25: #{_lambda_.4} parent=5 // pred_check
      %p321 = pneg %p320
    $region26: #{_lambda_.4} parent=5 // pred_check_branch
      %323 = sbr.rel (%p321) target = $region28
    $region27: #{_lambda_.4} parent=5 // pred_region
      // Predicated region
      $region29: #{_lambda_.4} parent=27 // pred_check
        %p324 = pneg %p51
      $region30: #{_lambda_.4} parent=27 // pred_check_branch
        %326 = sbr.rel (%p324) target = $region32
      $region31: #{_lambda_.4} parent=27 // pred_region
        %s327 = sadd.s32 %s23, 2
        %p328 = scmp.lt.s32.totalorder %s22, 1
        %s329 = scalar_select %p328, %s22, 1
        %p330 = scmp.lt.s32.totalorder %s327, 19
        %s331 = scalar_select %p330, %s327, 19
        %s332 = smul.addr %s331, 3
        %s333 = smul.addr %s329, 60
        %s334 = sadd.s32 %s332, %s333
        %s335 = smul.addr %s334, 4
        %s336 = scalar_lea.vmem %s0, %s335
        %s337 = sadd.s32 %s23, 2
      $region32: #{_lambda_.4} parent=27 // pred_fallthru
        _
      // Predicated region
      $region33: #{_lambda_.4} parent=27 // pred_check
        %p338 = pneg %p81
      $region34: #{_lambda_.4} parent=27 // pred_check_branch
        %340 = sbr.rel (%p338) target = $region36
      $region35: #{_lambda_.4} parent=27 // pred_region
        %s341 = sadd.s32 %s23, 3
        %p342 = scmp.lt.s32.totalorder %s22, 1
        %s343 = scalar_select %p342, %s22, 1
        %p344 = scmp.lt.s32.totalorder %s341, 19
        %s345 = scalar_select %p344, %s341, 19
        %s346 = smul.addr %s345, 3
        %s347 = smul.addr %s343, 60
        %s348 = sadd.s32 %s346, %s347
        %s349 = smul.addr %s348, 4
        %s350 = scalar_lea.vmem %s1, %s349
        %s351 = sadd.s32 %s23, 3
      $region36: #{_lambda_.4} parent=27 // pred_fallthru
        _
      // Predicated region
      $region37: #{_lambda_.4} parent=27 // pred_check
        %p352 = pneg %p111
      $region38: #{_lambda_.4} parent=27 // pred_check_branch
        %354 = sbr.rel (%p352) target = $region40
      $region39: #{_lambda_.4} parent=27 // pred_region
        %s355 = sadd.s32 %s23, 4
        %p356 = scmp.lt.s32.totalorder %s22, 1
        %s357 = scalar_select %p356, %s22, 1
        %p358 = scmp.lt.s32.totalorder %s355, 19
        %s359 = scalar_select %p358, %s355, 19
        %s360 = smul.addr %s359, 3
        %s361 = smul.addr %s357, 60
        %s362 = sadd.s32 %s360, %s361
        %s363 = smul.addr %s362, 4
        %s364 = scalar_lea.vmem %s2, %s363
        %s365 = sadd.s32 %s23, 4
      $region40: #{_lambda_.4} parent=27 // pred_fallthru
        _
      // Predicated region
      $region41: #{_lambda_.4} parent=27 // pred_check
        %p366 = pneg %p139
      $region42: #{_lambda_.4} parent=27 // pred_check_branch
        %368 = sbr.rel (%p366) target = $region44
      $region43: #{_lambda_.4} parent=27 // pred_region
        %p369 = scmp.lt.s32.totalorder %s22, 1
        %s370 = scalar_select %p369, %s22, 1
        %p371 = scmp.lt.s32.totalorder %s23, 15
        %s372 = scalar_select %p371, %s23, 15
        %s373 = smul.addr %s372, 2
        %s374 = smul.addr %s370, 32
        %s375 = sadd.s32 %s373, %s374
        %s376 = smul.addr %s375, 4
        %s377 = scalar_lea.vmem %s3, %s376
      $region44: #{_lambda_.4} parent=27 // pred_fallthru
        _
      // Predicated region
      $region45: #{_lambda_.4} parent=27 // pred_check
        %p378 = pneg %p169
      $region46: #{_lambda_.4} parent=27 // pred_check_branch
        %380 = sbr.rel (%p378) target = $region48
      $region47: #{_lambda_.4} parent=27 // pred_region
        %s381 = sadd.s32 %s23, 1
        %p382 = scmp.lt.s32.totalorder %s22, 1
        %s383 = scalar_select %p382, %s22, 1
        %p384 = scmp.lt.s32.totalorder %s381, 15
        %s385 = scalar_select %p384, %s381, 15
        %s386 = smul.addr %s385, 2
        %s387 = smul.addr %s383, 32
        %s388 = sadd.s32 %s386, %s387
        %s389 = smul.addr %s388, 4
        %s390 = scalar_lea.vmem %s4, %s389
        %s391 = sadd.s32 %s23, 1
      $region48: #{_lambda_.4} parent=27 // pred_fallthru
        _
      // Predicated region
      $region49: #{_lambda_.4} parent=27 // pred_check
        %p392 = pneg %p199
      $region50: #{_lambda_.4} parent=27 // pred_check_branch
        %394 = sbr.rel (%p392) target = $region52
      $region51: #{_lambda_.4} parent=27 // pred_region
        %s395 = sadd.s32 %s23, 2
        %p396 = scmp.lt.s32.totalorder %s22, 1
        %s397 = scalar_select %p396, %s22, 1
        %p398 = scmp.lt.s32.totalorder %s395, 15
        %s399 = scalar_select %p398, %s395, 15
        %s400 = smul.addr %s399, 2
        %s401 = smul.addr %s397, 32
        %s402 = sadd.s32 %s400, %s401
        %s403 = smul.addr %s402, 4
        %s404 = scalar_lea.vmem %s5, %s403
        %s405 = sadd.s32 %s23, 2
      $region52: #{_lambda_.4} parent=27 // pred_fallthru
        _
    $region28: #{_lambda_.4} parent=5 // pred_fallthru
      _
    %p406 = scmp.le.s32.totalorder 1, %s15
    %p407 = scmp.lt.s32.totalorder %s15, 29
    %p408 = pnand %p406, %p407
    %p409 = pneg %p408
    // Predicated region
    $region53: #{_lambda_.4} parent=5 // pred_check
      _
    $region54: #{_lambda_.4} parent=5 // pred_check_branch
      %411 = sbr.rel (%p408) target = $region56
    $region55: #{_lambda_.4} parent=5 // pred_region
      %s412 = ssub.s32 %s15, 1
      %s413 = sadd.s32 %s25, 2
      %p414 = scmp.lt.s32.totalorder %s24, 1
      %s415 = scalar_select %p414, %s24, 1
      %p416 = scmp.lt.s32.totalorder %s413, 19
      %s417 = scalar_select %p416, %s413, 19
      %s418 = smul.addr %s417, 3
      %s419 = smul.addr %s415, 60
      %s420 = sadd.s32 %s418, %s419
      %s421 = smul.addr %s420, 4
      %s422 = scalar_lea.vmem %s0, %s421
      %p423 = pneg %p57
      %p424 = pneg %p54
      %s425 = sadd.s32 %s25, 3
      %p426 = scmp.lt.s32.totalorder %s24, 1
      %s427 = scalar_select %p426, %s24, 1
      %p428 = scmp.lt.s32.totalorder %s425, 19
      %s429 = scalar_select %p428, %s425, 19
      %s430 = smul.addr %s429, 3
      %s431 = smul.addr %s427, 60
      %s432 = sadd.s32 %s430, %s431
      %s433 = smul.addr %s432, 4
      %s434 = scalar_lea.vmem %s1, %s433
      %p435 = pneg %p87
      %p436 = pneg %p84
      %s437 = sadd.s32 %s25, 4
      %p438 = scmp.lt.s32.totalorder %s24, 1
      %s439 = scalar_select %p438, %s24, 1
      %p440 = scmp.lt.s32.totalorder %s437, 19
      %s441 = scalar_select %p440, %s437, 19
      %s442 = smul.addr %s441, 3
      %s443 = smul.addr %s439, 60
      %s444 = sadd.s32 %s442, %s443
      %s445 = smul.addr %s444, 4
      %s446 = scalar_lea.vmem %s2, %s445
      %p447 = pneg %p117
      %p448 = pneg %p114
      %p449 = scmp.lt.s32.totalorder %s24, 1
      %s450 = scalar_select %p449, %s24, 1
      %p451 = scmp.lt.s32.totalorder %s25, 15
      %s452 = scalar_select %p451, %s25, 15
      %s453 = smul.addr %s452, 2
      %s454 = smul.addr %s450, 32
      %s455 = sadd.s32 %s453, %s454
      %s456 = smul.addr %s455, 4
      %s457 = scalar_lea.vmem %s3, %s456
      %p458 = pneg %p145
      %p459 = pneg %p142
      %s460 = sadd.s32 %s25, 1
      %p461 = scmp.lt.s32.totalorder %s24, 1
      %s462 = scalar_select %p461, %s24, 1
      %p463 = scmp.lt.s32.totalorder %s460, 15
      %s464 = scalar_select %p463, %s460, 15
      %s465 = smul.addr %s464, 2
      %s466 = smul.addr %s462, 32
      %s467 = sadd.s32 %s465, %s466
      %s468 = smul.addr %s467, 4
      %s469 = scalar_lea.vmem %s4, %s468
      %p470 = pneg %p175
      %p471 = pneg %p172
      %s472 = sadd.s32 %s25, 2
      %p473 = scmp.lt.s32.totalorder %s24, 1
      %s474 = scalar_select %p473, %s24, 1
      %p475 = scmp.lt.s32.totalorder %s472, 15
      %s476 = scalar_select %p475, %s472, 15
      %s477 = smul.addr %s476, 2
      %s478 = smul.addr %s474, 32
      %s479 = sadd.s32 %s477, %s478
      %s480 = smul.addr %s479, 4
      %s481 = scalar_lea.vmem %s5, %s480
      %p482 = pneg %p205
      %p483 = pneg %p202
      %p484 = pneg %p226
      %p485 = pneg %p223
      %p486 = pneg %p247
      %p487 = pneg %p244
      %p488 = pneg %p268
      %p489 = pneg %p265
      %p490 = pneg %p296
      %p491 = pneg %p293
      %p492 = scmp.lt.s32.totalorder %s24, 1
      %s493 = scalar_select %p492, %s24, 1
      %p494 = scmp.lt.s32.totalorder %s25, 13
      %s495 = scalar_select %p494, %s25, 13
      %s496 = smul.addr %s495, 2
      %s497 = smul.addr %s493, 28
      %s498 = sadd.s32 %s496, %s497
      %s499 = smul.addr %s498, 4
      %s500 = scalar_lea.vmem %s9, %s499
      %s501 = sadd.s32 %s25, 2
      %p502 = scmp.lt.s32.totalorder %s24, 1
      %s503 = scalar_select %p502, %s24, 1
      %p504 = scmp.lt.s32.totalorder %s501, 19
      %s505 = scalar_select %p504, %s501, 19
      %s506 = smul.addr %s505, 3
      %s507 = smul.addr %s503, 60
      %s508 = sadd.s32 %s506, %s507
      %s509 = smul.addr %s508, 4
      %s510 = scalar_lea.vmem %s0, %s509
      %s511 = sadd.s32 %s25, 2
      %s512 = sadd.s32 %s25, 3
      %p513 = scmp.lt.s32.totalorder %s24, 1
      %s514 = scalar_select %p513, %s24, 1
      %p515 = scmp.lt.s32.totalorder %s512, 19
      %s516 = scalar_select %p515, %s512, 19
      %s517 = smul.addr %s516, 3
      %s518 = smul.addr %s514, 60
      %s519 = sadd.s32 %s517, %s518
      %s520 = smul.addr %s519, 4
      %s521 = scalar_lea.vmem %s1, %s520
      %s522 = sadd.s32 %s25, 3
      %s523 = sadd.s32 %s25, 4
      %p524 = scmp.lt.s32.totalorder %s24, 1
      %s525 = scalar_select %p524, %s24, 1
      %p526 = scmp.lt.s32.totalorder %s523, 19
      %s527 = scalar_select %p526, %s523, 19
      %s528 = smul.addr %s527, 3
      %s529 = smul.addr %s525, 60
      %s530 = sadd.s32 %s528, %s529
      %s531 = smul.addr %s530, 4
      %s532 = scalar_lea.vmem %s2, %s531
      %s533 = sadd.s32 %s25, 4
      %p534 = scmp.lt.s32.totalorder %s24, 1
      %s535 = scalar_select %p534, %s24, 1
      %p536 = scmp.lt.s32.totalorder %s25, 15
      %s537 = scalar_select %p536, %s25, 15
      %s538 = smul.addr %s537, 2
      %s539 = smul.addr %s535, 32
      %s540 = sadd.s32 %s538, %s539
      %s541 = smul.addr %s540, 4
      %s542 = scalar_lea.vmem %s3, %s541
      %s543 = sadd.s32 %s25, 1
      %p544 = scmp.lt.s32.totalorder %s24, 1
      %s545 = scalar_select %p544, %s24, 1
      %p546 = scmp.lt.s32.totalorder %s543, 15
      %s547 = scalar_select %p546, %s543, 15
      %s548 = smul.addr %s547, 2
      %s549 = smul.addr %s545, 32
      %s550 = sadd.s32 %s548, %s549
      %s551 = smul.addr %s550, 4
      %s552 = scalar_lea.vmem %s4, %s551
      %s553 = sadd.s32 %s25, 1
      %s554 = sadd.s32 %s25, 2
      %p555 = scmp.lt.s32.totalorder %s24, 1
      %s556 = scalar_select %p555, %s24, 1
      %p557 = scmp.lt.s32.totalorder %s554, 15
      %s558 = scalar_select %p557, %s554, 15
      %s559 = smul.addr %s558, 2
      %s560 = smul.addr %s556, 32
      %s561 = sadd.s32 %s559, %s560
      %s562 = smul.addr %s561, 4
      %s563 = scalar_lea.vmem %s5, %s562
      %s564 = sadd.s32 %s25, 2
      %p565 = scmp.lt.s32.totalorder %s24, 1
      %s566 = scalar_select %p565, %s24, 1
      %p567 = scmp.lt.s32.totalorder %s25, 13
      %s568 = scalar_select %p567, %s25, 13
      %s569 = smul.addr %s568, 2
      %s570 = smul.addr %s566, 28
      %s571 = sadd.s32 %s569, %s570
      %s572 = smul.addr %s571, 4
      %s573 = scalar_lea.vmem %s9, %s572
      %v575 = vld [vmem:[%s510] sm:$0xf]
      %v576 = vld [vmem:[%s510 + $0x4] sm:$0xf]
      %v577 = vld [vmem:[%s510 + $0x8] sm:$0x3]
      %v578 = vld [vmem:[%s6] sm:$0xf]
      %v579 = vld [vmem:[%s6 + $0x4] sm:$0xf]
      %v580 = vld [vmem:[%s6 + $0x8] sm:$0xf]
      %v581 = vld [vmem:[%s6 + $0xc] sm:$0xf]
      %v582 = vld [vmem:[%s6 + $0x10] sm:$0xf]
      %v583 = vld [vmem:[%s6 + $0x14] sm:$0xf]
      %v584 = vld [vmem:[%s6 + $0x18] sm:$0xf]
      %v585 = vld [vmem:[%s6 + $0x1c] sm:$0xf]
      %v586 = vld [vmem:[%s6 + $0x20] sm:$0xf]
      %v587 = vld [vmem:[%s6 + $0x24] sm:$0xf]
      %v588 = vld [vmem:[%s6 + $0x28] sm:$0xf]
      %v589 = vld [vmem:[%s6 + $0x2c] sm:$0xf]
      %v590 = vld [vmem:[%s6 + $0x30] sm:$0xf]
      %v591 = vld [vmem:[%s6 + $0x34] sm:$0xf]
      %v592 = vld [vmem:[%s6 + $0x38] sm:$0xf]
      %v593 = vld [vmem:[%s6 + $0x3c] sm:$0xf]
      %s594 = scalar_lea.vmem %s6, 64
      %v595 = vld [vmem:[%s594] sm:$0xf]
      %v596 = vld [vmem:[%s594 + $0x4] sm:$0xf]
      %v597 = vld [vmem:[%s594 + $0x8] sm:$0xf]
      %v598 = vld [vmem:[%s594 + $0xc] sm:$0xf]
      %v599 = vld [vmem:[%s594 + $0x10] sm:$0xf]
      %v600 = vld [vmem:[%s594 + $0x14] sm:$0xf]
      %v601 = vld [vmem:[%s594 + $0x18] sm:$0xf]
      %v602 = vld [vmem:[%s594 + $0x1c] sm:$0xf]
      %v603 = vld [vmem:[%s594 + $0x20] sm:$0xf]
      %v604 = vld [vmem:[%s594 + $0x24] sm:$0xf]
      %v605 = vld [vmem:[%s594 + $0x28] sm:$0xf]
      %v606 = vld [vmem:[%s594 + $0x2c] sm:$0xf]
      %v607 = vld [vmem:[%s594 + $0x30] sm:$0xf]
      %v608 = vld [vmem:[%s594 + $0x34] sm:$0xf]
      %v609 = vld [vmem:[%s594 + $0x38] sm:$0xf]
      %v610 = vld [vmem:[%s594 + $0x3c] sm:$0xf]
      %v614 = vunpack.c.l.b16 %v575
      %v615 = vunpack.c.l.b16 %v576
      %v616 = vunpack.c.l.b16 %v577
      %v617 = vpack.c.b16 %v615, %v614
      %v618 = vpack.c.b16 %v616, %v616
      %vm619 = vsmask.f32 6400
      %v621 = vshrl.u32 %v617, 16
      %v623 = vrot.slane %v621, 1
      %v624 = vshll.u32 %v617, 16
      %v626 = vrot.slane %v624, 2
      %v627 = vor.u32 %v623, %v626
      %v629 = vshll.u32 %v618, 16
      %v631 = vrot.slane %v629, 2
      %v632 = vsel %vm619, %v627, %v631
      %v650 = vunpack.c.l.b16 %v595
      %v651 = vunpack.c.l.b16 %v596
      %v652 = vunpack.c.l.b16 %v597
      %v653 = vunpack.c.l.b16 %v598
      %v654 = vunpack.c.l.b16 %v599
      %v655 = vunpack.c.l.b16 %v600
      %v656 = vunpack.c.l.b16 %v601
      %v657 = vunpack.c.l.b16 %v602
      %v658 = vunpack.c.l.b16 %v603
      %v659 = vunpack.c.l.b16 %v604
      %v660 = vunpack.c.l.b16 %v605
      %v661 = vunpack.c.l.b16 %v606
      %v662 = vunpack.c.l.b16 %v607
      %v663 = vunpack.c.l.b16 %v608
      %v664 = vunpack.c.l.b16 %v609
      %v665 = vunpack.c.l.b16 %v610
      %v666 = vpack.c.b16 %v651, %v650
      %v667 = vpack.c.b16 %v653, %v652
      %v668 = vpack.c.b16 %v655, %v654
      %v669 = vpack.c.b16 %v657, %v656
      %v670 = vpack.c.b16 %v659, %v658
      %v671 = vpack.c.b16 %v661, %v660
      %v672 = vpack.c.b16 %v663, %v662
      %v673 = vpack.c.b16 %v665, %v664
      %682 = vmatprep.subr.bf16.mxu0 0
      %683 = vmatpush1.bf16.msra.mxu0 %v666
      %684 = vmatprep.subr.bf16.mxu0 0
      %685 = vmatpush1.bf16.msra.mxu0 %v667
      %686 = vmatprep.subr.bf16.mxu0 0
      %687 = vmatpush1.bf16.msra.mxu0 %v668
      %688 = vmatprep.subr.bf16.mxu0 0
      %689 = vmatpush1.bf16.msra.mxu0 %v669
      %690 = vmatprep.subr.bf16.mxu0 0
      %691 = vmatpush1.bf16.msra.mxu0 %v670
      %692 = vmatprep.subr.bf16.mxu0 0
      %693 = vmatpush1.bf16.msra.mxu0 %v671
      %694 = vmatprep.subr.bf16.mxu0 0
      %695 = vmatpush1.bf16.msra.mxu0 %v672
      %696 = vmatprep.subr.bf16.mxu0 0
      %697 = vmatpush1.bf16.msra.mxu0 %v673
      %698 = vmatprep.subr.bf16.mxu0 0
      %699 = vmatpush1.bf16.msra.mxu0 0
      %700 = vmatprep.subr.bf16.mxu0 0
      %701 = vmatpush1.bf16.msra.mxu0 0
      %702 = vmatprep.subr.bf16.mxu0 0
      %703 = vmatpush1.bf16.msra.mxu0 0
      %704 = vmatprep.subr.bf16.mxu0 0
      %705 = vmatpush1.bf16.msra.mxu0 0
      %706 = vmatprep.subr.bf16.mxu0 0
      %707 = vmatpush1.bf16.msra.mxu0 0
      %708 = vmatprep.subr.bf16.mxu0 0
      %709 = vmatpush1.bf16.msra.mxu0 0
      %710 = vmatprep.subr.bf16.mxu0 0
      %711 = vmatpush1.bf16.msra.mxu0 0
      %712 = vmatprep.subr.bf16.mxu0 0
      %713 = vmatpush1.bf16.msra.mxu0 0
      %714 = vmatprep.mubr.bf16.mxu0 0
      %715 = vmatmul.mubr.bf16.gmra.mrb[0].mxu0 %v632
      %v716 = vpop.f32.mrb[0].mxu0
      %v717 = vadd.f32 0.0, %v716
      %v718 = vpop.f32.mrb[0].mxu0
      %v719 = vpop.f32.mrb[0].mxu0
      %v720 = vadd.f32 0.0, %v719
      %v721 = vpop.f32.mrb[0].mxu0
      %722 = vdwg.mxu0
      %v723 = vrot.slane %v617, 1
      %v741 = vunpack.c.l.b16 %v578
      %v742 = vunpack.c.l.b16 %v579
      %v743 = vunpack.c.l.b16 %v580
      %v744 = vunpack.c.l.b16 %v581
      %v745 = vunpack.c.l.b16 %v582
      %v746 = vunpack.c.l.b16 %v583
      %v747 = vunpack.c.l.b16 %v584
      %v748 = vunpack.c.l.b16 %v585
      %v749 = vunpack.c.l.b16 %v586
      %v750 = vunpack.c.l.b16 %v587
      %v751 = vunpack.c.l.b16 %v588
      %v752 = vunpack.c.l.b16 %v589
      %v753 = vunpack.c.l.b16 %v590
      %v754 = vunpack.c.l.b16 %v591
      %v755 = vunpack.c.l.b16 %v592
      %v756 = vunpack.c.l.b16 %v593
      %v757 = vpack.c.b16 %v742, %v741
      %v758 = vpack.c.b16 %v744, %v743
      %v759 = vpack.c.b16 %v746, %v745
      %v760 = vpack.c.b16 %v748, %v747
      %v761 = vpack.c.b16 %v750, %v749
      %v762 = vpack.c.b16 %v752, %v751
      %v763 = vpack.c.b16 %v754, %v753
      %v764 = vpack.c.b16 %v756, %v755
      %773 = vmatprep.subr.bf16.mxu0 0
      %774 = vmatpush1.bf16.msra.mxu0 %v757
      %775 = vmatprep.subr.bf16.mxu0 0
      %776 = vmatpush1.bf16.msra.mxu0 %v758
      %777 = vmatprep.subr.bf16.mxu0 0
      %778 = vmatpush1.bf16.msra.mxu0 %v759
      %779 = vmatprep.subr.bf16.mxu0 0
      %780 = vmatpush1.bf16.msra.mxu0 %v760
      %781 = vmatprep.subr.bf16.mxu0 0
      %782 = vmatpush1.bf16.msra.mxu0 %v761
      %783 = vmatprep.subr.bf16.mxu0 0
      %784 = vmatpush1.bf16.msra.mxu0 %v762
      %785 = vmatprep.subr.bf16.mxu0 0
      %786 = vmatpush1.bf16.msra.mxu0 %v763
      %787 = vmatprep.subr.bf16.mxu0 0
      %788 = vmatpush1.bf16.msra.mxu0 %v764
      %789 = vmatprep.subr.bf16.mxu0 0
      %790 = vmatpush1.bf16.msra.mxu0 0
      %791 = vmatprep.subr.bf16.mxu0 0
      %792 = vmatpush1.bf16.msra.mxu0 0
      %793 = vmatprep.subr.bf16.mxu0 0
      %794 = vmatpush1.bf16.msra.mxu0 0
      %795 = vmatprep.subr.bf16.mxu0 0
      %796 = vmatpush1.bf16.msra.mxu0 0
      %797 = vmatprep.subr.bf16.mxu0 0
      %798 = vmatpush1.bf16.msra.mxu0 0
      %799 = vmatprep.subr.bf16.mxu0 0
      %800 = vmatpush1.bf16.msra.mxu0 0
      %801 = vmatprep.subr.bf16.mxu0 0
      %802 = vmatpush1.bf16.msra.mxu0 0
      %803 = vmatprep.subr.bf16.mxu0 0
      %804 = vmatpush1.bf16.msra.mxu0 0
      %805 = vmatprep.mubr.bf16.mxu0 0
      %806 = vmatmul.mubr.bf16.gmra.mrb[0].mxu0 %v723
      %v807 = vpop.f32.mrb[0].mxu0
      %v808 = vadd.f32 %v717, %v807
      %v809 = vpop.f32.mrb[0].mxu0
      %v810 = vpop.f32.mrb[0].mxu0
      %v811 = vadd.f32 %v720, %v810
      %v812 = vpop.f32.mrb[0].mxu0
      %813 = vdwg.mxu0
      %s814 = scalar_lea.vmem %s6, 128
      %v815 = vld [vmem:[%s814] sm:$0xf]
      %v816 = vld [vmem:[%s814 + $0x4] sm:$0xf]
      %v817 = vld [vmem:[%s814 + $0x8] sm:$0xf]
      %v818 = vld [vmem:[%s814 + $0xc] sm:$0xf]
      %v819 = vld [vmem:[%s814 + $0x10] sm:$0xf]
      %v820 = vld [vmem:[%s814 + $0x14] sm:$0xf]
      %v821 = vld [vmem:[%s814 + $0x18] sm:$0xf]
      %v822 = vld [vmem:[%s814 + $0x1c] sm:$0xf]
      %v823 = vld [vmem:[%s814 + $0x20] sm:$0xf]
      %v824 = vld [vmem:[%s814 + $0x24] sm:$0xf]
      %v825 = vld [vmem:[%s814 + $0x28] sm:$0xf]
      %v826 = vld [vmem:[%s814 + $0x2c] sm:$0xf]
      %v827 = vld [vmem:[%s814 + $0x30] sm:$0xf]
      %v828 = vld [vmem:[%s814 + $0x34] sm:$0xf]
      %v829 = vld [vmem:[%s814 + $0x38] sm:$0xf]
      %v830 = vld [vmem:[%s814 + $0x3c] sm:$0xf]
      %vm831 = vcmask 1045504
      %v832 = vrot.slane %v617, 2
      %v833 = vrot.slane %v618, 2
      %v834 = vsel %vm831, %v832, %v833
      %v852 = vunpack.c.l.b16 %v815
      %v853 = vunpack.c.l.b16 %v816
      %v854 = vunpack.c.l.b16 %v817
      %v855 = vunpack.c.l.b16 %v818
      %v856 = vunpack.c.l.b16 %v819
      %v857 = vunpack.c.l.b16 %v820
      %v858 = vunpack.c.l.b16 %v821
      %v859 = vunpack.c.l.b16 %v822
      %v860 = vunpack.c.l.b16 %v823
      %v861 = vunpack.c.l.b16 %v824
      %v862 = vunpack.c.l.b16 %v825
      %v863 = vunpack.c.l.b16 %v826
      %v864 = vunpack.c.l.b16 %v827
      %v865 = vunpack.c.l.b16 %v828
      %v866 = vunpack.c.l.b16 %v829
      %v867 = vunpack.c.l.b16 %v830
      %v868 = vpack.c.b16 %v853, %v852
      %v869 = vpack.c.b16 %v855, %v854
      %v870 = vpack.c.b16 %v857, %v856
      %v871 = vpack.c.b16 %v859, %v858
      %v872 = vpack.c.b16 %v861, %v860
      %v873 = vpack.c.b16 %v863, %v862
      %v874 = vpack.c.b16 %v865, %v864
      %v875 = vpack.c.b16 %v867, %v866
      %884 = vmatprep.subr.bf16.mxu0 0
      %885 = vmatpush1.bf16.msra.mxu0 %v868
      %886 = vmatprep.subr.bf16.mxu0 0
      %887 = vmatpush1.bf16.msra.mxu0 %v869
      %888 = vmatprep.subr.bf16.mxu0 0
      %889 = vmatpush1.bf16.msra.mxu0 %v870
      %890 = vmatprep.subr.bf16.mxu0 0
      %891 = vmatpush1.bf16.msra.mxu0 %v871
      %892 = vmatprep.subr.bf16.mxu0 0
      %893 = vmatpush1.bf16.msra.mxu0 %v872
      %894 = vmatprep.subr.bf16.mxu0 0
      %895 = vmatpush1.bf16.msra.mxu0 %v873
      %896 = vmatprep.subr.bf16.mxu0 0
      %897 = vmatpush1.bf16.msra.mxu0 %v874
      %898 = vmatprep.subr.bf16.mxu0 0
      %899 = vmatpush1.bf16.msra.mxu0 %v875
      %900 = vmatprep.subr.bf16.mxu0 0
      %901 = vmatpush1.bf16.msra.mxu0 0
      %902 = vmatprep.subr.bf16.mxu0 0
      %903 = vmatpush1.bf16.msra.mxu0 0
      %904 = vmatprep.subr.bf16.mxu0 0
      %905 = vmatpush1.bf16.msra.mxu0 0
      %906 = vmatprep.subr.bf16.mxu0 0
      %907 = vmatpush1.bf16.msra.mxu0 0
      %908 = vmatprep.subr.bf16.mxu0 0
      %909 = vmatpush1.bf16.msra.mxu0 0
      %910 = vmatprep.subr.bf16.mxu0 0
      %911 = vmatpush1.bf16.msra.mxu0 0
      %912 = vmatprep.subr.bf16.mxu0 0
      %913 = vmatpush1.bf16.msra.mxu0 0
      %914 = vmatprep.subr.bf16.mxu0 0
      %915 = vmatpush1.bf16.msra.mxu0 0
      %916 = vmatprep.mubr.bf16.mxu0 0
      %917 = vmatmul.mubr.bf16.gmra.mrb[0].mxu0 %v834
      %v918 = vpop.f32.mrb[0].mxu0
      %v919 = vadd.f32 0.0, %v918
      %v920 = vpop.f32.mrb[0].mxu0
      %v921 = vpop.f32.mrb[0].mxu0
      %v922 = vadd.f32 0.0, %v921
      %v923 = vpop.f32.mrb[0].mxu0
      %924 = vdwg.mxu0
      %v925 = vadd.f32 %v808, %v919
      %v926 = vadd.f32 %v811, %v922
      %v927 = vld [vmem:[%s521] sm:$0xf]
      %v928 = vld [vmem:[%s521 + $0x4] sm:$0xf]
      %v929 = vld [vmem:[%s521 + $0x8] sm:$0x3]
      %s930 = scalar_lea.vmem %s6, 192
      %v931 = vld [vmem:[%s930] sm:$0xf]
      %v932 = vld [vmem:[%s930 + $0x4] sm:$0xf]
      %v933 = vld [vmem:[%s930 + $0x8] sm:$0xf]
      %v934 = vld [vmem:[%s930 + $0xc] sm:$0xf]
      %v935 = vld [vmem:[%s930 + $0x10] sm:$0xf]
      %v936 = vld [vmem:[%s930 + $0x14] sm:$0xf]
      %v937 = vld [vmem:[%s930 + $0x18] sm:$0xf]
      %v938 = vld [vmem:[%s930 + $0x1c] sm:$0xf]
      %v939 = vld [vmem:[%s930 + $0x20] sm:$0xf]
      %v940 = vld [vmem:[%s930 + $0x24] sm:$0xf]
      %v941 = vld [vmem:[%s930 + $0x28] sm:$0xf]
      %v942 = vld [vmem:[%s930 + $0x2c] sm:$0xf]
      %v943 = vld [vmem:[%s930 + $0x30] sm:$0xf]
      %v944 = vld [vmem:[%s930 + $0x34] sm:$0xf]
      %v945 = vld [vmem:[%s930 + $0x38] sm:$0xf]
      %v946 = vld [vmem:[%s930 + $0x3c] sm:$0xf]
      %v949 = vunpack.c.l.b16 %v927
      %v950 = vunpack.c.l.b16 %v928
      %v951 = vpack.c.b16 %v950, %v949
      %v952 = vrot.slane %v951, 1
      %v970 = vunpack.c.l.b16 %v931
      %v971 = vunpack.c.l.b16 %v932
      %v972 = vunpack.c.l.b16 %v933
      %v973 = vunpack.c.l.b16 %v934
      %v974 = vunpack.c.l.b16 %v935
      %v975 = vunpack.c.l.b16 %v936
      %v976 = vunpack.c.l.b16 %v937
      %v977 = vunpack.c.l.b16 %v938
      %v978 = vunpack.c.l.b16 %v939
      %v979 = vunpack.c.l.b16 %v940
      %v980 = vunpack.c.l.b16 %v941
      %v981 = vunpack.c.l.b16 %v942
      %v982 = vunpack.c.l.b16 %v943
      %v983 = vunpack.c.l.b16 %v944
      %v984 = vunpack.c.l.b16 %v945
      %v985 = vunpack.c.l.b16 %v946
      %v986 = vpack.c.b16 %v971, %v970
      %v987 = vpack.c.b16 %v973, %v972
      %v988 = vpack.c.b16 %v975, %v974
      %v989 = vpack.c.b16 %v977, %v976
      %v990 = vpack.c.b16 %v979, %v978
      %v991 = vpack.c.b16 %v981, %v980
      %v992 = vpack.c.b16 %v983, %v982
      %v993 = vpack.c.b16 %v985, %v984
      %1002 = vmatprep.subr.bf16.mxu0 0
      %1003 = vmatpush1.bf16.msra.mxu0 %v986
      %1004 = vmatprep.subr.bf16.mxu0 0
      %1005 = vmatpush1.bf16.msra.mxu0 %v987
      %1006 = vmatprep.subr.bf16.mxu0 0
      %1007 = vmatpush1.bf16.msra.mxu0 %v988
      %1008 = vmatprep.subr.bf16.mxu0 0
      %1009 = vmatpush1.bf16.msra.mxu0 %v989
      %1010 = vmatprep.subr.bf16.mxu0 0
      %1011 = vmatpush1.bf16.msra.mxu0 %v990
      %1012 = vmatprep.subr.bf16.mxu0 0
      %1013 = vmatpush1.bf16.msra.mxu0 %v991
      %1014 = vmatprep.subr.bf16.mxu0 0
      %1015 = vmatpush1.bf16.msra.mxu0 %v992
      %1016 = vmatprep.subr.bf16.mxu0 0
      %1017 = vmatpush1.bf16.msra.mxu0 %v993
      %1018 = vmatprep.subr.bf16.mxu0 0
      %1019 = vmatpush1.bf16.msra.mxu0 0
      %1020 = vmatprep.subr.bf16.mxu0 0
      %1021 = vmatpush1.bf16.msra.mxu0 0
      %1022 = vmatprep.subr.bf16.mxu0 0
      %1023 = vmatpush1.bf16.msra.mxu0 0
      %1024 = vmatprep.subr.bf16.mxu0 0
      %1025 = vmatpush1.bf16.msra.mxu0 0
      %1026 = vmatprep.subr.bf16.mxu0 0
      %1027 = vmatpush1.bf16.msra.mxu0 0
      %1028 = vmatprep.subr.bf16.mxu0 0
      %1029 = vmatpush1.bf16.msra.mxu0 0
      %1030 = vmatprep.subr.bf16.mxu0 0
      %1031 = vmatpush1.bf16.msra.mxu0 0
      %1032 = vmatprep.subr.bf16.mxu0 0
      %1033 = vmatpush1.bf16.msra.mxu0 0
      %1034 = vmatprep.mubr.bf16.mxu0 0
      %1035 = vmatmul.mubr.bf16.gmra.mrb[0].mxu0 %v952
      %v1036 = vpop.f32.mrb[0].mxu0
      %v1037 = vadd.f32 0.0, %v1036
      %v1038 = vpop.f32.mrb[0].mxu0
      %v1039 = vpop.f32.mrb[0].mxu0
      %v1040 = vadd.f32 0.0, %v1039
      %v1041 = vpop.f32.mrb[0].mxu0
      %1042 = vdwg.mxu0
      %v1043 = vadd.f32 %v925, %v1037
      %v1044 = vadd.f32 %v926, %v1040
      %s1045 = scalar_lea.vmem %s6, 256
      %v1046 = vld [vmem:[%s1045] sm:$0xf]
      %v1047 = vld [vmem:[%s1045 + $0x4] sm:$0xf]
      %v1048 = vld [vmem:[%s1045 + $0x8] sm:$0xf]
      %v1049 = vld [vmem:[%s1045 + $0xc] sm:$0xf]
      %v1050 = vld [vmem:[%s1045 + $0x10] sm:$0xf]
      %v1051 = vld [vmem:[%s1045 + $0x14] sm:$0xf]
      %v1052 = vld [vmem:[%s1045 + $0x18] sm:$0xf]
      %v1053 = vld [vmem:[%s1045 + $0x1c] sm:$0xf]
      %v1054 = vld [vmem:[%s1045 + $0x20] sm:$0xf]
      %v1055 = vld [vmem:[%s1045 + $0x24] sm:$0xf]
      %v1056 = vld [vmem:[%s1045 + $0x28] sm:$0xf]
      %v1057 = vld [vmem:[%s1045 + $0x2c] sm:$0xf]
      %v1058 = vld [vmem:[%s1045 + $0x30] sm:$0xf]
      %v1059 = vld [vmem:[%s1045 + $0x34] sm:$0xf]
      %v1060 = vld [vmem:[%s1045 + $0x38] sm:$0xf]
      %v1061 = vld [vmem:[%s1045 + $0x3c] sm:$0xf]
      %v1063 = vunpack.c.l.b16 %v929
      %v1064 = vpack.c.b16 %v1063, %v1063
      %v1066 = vshrl.u32 %v951, 16
      %v1068 = vrot.slane %v1066, 1
      %v1069 = vshll.u32 %v951, 16
      %v1071 = vrot.slane %v1069, 2
      %v1072 = vor.u32 %v1068, %v1071
      %v1074 = vshll.u32 %v1064, 16
      %v1076 = vrot.slane %v1074, 2
      %v1077 = vsel %vm619, %v1072, %v1076
      %v1095 = vunpack.c.l.b16 %v1046
      %v1096 = vunpack.c.l.b16 %v1047
      %v1097 = vunpack.c.l.b16 %v1048
      %v1098 = vunpack.c.l.b16 %v1049
      %v1099 = vunpack.c.l.b16 %v1050
      %v1100 = vunpack.c.l.b16 %v1051
      %v1101 = vunpack.c.l.b16 %v1052
      %v1102 = vunpack.c.l.b16 %v1053
      %v1103 = vunpack.c.l.b16 %v1054
      %v1104 = vunpack.c.l.b16 %v1055
      %v1105 = vunpack.c.l.b16 %v1056
      %v1106 = vunpack.c.l.b16 %v1057
      %v1107 = vunpack.c.l.b16 %v1058
      %v1108 = vunpack.c.l.b16 %v1059
      %v1109 = vunpack.c.l.b16 %v1060
      %v1110 = vunpack.c.l.b16 %v1061
      %v1111 = vpack.c.b16 %v1096, %v1095
      %v1112 = vpack.c.b16 %v1098, %v1097
      %v1113 = vpack.c.b16 %v1100, %v1099
      %v1114 = vpack.c.b16 %v1102, %v1101
      %v1115 = vpack.c.b16 %v1104, %v1103
      %v1116 = vpack.c.b16 %v1106, %v1105
      %v1117 = vpack.c.b16 %v1108, %v1107
      %v1118 = vpack.c.b16 %v1110, %v1109
      %1127 = vmatprep.subr.bf16.mxu0 0
      %1128 = vmatpush1.bf16.msra.mxu0 %v1111
      %1129 = vmatprep.subr.bf16.mxu0 0
      %1130 = vmatpush1.bf16.msra.mxu0 %v1112
      %1131 = vmatprep.subr.bf16.mxu0 0
      %1132 = vmatpush1.bf16.msra.mxu0 %v1113
      %1133 = vmatprep.subr.bf16.mxu0 0
      %1134 = vmatpush1.bf16.msra.mxu0 %v1114
      %1135 = vmatprep.subr.bf16.mxu0 0
      %1136 = vmatpush1.bf16.msra.mxu0 %v1115
      %1137 = vmatprep.subr.bf16.mxu0 0
      %1138 = vmatpush1.bf16.msra.mxu0 %v1116
      %1139 = vmatprep.subr.bf16.mxu0 0
      %1140 = vmatpush1.bf16.msra.mxu0 %v1117
      %1141 = vmatprep.subr.bf16.mxu0 0
      %1142 = vmatpush1.bf16.msra.mxu0 %v1118
      %1143 = vmatprep.subr.bf16.mxu0 0
      %1144 = vmatpush1.bf16.msra.mxu0 0
      %1145 = vmatprep.subr.bf16.mxu0 0
      %1146 = vmatpush1.bf16.msra.mxu0 0
      %1147 = vmatprep.subr.bf16.mxu0 0
      %1148 = vmatpush1.bf16.msra.mxu0 0
      %1149 = vmatprep.subr.bf16.mxu0 0
      %1150 = vmatpush1.bf16.msra.mxu0 0
      %1151 = vmatprep.subr.bf16.mxu0 0
      %1152 = vmatpush1.bf16.msra.mxu0 0
      %1153 = vmatprep.subr.bf16.mxu0 0
      %1154 = vmatpush1.bf16.msra.mxu0 0
      %1155 = vmatprep.subr.bf16.mxu0 0
      %1156 = vmatpush1.bf16.msra.mxu0 0
      %1157 = vmatprep.subr.bf16.mxu0 0
      %1158 = vmatpush1.bf16.msra.mxu0 0
      %1159 = vmatprep.mubr.bf16.mxu0 0
      %1160 = vmatmul.mubr.bf16.gmra.mrb[0].mxu0 %v1077
      %v1161 = vpop.f32.mrb[0].mxu0
      %v1162 = vadd.f32 0.0, %v1161
      %v1163 = vpop.f32.mrb[0].mxu0
      %v1164 = vpop.f32.mrb[0].mxu0
      %v1165 = vadd.f32 0.0, %v1164
      %v1166 = vpop.f32.mrb[0].mxu0
      %1167 = vdwg.mxu0
      %v1168 = vadd.f32 %v1043, %v1162
      %v1169 = vadd.f32 %v1044, %v1165
      %s1170 = scalar_lea.vmem %s6, 320
      %v1171 = vld [vmem:[%s1170] sm:$0xf]
      %v1172 = vld [vmem:[%s1170 + $0x4] sm:$0xf]
      %v1173 = vld [vmem:[%s1170 + $0x8] sm:$0xf]
      %v1174 = vld [vmem:[%s1170 + $0xc] sm:$0xf]
      %v1175 = vld [vmem:[%s1170 + $0x10] sm:$0xf]
      %v1176 = vld [vmem:[%s1170 + $0x14] sm:$0xf]
      %v1177 = vld [vmem:[%s1170 + $0x18] sm:$0xf]
      %v1178 = vld [vmem:[%s1170 + $0x1c] sm:$0xf]
      %v1179 = vld [vmem:[%s1170 + $0x20] sm:$0xf]
      %v1180 = vld [vmem:[%s1170 + $0x24] sm:$0xf]
      %v1181 = vld [vmem:[%s1170 + $0x28] sm:$0xf]
      %v1182 = vld [vmem:[%s1170 + $0x2c] sm:$0xf]
      %v1183 = vld [vmem:[%s1170 + $0x30] sm:$0xf]
      %v1184 = vld [vmem:[%s1170 + $0x34] sm:$0xf]
      %v1185 = vld [vmem:[%s1170 + $0x38] sm:$0xf]
      %v1186 = vld [vmem:[%s1170 + $0x3c] sm:$0xf]
      %v1187 = vrot.slane %v951, 2
      %v1188 = vrot.slane %v1064, 2
      %v1189 = vsel %vm831, %v1187, %v1188
      %v1207 = vunpack.c.l.b16 %v1171
      %v1208 = vunpack.c.l.b16 %v1172
      %v1209 = vunpack.c.l.b16 %v1173
      %v1210 = vunpack.c.l.b16 %v1174
      %v1211 = vunpack.c.l.b16 %v1175
      %v1212 = vunpack.c.l.b16 %v1176
      %v1213 = vunpack.c.l.b16 %v1177
      %v1214 = vunpack.c.l.b16 %v1178
      %v1215 = vunpack.c.l.b16 %v1179
      %v1216 = vunpack.c.l.b16 %v1180
      %v1217 = vunpack.c.l.b16 %v1181
      %v1218 = vunpack.c.l.b16 %v1182
      %v1219 = vunpack.c.l.b16 %v1183
      %v1220 = vunpack.c.l.b16 %v1184
      %v1221 = vunpack.c.l.b16 %v1185
      %v1222 = vunpack.c.l.b16 %v1186
      %v1223 = vpack.c.b16 %v1208, %v1207
      %v1224 = vpack.c.b16 %v1210, %v1209
      %v1225 = vpack.c.b16 %v1212, %v1211
      %v1226 = vpack.c.b16 %v1214, %v1213
      %v1227 = vpack.c.b16 %v1216, %v1215
      %v1228 = vpack.c.b16 %v1218, %v1217
      %v1229 = vpack.c.b16 %v1220, %v1219
      %v1230 = vpack.c.b16 %v1222, %v1221
      %1239 = vmatprep.subr.bf16.mxu0 0
      %1240 = vmatpush1.bf16.msra.mxu0 %v1223
      %1241 = vmatprep.subr.bf16.mxu0 0
      %1242 = vmatpush1.bf16.msra.mxu0 %v1224
      %1243 = vmatprep.subr.bf16.mxu0 0
      %1244 = vmatpush1.bf16.msra.mxu0 %v1225
      %1245 = vmatprep.subr.bf16.mxu0 0
      %1246 = vmatpush1.bf16.msra.mxu0 %v1226
      %1247 = vmatprep.subr.bf16.mxu0 0
      %1248 = vmatpush1.bf16.msra.mxu0 %v1227
      %1249 = vmatprep.subr.bf16.mxu0 0
      %1250 = vmatpush1.bf16.msra.mxu0 %v1228
      %1251 = vmatprep.subr.bf16.mxu0 0
      %1252 = vmatpush1.bf16.msra.mxu0 %v1229
      %1253 = vmatprep.subr.bf16.mxu0 0
      %1254 = vmatpush1.bf16.msra.mxu0 %v1230
      %1255 = vmatprep.subr.bf16.mxu0 0
      %1256 = vmatpush1.bf16.msra.mxu0 0
      %1257 = vmatprep.subr.bf16.mxu0 0
      %1258 = vmatpush1.bf16.msra.mxu0 0
      %1259 = vmatprep.subr.bf16.mxu0 0
      %1260 = vmatpush1.bf16.msra.mxu0 0
      %1261 = vmatprep.subr.bf16.mxu0 0
      %1262 = vmatpush1.bf16.msra.mxu0 0
      %1263 = vmatprep.subr.bf16.mxu0 0
      %1264 = vmatpush1.bf16.msra.mxu0 0
      %1265 = vmatprep.subr.bf16.mxu0 0
      %1266 = vmatpush1.bf16.msra.mxu0 0
      %1267 = vmatprep.subr.bf16.mxu0 0
      %1268 = vmatpush1.bf16.msra.mxu0 0
      %1269 = vmatprep.subr.bf16.mxu0 0
      %1270 = vmatpush1.bf16.msra.mxu0 0
      %1271 = vmatprep.mubr.bf16.mxu0 0
      %1272 = vmatmul.mubr.bf16.gmra.mrb[0].mxu0 %v1189
      %v1273 = vpop.f32.mrb[0].mxu0
      %v1274 = vadd.f32 0.0, %v1273
      %v1275 = vpop.f32.mrb[0].mxu0
      %v1276 = vpop.f32.mrb[0].mxu0
      %v1277 = vadd.f32 0.0, %v1276
      %v1278 = vpop.f32.mrb[0].mxu0
      %1279 = vdwg.mxu0
      %v1280 = vadd.f32 %v1168, %v1274
      %v1281 = vadd.f32 %v1169, %v1277
      %v1282 = vld [vmem:[%s532] sm:$0xf]
      %v1283 = vld [vmem:[%s532 + $0x4] sm:$0xf]
      %v1284 = vld [vmem:[%s532 + $0x8] sm:$0x3]
      %s1285 = scalar_lea.vmem %s6, 384
      %v1286 = vld [vmem:[%s1285] sm:$0xf]
      %v1287 = vld [vmem:[%s1285 + $0x4] sm:$0xf]
      %v1288 = vld [vmem:[%s1285 + $0x8] sm:$0xf]
      %v1289 = vld [vmem:[%s1285 + $0xc] sm:$0xf]
      %v1290 = vld [vmem:[%s1285 + $0x10] sm:$0xf]
      %v1291 = vld [vmem:[%s1285 + $0x14] sm:$0xf]
      %v1292 = vld [vmem:[%s1285 + $0x18] sm:$0xf]
      %v1293 = vld [vmem:[%s1285 + $0x1c] sm:$0xf]
      %v1294 = vld [vmem:[%s1285 + $0x20] sm:$0xf]
      %v1295 = vld [vmem:[%s1285 + $0x24] sm:$0xf]
      %v1296 = vld [vmem:[%s1285 + $0x28] sm:$0xf]
      %v1297 = vld [vmem:[%s1285 + $0x2c] sm:$0xf]
      %v1298 = vld [vmem:[%s1285 + $0x30] sm:$0xf]
      %v1299 = vld [vmem:[%s1285 + $0x34] sm:$0xf]
      %v1300 = vld [vmem:[%s1285 + $0x38] sm:$0xf]
      %v1301 = vld [vmem:[%s1285 + $0x3c] sm:$0xf]
      %v1304 = vunpack.c.l.b16 %v1282
      %v1305 = vunpack.c.l.b16 %v1283
      %v1306 = vpack.c.b16 %v1305, %v1304
      %v1307 = vrot.slane %v1306, 1
      %v1325 = vunpack.c.l.b16 %v1286
      %v1326 = vunpack.c.l.b16 %v1287
      %v1327 = vunpack.c.l.b16 %v1288
      %v1328 = vunpack.c.l.b16 %v1289
      %v1329 = vunpack.c.l.b16 %v1290
      %v1330 = vunpack.c.l.b16 %v1291
      %v1331 = vunpack.c.l.b16 %v1292
      %v1332 = vunpack.c.l.b16 %v1293
      %v1333 = vunpack.c.l.b16 %v1294
      %v1334 = vunpack.c.l.b16 %v1295
      %v1335 = vunpack.c.l.b16 %v1296
      %v1336 = vunpack.c.l.b16 %v1297
      %v1337 = vunpack.c.l.b16 %v1298
      %v1338 = vunpack.c.l.b16 %v1299
      %v1339 = vunpack.c.l.b16 %v1300
      %v1340 = vunpack.c.l.b16 %v1301
      %v1341 = vpack.c.b16 %v1326, %v1325
      %v1342 = vpack.c.b16 %v1328, %v1327
      %v1343 = vpack.c.b16 %v1330, %v1329
      %v1344 = vpack.c.b16 %v1332, %v1331
      %v1345 = vpack.c.b16 %v1334, %v1333
      %v1346 = vpack.c.b16 %v1336, %v1335
      %v1347 = vpack.c.b16 %v1338, %v1337
      %v1348 = vpack.c.b16 %v1340, %v1339
      %1357 = vmatprep.subr.bf16.mxu0 0
      %1358 = vmatpush1.bf16.msra.mxu0 %v1341
      %1359 = vmatprep.subr.bf16.mxu0 0
      %1360 = vmatpush1.bf16.msra.mxu0 %v1342
      %1361 = vmatprep.subr.bf16.mxu0 0
      %1362 = vmatpush1.bf16.msra.mxu0 %v1343
      %1363 = vmatprep.subr.bf16.mxu0 0
      %1364 = vmatpush1.bf16.msra.mxu0 %v1344
      %1365 = vmatprep.subr.bf16.mxu0 0
      %1366 = vmatpush1.bf16.msra.mxu0 %v1345
      %1367 = vmatprep.subr.bf16.mxu0 0
      %1368 = vmatpush1.bf16.msra.mxu0 %v1346
      %1369 = vmatprep.subr.bf16.mxu0 0
      %1370 = vmatpush1.bf16.msra.mxu0 %v1347
      %1371 = vmatprep.subr.bf16.mxu0 0
      %1372 = vmatpush1.bf16.msra.mxu0 %v1348
      %1373 = vmatprep.subr.bf16.mxu0 0
      %1374 = vmatpush1.bf16.msra.mxu0 0
      %1375 = vmatprep.subr.bf16.mxu0 0
      %1376 = vmatpush1.bf16.msra.mxu0 0
      %1377 = vmatprep.subr.bf16.mxu0 0
      %1378 = vmatpush1.bf16.msra.mxu0 0
      %1379 = vmatprep.subr.bf16.mxu0 0
      %1380 = vmatpush1.bf16.msra.mxu0 0
      %1381 = vmatprep.subr.bf16.mxu0 0
      %1382 = vmatpush1.bf16.msra.mxu0 0
      %1383 = vmatprep.subr.bf16.mxu0 0
      %1384 = vmatpush1.bf16.msra.mxu0 0
      %1385 = vmatprep.subr.bf16.mxu0 0
      %1386 = vmatpush1.bf16.msra.mxu0 0
      %1387 = vmatprep.subr.bf16.mxu0 0
      %1388 = vmatpush1.bf16.msra.mxu0 0
      %1389 = vmatprep.mubr.bf16.mxu0 0
      %1390 = vmatmul.mubr.bf16.gmra.mrb[0].mxu0 %v1307
      %v1391 = vpop.f32.mrb[0].mxu0
      %v1392 = vadd.f32 0.0, %v1391
      %v1393 = vpop.f32.mrb[0].mxu0
      %v1394 = vpop.f32.mrb[0].mxu0
      %v1395 = vadd.f32 0.0, %v1394
      %v1396 = vpop.f32.mrb[0].mxu0
      %1397 = vdwg.mxu0
      %v1398 = vadd.f32 %v1280, %v1392
      %v1399 = vadd.f32 %v1281, %v1395
      %s1400 = scalar_lea.vmem %s6, 448
      %v1401 = vld [vmem:[%s1400] sm:$0xf]
      %v1402 = vld [vmem:[%s1400 + $0x4] sm:$0xf]
      %v1403 = vld [vmem:[%s1400 + $0x8] sm:$0xf]
      %v1404 = vld [vmem:[%s1400 + $0xc] sm:$0xf]
      %v1405 = vld [vmem:[%s1400 + $0x10] sm:$0xf]
      %v1406 = vld [vmem:[%s1400 + $0x14] sm:$0xf]
      %v1407 = vld [vmem:[%s1400 + $0x18] sm:$0xf]
      %v1408 = vld [vmem:[%s1400 + $0x1c] sm:$0xf]
      %v1409 = vld [vmem:[%s1400 + $0x20] sm:$0xf]
      %v1410 = vld [vmem:[%s1400 + $0x24] sm:$0xf]
      %v1411 = vld [vmem:[%s1400 + $0x28] sm:$0xf]
      %v1412 = vld [vmem:[%s1400 + $0x2c] sm:$0xf]
      %v1413 = vld [vmem:[%s1400 + $0x30] sm:$0xf]
      %v1414 = vld [vmem:[%s1400 + $0x34] sm:$0xf]
      %v1415 = vld [vmem:[%s1400 + $0x38] sm:$0xf]
      %v1416 = vld [vmem:[%s1400 + $0x3c] sm:$0xf]
      %v1418 = vunpack.c.l.b16 %v1284
      %v1419 = vpack.c.b16 %v1418, %v1418
      %v1421 = vshrl.u32 %v1306, 16
      %v1423 = vrot.slane %v1421, 1
      %v1424 = vshll.u32 %v1306, 16
      %v1426 = vrot.slane %v1424, 2
      %v1427 = vor.u32 %v1423, %v1426
      %v1429 = vshll.u32 %v1419, 16
      %v1431 = vrot.slane %v1429, 2
      %v1432 = vsel %vm619, %v1427, %v1431
      %v1450 = vunpack.c.l.b16 %v1401
      %v1451 = vunpack.c.l.b16 %v1402
      %v1452 = vunpack.c.l.b16 %v1403
      %v1453 = vunpack.c.l.b16 %v1404
      %v1454 = vunpack.c.l.b16 %v1405
      %v1455 = vunpack.c.l.b16 %v1406
      %v1456 = vunpack.c.l.b16 %v1407
      %v1457 = vunpack.c.l.b16 %v1408
      %v1458 = vunpack.c.l.b16 %v1409
      %v1459 = vunpack.c.l.b16 %v1410
      %v1460 = vunpack.c.l.b16 %v1411
      %v1461 = vunpack.c.l.b16 %v1412
      %v1462 = vunpack.c.l.b16 %v1413
      %v1463 = vunpack.c.l.b16 %v1414
      %v1464 = vunpack.c.l.b16 %v1415
      %v1465 = vunpack.c.l.b16 %v1416
      %v1466 = vpack.c.b16 %v1451, %v1450
      %v1467 = vpack.c.b16 %v1453, %v1452
      %v1468 = vpack.c.b16 %v1455, %v1454
      %v1469 = vpack.c.b16 %v1457, %v1456
      %v1470 = vpack.c.b16 %v1459, %v1458
      %v1471 = vpack.c.b16 %v1461, %v1460
      %v1472 = vpack.c.b16 %v1463, %v1462
      %v1473 = vpack.c.b16 %v1465, %v1464
      %1482 = vmatprep.subr.bf16.mxu0 0
      %1483 = vmatpush1.bf16.msra.mxu0 %v1466
      %1484 = vmatprep.subr.bf16.mxu0 0
      %1485 = vmatpush1.bf16.msra.mxu0 %v1467
      %1486 = vmatprep.subr.bf16.mxu0 0
      %1487 = vmatpush1.bf16.msra.mxu0 %v1468
      %1488 = vmatprep.subr.bf16.mxu0 0
      %1489 = vmatpush1.bf16.msra.mxu0 %v1469
      %1490 = vmatprep.subr.bf16.mxu0 0
      %1491 = vmatpush1.bf16.msra.mxu0 %v1470
      %1492 = vmatprep.subr.bf16.mxu0 0
      %1493 = vmatpush1.bf16.msra.mxu0 %v1471
      %1494 = vmatprep.subr.bf16.mxu0 0
      %1495 = vmatpush1.bf16.msra.mxu0 %v1472
      %1496 = vmatprep.subr.bf16.mxu0 0
      %1497 = vmatpush1.bf16.msra.mxu0 %v1473
      %1498 = vmatprep.subr.bf16.mxu0 0
      %1499 = vmatpush1.bf16.msra.mxu0 0
      %1500 = vmatprep.subr.bf16.mxu0 0
      %1501 = vmatpush1.bf16.msra.mxu0 0
      %1502 = vmatprep.subr.bf16.mxu0 0
      %1503 = vmatpush1.bf16.msra.mxu0 0
      %1504 = vmatprep.subr.bf16.mxu0 0
      %1505 = vmatpush1.bf16.msra.mxu0 0
      %1506 = vmatprep.subr.bf16.mxu0 0
      %1507 = vmatpush1.bf16.msra.mxu0 0
      %1508 = vmatprep.subr.bf16.mxu0 0
      %1509 = vmatpush1.bf16.msra.mxu0 0
      %1510 = vmatprep.subr.bf16.mxu0 0
      %1511 = vmatpush1.bf16.msra.mxu0 0
      %1512 = vmatprep.subr.bf16.mxu0 0
      %1513 = vmatpush1.bf16.msra.mxu0 0
      %1514 = vmatprep.mubr.bf16.mxu0 0
      %1515 = vmatmul.mubr.bf16.gmra.mrb[0].mxu0 %v1432
      %v1516 = vpop.f32.mrb[0].mxu0
      %v1517 = vadd.f32 0.0, %v1516
      %v1518 = vpop.f32.mrb[0].mxu0
      %v1519 = vpop.f32.mrb[0].mxu0
      %v1520 = vadd.f32 0.0, %v1519
      %v1521 = vpop.f32.mrb[0].mxu0
      %1522 = vdwg.mxu0
      %v1523 = vadd.f32 %v1398, %v1517
      %v1524 = vadd.f32 %v1399, %v1520
      %s1525 = scalar_lea.vmem %s6, 512
      %v1526 = vld [vmem:[%s1525] sm:$0xf]
      %v1527 = vld [vmem:[%s1525 + $0x4] sm:$0xf]
      %v1528 = vld [vmem:[%s1525 + $0x8] sm:$0xf]
      %v1529 = vld [vmem:[%s1525 + $0xc] sm:$0xf]
      %v1530 = vld [vmem:[%s1525 + $0x10] sm:$0xf]
      %v1531 = vld [vmem:[%s1525 + $0x14] sm:$0xf]
      %v1532 = vld [vmem:[%s1525 + $0x18] sm:$0xf]
      %v1533 = vld [vmem:[%s1525 + $0x1c] sm:$0xf]
      %v1534 = vld [vmem:[%s1525 + $0x20] sm:$0xf]
      %v1535 = vld [vmem:[%s1525 + $0x24] sm:$0xf]
      %v1536 = vld [vmem:[%s1525 + $0x28] sm:$0xf]
      %v1537 = vld [vmem:[%s1525 + $0x2c] sm:$0xf]
      %v1538 = vld [vmem:[%s1525 + $0x30] sm:$0xf]
      %v1539 = vld [vmem:[%s1525 + $0x34] sm:$0xf]
      %v1540 = vld [vmem:[%s1525 + $0x38] sm:$0xf]
      %v1541 = vld [vmem:[%s1525 + $0x3c] sm:$0xf]
      %v1542 = vrot.slane %v1306, 2
      %v1543 = vrot.slane %v1419, 2
      %v1544 = vsel %vm831, %v1542, %v1543
      %v1562 = vunpack.c.l.b16 %v1526
      %v1563 = vunpack.c.l.b16 %v1527
      %v1564 = vunpack.c.l.b16 %v1528
      %v1565 = vunpack.c.l.b16 %v1529
      %v1566 = vunpack.c.l.b16 %v1530
      %v1567 = vunpack.c.l.b16 %v1531
      %v1568 = vunpack.c.l.b16 %v1532
      %v1569 = vunpack.c.l.b16 %v1533
      %v1570 = vunpack.c.l.b16 %v1534
      %v1571 = vunpack.c.l.b16 %v1535
      %v1572 = vunpack.c.l.b16 %v1536
      %v1573 = vunpack.c.l.b16 %v1537
      %v1574 = vunpack.c.l.b16 %v1538
      %v1575 = vunpack.c.l.b16 %v1539
      %v1576 = vunpack.c.l.b16 %v1540
      %v1577 = vunpack.c.l.b16 %v1541
      %v1578 = vpack.c.b16 %v1563, %v1562
      %v1579 = vpack.c.b16 %v1565, %v1564
      %v1580 = vpack.c.b16 %v1567, %v1566
      %v1581 = vpack.c.b16 %v1569, %v1568
      %v1582 = vpack.c.b16 %v1571, %v1570
      %v1583 = vpack.c.b16 %v1573, %v1572
      %v1584 = vpack.c.b16 %v1575, %v1574
      %v1585 = vpack.c.b16 %v1577, %v1576
      %1594 = vmatprep.subr.bf16.mxu0 0
      %1595 = vmatpush1.bf16.msra.mxu0 %v1578
      %1596 = vmatprep.subr.bf16.mxu0 0
      %1597 = vmatpush1.bf16.msra.mxu0 %v1579
      %1598 = vmatprep.subr.bf16.mxu0 0
      %1599 = vmatpush1.bf16.msra.mxu0 %v1580
      %1600 = vmatprep.subr.bf16.mxu0 0
      %1601 = vmatpush1.bf16.msra.mxu0 %v1581
      %1602 = vmatprep.subr.bf16.mxu0 0
      %1603 = vmatpush1.bf16.msra.mxu0 %v1582
      %1604 = vmatprep.subr.bf16.mxu0 0
      %1605 = vmatpush1.bf16.msra.mxu0 %v1583
      %1606 = vmatprep.subr.bf16.mxu0 0
      %1607 = vmatpush1.bf16.msra.mxu0 %v1584
      %1608 = vmatprep.subr.bf16.mxu0 0
      %1609 = vmatpush1.bf16.msra.mxu0 %v1585
      %1610 = vmatprep.subr.bf16.mxu0 0
      %1611 = vmatpush1.bf16.msra.mxu0 0
      %1612 = vmatprep.subr.bf16.mxu0 0
      %1613 = vmatpush1.bf16.msra.mxu0 0
      %1614 = vmatprep.subr.bf16.mxu0 0
      %1615 = vmatpush1.bf16.msra.mxu0 0
      %1616 = vmatprep.subr.bf16.mxu0 0
      %1617 = vmatpush1.bf16.msra.mxu0 0
      %1618 = vmatprep.subr.bf16.mxu0 0
      %1619 = vmatpush1.bf16.msra.mxu0 0
      %1620 = vmatprep.subr.bf16.mxu0 0
      %1621 = vmatpush1.bf16.msra.mxu0 0
      %1622 = vmatprep.subr.bf16.mxu0 0
      %1623 = vmatpush1.bf16.msra.mxu0 0
      %1624 = vmatprep.subr.bf16.mxu0 0
      %1625 = vmatpush1.bf16.msra.mxu0 0
      %1626 = vmatprep.mubr.bf16.mxu0 0
      %1627 = vmatmul.mubr.bf16.gmra.mrb[0].mxu0 %v1544
      %v1628 = vpop.f32.mrb[0].mxu0
      %v1629 = vadd.f32 0.0, %v1628
      %v1630 = vpop.f32.mrb[0].mxu0
      %v1631 = vpop.f32.mrb[0].mxu0
      %v1632 = vadd.f32 0.0, %v1631
      %v1633 = vpop.f32.mrb[0].mxu0
      %1634 = vdwg.mxu0
      %v1635 = vadd.f32 %v1523, %v1629
      %v1636 = vadd.f32 %v1524, %v1632
      %v1637 = vld [vmem:[%s542] sm:$0xf]
      %v1638 = vld [vmem:[%s542 + $0x4] sm:$0xf]
      %v1639 = vld [vmem:[%s7] sm:$0xf]
      %v1640 = vld [vmem:[%s7 + $0x4] sm:$0xf]
      %v1641 = vld [vmem:[%s7 + $0x8] sm:$0xf]
      %v1642 = vld [vmem:[%s7 + $0xc] sm:$0xf]
      %v1643 = vld [vmem:[%s7 + $0x10] sm:$0xf]
      %v1644 = vld [vmem:[%s7 + $0x14] sm:$0xf]
      %v1645 = vld [vmem:[%s7 + $0x18] sm:$0xf]
      %v1646 = vld [vmem:[%s7 + $0x1c] sm:$0xf]
      %v1647 = vld [vmem:[%s7 + $0x20] sm:$0xf]
      %v1648 = vld [vmem:[%s7 + $0x24] sm:$0xf]
      %v1649 = vld [vmem:[%s7 + $0x28] sm:$0xf]
      %v1650 = vld [vmem:[%s7 + $0x2c] sm:$0xf]
      %v1651 = vld [vmem:[%s7 + $0x30] sm:$0xf]
      %v1652 = vld [vmem:[%s7 + $0x34] sm:$0xf]
      %v1653 = vld [vmem:[%s7 + $0x38] sm:$0xf]
      %v1654 = vld [vmem:[%s7 + $0x3c] sm:$0xf]
      %v1657 = vunpack.c.l.b16 %v1637
      %v1658 = vunpack.c.l.b16 %v1638
      %v1659 = vpack.c.b16 %v1658, %v1657
      %v1677 = vunpack.c.l.b16 %v1639
      %v1678 = vunpack.c.l.b16 %v1640
      %v1679 = vunpack.c.l.b16 %v1641
      %v1680 = vunpack.c.l.b16 %v1642
      %v1681 = vunpack.c.l.b16 %v1643
      %v1682 = vunpack.c.l.b16 %v1644
      %v1683 = vunpack.c.l.b16 %v1645
      %v1684 = vunpack.c.l.b16 %v1646
      %v1685 = vunpack.c.l.b16 %v1647
      %v1686 = vunpack.c.l.b16 %v1648
      %v1687 = vunpack.c.l.b16 %v1649
      %v1688 = vunpack.c.l.b16 %v1650
      %v1689 = vunpack.c.l.b16 %v1651
      %v1690 = vunpack.c.l.b16 %v1652
      %v1691 = vunpack.c.l.b16 %v1653
      %v1692 = vunpack.c.l.b16 %v1654
      %v1693 = vpack.c.b16 %v1678, %v1677
      %v1694 = vpack.c.b16 %v1680, %v1679
      %v1695 = vpack.c.b16 %v1682, %v1681
      %v1696 = vpack.c.b16 %v1684, %v1683
      %v1697 = vpack.c.b16 %v1686, %v1685
      %v1698 = vpack.c.b16 %v1688, %v1687
      %v1699 = vpack.c.b16 %v1690, %v1689
      %v1700 = vpack.c.b16 %v1692, %v1691
      %1709 = vmatprep.subr.bf16.mxu0 0
      %1710 = vmatpush1.bf16.msra.mxu0 %v1693
      %1711 = vmatprep.subr.bf16.mxu0 0
      %1712 = vmatpush1.bf16.msra.mxu0 %v1694
      %1713 = vmatprep.subr.bf16.mxu0 0
      %1714 = vmatpush1.bf16.msra.mxu0 %v1695
      %1715 = vmatprep.subr.bf16.mxu0 0
      %1716 = vmatpush1.bf16.msra.mxu0 %v1696
      %1717 = vmatprep.subr.bf16.mxu0 0
      %1718 = vmatpush1.bf16.msra.mxu0 %v1697
      %1719 = vmatprep.subr.bf16.mxu0 0
      %1720 = vmatpush1.bf16.msra.mxu0 %v1698
      %1721 = vmatprep.subr.bf16.mxu0 0
      %1722 = vmatpush1.bf16.msra.mxu0 %v1699
      %1723 = vmatprep.subr.bf16.mxu0 0
      %1724 = vmatpush1.bf16.msra.mxu0 %v1700
      %1725 = vmatprep.subr.bf16.mxu0 0
      %1726 = vmatpush1.bf16.msra.mxu0 0
      %1727 = vmatprep.subr.bf16.mxu0 0
      %1728 = vmatpush1.bf16.msra.mxu0 0
      %1729 = vmatprep.subr.bf16.mxu0 0
      %1730 = vmatpush1.bf16.msra.mxu0 0
      %1731 = vmatprep.subr.bf16.mxu0 0
      %1732 = vmatpush1.bf16.msra.mxu0 0
      %1733 = vmatprep.subr.bf16.mxu0 0
      %1734 = vmatpush1.bf16.msra.mxu0 0
      %1735 = vmatprep.subr.bf16.mxu0 0
      %1736 = vmatpush1.bf16.msra.mxu0 0
      %1737 = vmatprep.subr.bf16.mxu0 0
      %1738 = vmatpush1.bf16.msra.mxu0 0
      %1739 = vmatprep.subr.bf16.mxu0 0
      %1740 = vmatpush1.bf16.msra.mxu0 0
      %1741 = vmatprep.mubr.bf16.mxu0 0
      %1742 = vmatmul.mubr.bf16.gmra.mrb[0].mxu0 %v1659
      %v1743 = vpop.f32.mrb[0].mxu0
      %v1744 = vadd.f32 0.0, %v1743
      %v1745 = vpop.f32.mrb[0].mxu0
      %v1746 = vpop.f32.mrb[0].mxu0
      %v1747 = vadd.f32 0.0, %v1746
      %v1748 = vpop.f32.mrb[0].mxu0
      %1749 = vdwg.mxu0
      %v1750 = vadd.f32 %v1635, %v1744
      %v1751 = vadd.f32 %v1636, %v1747
      %s1752 = scalar_lea.vmem %s7, 64
      %v1753 = vld [vmem:[%s1752] sm:$0xf]
      %v1754 = vld [vmem:[%s1752 + $0x4] sm:$0xf]
      %v1755 = vld [vmem:[%s1752 + $0x8] sm:$0xf]
      %v1756 = vld [vmem:[%s1752 + $0xc] sm:$0xf]
      %v1757 = vld [vmem:[%s1752 + $0x10] sm:$0xf]
      %v1758 = vld [vmem:[%s1752 + $0x14] sm:$0xf]
      %v1759 = vld [vmem:[%s1752 + $0x18] sm:$0xf]
      %v1760 = vld [vmem:[%s1752 + $0x1c] sm:$0xf]
      %v1761 = vld [vmem:[%s1752 + $0x20] sm:$0xf]
      %v1762 = vld [vmem:[%s1752 + $0x24] sm:$0xf]
      %v1763 = vld [vmem:[%s1752 + $0x28] sm:$0xf]
      %v1764 = vld [vmem:[%s1752 + $0x2c] sm:$0xf]
      %v1765 = vld [vmem:[%s1752 + $0x30] sm:$0xf]
      %v1766 = vld [vmem:[%s1752 + $0x34] sm:$0xf]
      %v1767 = vld [vmem:[%s1752 + $0x38] sm:$0xf]
      %v1768 = vld [vmem:[%s1752 + $0x3c] sm:$0xf]
      %v1770 = vshrl.u32 %v1659, 16
      %v1772 = vshll.u32 %v1659, 16
      %v1774 = vrot.slane %v1772, 1
      %v1775 = vor.u32 %v1770, %v1774
      %v1793 = vunpack.c.l.b16 %v1753
      %v1794 = vunpack.c.l.b16 %v1754
      %v1795 = vunpack.c.l.b16 %v1755
      %v1796 = vunpack.c.l.b16 %v1756
      %v1797 = vunpack.c.l.b16 %v1757
      %v1798 = vunpack.c.l.b16 %v1758
      %v1799 = vunpack.c.l.b16 %v1759
      %v1800 = vunpack.c.l.b16 %v1760
      %v1801 = vunpack.c.l.b16 %v1761
      %v1802 = vunpack.c.l.b16 %v1762
      %v1803 = vunpack.c.l.b16 %v1763
      %v1804 = vunpack.c.l.b16 %v1764
      %v1805 = vunpack.c.l.b16 %v1765
      %v1806 = vunpack.c.l.b16 %v1766
      %v1807 = vunpack.c.l.b16 %v1767
      %v1808 = vunpack.c.l.b16 %v1768
      %v1809 = vpack.c.b16 %v1794, %v1793
      %v1810 = vpack.c.b16 %v1796, %v1795
      %v1811 = vpack.c.b16 %v1798, %v1797
      %v1812 = vpack.c.b16 %v1800, %v1799
      %v1813 = vpack.c.b16 %v1802, %v1801
      %v1814 = vpack.c.b16 %v1804, %v1803
      %v1815 = vpack.c.b16 %v1806, %v1805
      %v1816 = vpack.c.b16 %v1808, %v1807
      %1825 = vmatprep.subr.bf16.mxu0 0
      %1826 = vmatpush1.bf16.msra.mxu0 %v1809
      %1827 = vmatprep.subr.bf16.mxu0 0
      %1828 = vmatpush1.bf16.msra.mxu0 %v1810
      %1829 = vmatprep.subr.bf16.mxu0 0
      %1830 = vmatpush1.bf16.msra.mxu0 %v1811
      %1831 = vmatprep.subr.bf16.mxu0 0
      %1832 = vmatpush1.bf16.msra.mxu0 %v1812
      %1833 = vmatprep.subr.bf16.mxu0 0
      %1834 = vmatpush1.bf16.msra.mxu0 %v1813
      %1835 = vmatprep.subr.bf16.mxu0 0
      %1836 = vmatpush1.bf16.msra.mxu0 %v1814
      %1837 = vmatprep.subr.bf16.mxu0 0
      %1838 = vmatpush1.bf16.msra.mxu0 %v1815
      %1839 = vmatprep.subr.bf16.mxu0 0
      %1840 = vmatpush1.bf16.msra.mxu0 %v1816
      %1841 = vmatprep.subr.bf16.mxu0 0
      %1842 = vmatpush1.bf16.msra.mxu0 0
      %1843 = vmatprep.subr.bf16.mxu0 0
      %1844 = vmatpush1.bf16.msra.mxu0 0
      %1845 = vmatprep.subr.bf16.mxu0 0
      %1846 = vmatpush1.bf16.msra.mxu0 0
      %1847 = vmatprep.subr.bf16.mxu0 0
      %1848 = vmatpush1.bf16.msra.mxu0 0
      %1849 = vmatprep.subr.bf16.mxu0 0
      %1850 = vmatpush1.bf16.msra.mxu0 0
      %1851 = vmatprep.subr.bf16.mxu0 0
      %1852 = vmatpush1.bf16.msra.mxu0 0
      %1853 = vmatprep.subr.bf16.mxu0 0
      %1854 = vmatpush1.bf16.msra.mxu0 0
      %1855 = vmatprep.subr.bf16.mxu0 0
      %1856 = vmatpush1.bf16.msra.mxu0 0
      %1857 = vmatprep.mubr.bf16.mxu0 0
      %1858 = vmatmul.mubr.bf16.gmra.mrb[0].mxu0 %v1775
      %v1859 = vpop.f32.mrb[0].mxu0
      %v1860 = vadd.f32 0.0, %v1859
      %v1861 = vpop.f32.mrb[0].mxu0
      %v1862 = vpop.f32.mrb[0].mxu0
      %v1863 = vadd.f32 0.0, %v1862
      %v1864 = vpop.f32.mrb[0].mxu0
      %1865 = vdwg.mxu0
      %v1866 = vadd.f32 %v1750, %v1860
      %v1867 = vadd.f32 %v1751, %v1863
      %s1868 = scalar_lea.vmem %s7, 128
      %v1869 = vld [vmem:[%s1868] sm:$0xf]
      %v1870 = vld [vmem:[%s1868 + $0x4] sm:$0xf]
      %v1871 = vld [vmem:[%s1868 + $0x8] sm:$0xf]
      %v1872 = vld [vmem:[%s1868 + $0xc] sm:$0xf]
      %v1873 = vld [vmem:[%s1868 + $0x10] sm:$0xf]
      %v1874 = vld [vmem:[%s1868 + $0x14] sm:$0xf]
      %v1875 = vld [vmem:[%s1868 + $0x18] sm:$0xf]
      %v1876 = vld [vmem:[%s1868 + $0x1c] sm:$0xf]
      %v1877 = vld [vmem:[%s1868 + $0x20] sm:$0xf]
      %v1878 = vld [vmem:[%s1868 + $0x24] sm:$0xf]
      %v1879 = vld [vmem:[%s1868 + $0x28] sm:$0xf]
      %v1880 = vld [vmem:[%s1868 + $0x2c] sm:$0xf]
      %v1881 = vld [vmem:[%s1868 + $0x30] sm:$0xf]
      %v1882 = vld [vmem:[%s1868 + $0x34] sm:$0xf]
      %v1883 = vld [vmem:[%s1868 + $0x38] sm:$0xf]
      %v1884 = vld [vmem:[%s1868 + $0x3c] sm:$0xf]
      %v1885 = vrot.slane %v1659, 1
      %v1903 = vunpack.c.l.b16 %v1869
      %v1904 = vunpack.c.l.b16 %v1870
      %v1905 = vunpack.c.l.b16 %v1871
      %v1906 = vunpack.c.l.b16 %v1872
      %v1907 = vunpack.c.l.b16 %v1873
      %v1908 = vunpack.c.l.b16 %v1874
      %v1909 = vunpack.c.l.b16 %v1875
      %v1910 = vunpack.c.l.b16 %v1876
      %v1911 = vunpack.c.l.b16 %v1877
      %v1912 = vunpack.c.l.b16 %v1878
      %v1913 = vunpack.c.l.b16 %v1879
      %v1914 = vunpack.c.l.b16 %v1880
      %v1915 = vunpack.c.l.b16 %v1881
      %v1916 = vunpack.c.l.b16 %v1882
      %v1917 = vunpack.c.l.b16 %v1883
      %v1918 = vunpack.c.l.b16 %v1884
      %v1919 = vpack.c.b16 %v1904, %v1903
      %v1920 = vpack.c.b16 %v1906, %v1905
      %v1921 = vpack.c.b16 %v1908, %v1907
      %v1922 = vpack.c.b16 %v1910, %v1909
      %v1923 = vpack.c.b16 %v1912, %v1911
      %v1924 = vpack.c.b16 %v1914, %v1913
      %v1925 = vpack.c.b16 %v1916, %v1915
      %v1926 = vpack.c.b16 %v1918, %v1917
      %1935 = vmatprep.subr.bf16.mxu0 0
      %1936 = vmatpush1.bf16.msra.mxu0 %v1919
      %1937 = vmatprep.subr.bf16.mxu0 0
      %1938 = vmatpush1.bf16.msra.mxu0 %v1920
      %1939 = vmatprep.subr.bf16.mxu0 0
      %1940 = vmatpush1.bf16.msra.mxu0 %v1921
      %1941 = vmatprep.subr.bf16.mxu0 0
      %1942 = vmatpush1.bf16.msra.mxu0 %v1922
      %1943 = vmatprep.subr.bf16.mxu0 0
      %1944 = vmatpush1.bf16.msra.mxu0 %v1923
      %1945 = vmatprep.subr.bf16.mxu0 0
      %1946 = vmatpush1.bf16.msra.mxu0 %v1924
      %1947 = vmatprep.subr.bf16.mxu0 0
      %1948 = vmatpush1.bf16.msra.mxu0 %v1925
      %1949 = vmatprep.subr.bf16.mxu0 0
      %1950 = vmatpush1.bf16.msra.mxu0 %v1926
      %1951 = vmatprep.subr.bf16.mxu0 0
      %1952 = vmatpush1.bf16.msra.mxu0 0
      %1953 = vmatprep.subr.bf16.mxu0 0
      %1954 = vmatpush1.bf16.msra.mxu0 0
      %1955 = vmatprep.subr.bf16.mxu0 0
      %1956 = vmatpush1.bf16.msra.mxu0 0
      %1957 = vmatprep.subr.bf16.mxu0 0
      %1958 = vmatpush1.bf16.msra.mxu0 0
      %1959 = vmatprep.subr.bf16.mxu0 0
      %1960 = vmatpush1.bf16.msra.mxu0 0
      %1961 = vmatprep.subr.bf16.mxu0 0
      %1962 = vmatpush1.bf16.msra.mxu0 0
      %1963 = vmatprep.subr.bf16.mxu0 0
      %1964 = vmatpush1.bf16.msra.mxu0 0
      %1965 = vmatprep.subr.bf16.mxu0 0
      %1966 = vmatpush1.bf16.msra.mxu0 0
      %1967 = vmatprep.mubr.bf16.mxu0 0
      %1968 = vmatmul.mubr.bf16.gmra.mrb[0].mxu0 %v1885
      %v1969 = vpop.f32.mrb[0].mxu0
      %v1970 = vadd.f32 0.0, %v1969
      %v1971 = vpop.f32.mrb[0].mxu0
      %v1972 = vpop.f32.mrb[0].mxu0
      %v1973 = vadd.f32 0.0, %v1972
      %v1974 = vpop.f32.mrb[0].mxu0
      %1975 = vdwg.mxu0
      %v1976 = vadd.f32 %v1866, %v1970
      %v1977 = vadd.f32 %v1867, %v1973
      %v1978 = vld [vmem:[%s552] sm:$0xf]
      %v1979 = vld [vmem:[%s552 + $0x4] sm:$0xf]
      %s1980 = scalar_lea.vmem %s7, 192
      %v1981 = vld [vmem:[%s1980] sm:$0xf]
      %v1982 = vld [vmem:[%s1980 + $0x4] sm:$0xf]
      %v1983 = vld [vmem:[%s1980 + $0x8] sm:$0xf]
      %v1984 = vld [vmem:[%s1980 + $0xc] sm:$0xf]
      %v1985 = vld [vmem:[%s1980 + $0x10] sm:$0xf]
      %v1986 = vld [vmem:[%s1980 + $0x14] sm:$0xf]
      %v1987 = vld [vmem:[%s1980 + $0x18] sm:$0xf]
      %v1988 = vld [vmem:[%s1980 + $0x1c] sm:$0xf]
      %v1989 = vld [vmem:[%s1980 + $0x20] sm:$0xf]
      %v1990 = vld [vmem:[%s1980 + $0x24] sm:$0xf]
      %v1991 = vld [vmem:[%s1980 + $0x28] sm:$0xf]
      %v1992 = vld [vmem:[%s1980 + $0x2c] sm:$0xf]
      %v1993 = vld [vmem:[%s1980 + $0x30] sm:$0xf]
      %v1994 = vld [vmem:[%s1980 + $0x34] sm:$0xf]
      %v1995 = vld [vmem:[%s1980 + $0x38] sm:$0xf]
      %v1996 = vld [vmem:[%s1980 + $0x3c] sm:$0xf]
      %v1999 = vunpack.c.l.b16 %v1978
      %v2000 = vunpack.c.l.b16 %v1979
      %v2001 = vpack.c.b16 %v2000, %v1999
      %v2019 = vunpack.c.l.b16 %v1981
      %v2020 = vunpack.c.l.b16 %v1982
      %v2021 = vunpack.c.l.b16 %v1983
      %v2022 = vunpack.c.l.b16 %v1984
      %v2023 = vunpack.c.l.b16 %v1985
      %v2024 = vunpack.c.l.b16 %v1986
      %v2025 = vunpack.c.l.b16 %v1987
      %v2026 = vunpack.c.l.b16 %v1988
      %v2027 = vunpack.c.l.b16 %v1989
      %v2028 = vunpack.c.l.b16 %v1990
      %v2029 = vunpack.c.l.b16 %v1991
      %v2030 = vunpack.c.l.b16 %v1992
      %v2031 = vunpack.c.l.b16 %v1993
      %v2032 = vunpack.c.l.b16 %v1994
      %v2033 = vunpack.c.l.b16 %v1995
      %v2034 = vunpack.c.l.b16 %v1996
      %v2035 = vpack.c.b16 %v2020, %v2019
      %v2036 = vpack.c.b16 %v2022, %v2021
      %v2037 = vpack.c.b16 %v2024, %v2023
      %v2038 = vpack.c.b16 %v2026, %v2025
      %v2039 = vpack.c.b16 %v2028, %v2027
      %v2040 = vpack.c.b16 %v2030, %v2029
      %v2041 = vpack.c.b16 %v2032, %v2031
      %v2042 = vpack.c.b16 %v2034, %v2033
      %2051 = vmatprep.subr.bf16.mxu0 0
      %2052 = vmatpush1.bf16.msra.mxu0 %v2035
      %2053 = vmatprep.subr.bf16.mxu0 0
      %2054 = vmatpush1.bf16.msra.mxu0 %v2036
      %2055 = vmatprep.subr.bf16.mxu0 0
      %2056 = vmatpush1.bf16.msra.mxu0 %v2037
      %2057 = vmatprep.subr.bf16.mxu0 0
      %2058 = vmatpush1.bf16.msra.mxu0 %v2038
      %2059 = vmatprep.subr.bf16.mxu0 0
      %2060 = vmatpush1.bf16.msra.mxu0 %v2039
      %2061 = vmatprep.subr.bf16.mxu0 0
      %2062 = vmatpush1.bf16.msra.mxu0 %v2040
      %2063 = vmatprep.subr.bf16.mxu0 0
      %2064 = vmatpush1.bf16.msra.mxu0 %v2041
      %2065 = vmatprep.subr.bf16.mxu0 0
      %2066 = vmatpush1.bf16.msra.mxu0 %v2042
      %2067 = vmatprep.subr.bf16.mxu0 0
      %2068 = vmatpush1.bf16.msra.mxu0 0
      %2069 = vmatprep.subr.bf16.mxu0 0
      %2070 = vmatpush1.bf16.msra.mxu0 0
      %2071 = vmatprep.subr.bf16.mxu0 0
      %2072 = vmatpush1.bf16.msra.mxu0 0
      %2073 = vmatprep.subr.bf16.mxu0 0
      %2074 = vmatpush1.bf16.msra.mxu0 0
      %2075 = vmatprep.subr.bf16.mxu0 0
      %2076 = vmatpush1.bf16.msra.mxu0 0
      %2077 = vmatprep.subr.bf16.mxu0 0
      %2078 = vmatpush1.bf16.msra.mxu0 0
      %2079 = vmatprep.subr.bf16.mxu0 0
      %2080 = vmatpush1.bf16.msra.mxu0 0
      %2081 = vmatprep.subr.bf16.mxu0 0
      %2082 = vmatpush1.bf16.msra.mxu0 0
      %2083 = vmatprep.mubr.bf16.mxu0 0
      %2084 = vmatmul.mubr.bf16.gmra.mrb[0].mxu0 %v2001
      %v2085 = vpop.f32.mrb[0].mxu0
      %v2086 = vadd.f32 0.0, %v2085
      %v2087 = vpop.f32.mrb[0].mxu0
      %v2088 = vpop.f32.mrb[0].mxu0
      %v2089 = vadd.f32 0.0, %v2088
      %v2090 = vpop.f32.mrb[0].mxu0
      %2091 = vdwg.mxu0
      %v2092 = vadd.f32 %v1976, %v2086
      %v2093 = vadd.f32 %v1977, %v2089
      %s2094 = scalar_lea.vmem %s7, 256
      %v2095 = vld [vmem:[%s2094] sm:$0xf]
      %v2096 = vld [vmem:[%s2094 + $0x4] sm:$0xf]
      %v2097 = vld [vmem:[%s2094 + $0x8] sm:$0xf]
      %v2098 = vld [vmem:[%s2094 + $0xc] sm:$0xf]
      %v2099 = vld [vmem:[%s2094 + $0x10] sm:$0xf]
      %v2100 = vld [vmem:[%s2094 + $0x14] sm:$0xf]
      %v2101 = vld [vmem:[%s2094 + $0x18] sm:$0xf]
      %v2102 = vld [vmem:[%s2094 + $0x1c] sm:$0xf]
      %v2103 = vld [vmem:[%s2094 + $0x20] sm:$0xf]
      %v2104 = vld [vmem:[%s2094 + $0x24] sm:$0xf]
      %v2105 = vld [vmem:[%s2094 + $0x28] sm:$0xf]
      %v2106 = vld [vmem:[%s2094 + $0x2c] sm:$0xf]
      %v2107 = vld [vmem:[%s2094 + $0x30] sm:$0xf]
      %v2108 = vld [vmem:[%s2094 + $0x34] sm:$0xf]
      %v2109 = vld [vmem:[%s2094 + $0x38] sm:$0xf]
      %v2110 = vld [vmem:[%s2094 + $0x3c] sm:$0xf]
      %v2112 = vshrl.u32 %v2001, 16
      %v2114 = vshll.u32 %v2001, 16
      %v2116 = vrot.slane %v2114, 1
      %v2117 = vor.u32 %v2112, %v2116
      %v2135 = vunpack.c.l.b16 %v2095
      %v2136 = vunpack.c.l.b16 %v2096
      %v2137 = vunpack.c.l.b16 %v2097
      %v2138 = vunpack.c.l.b16 %v2098
      %v2139 = vunpack.c.l.b16 %v2099
      %v2140 = vunpack.c.l.b16 %v2100
      %v2141 = vunpack.c.l.b16 %v2101
      %v2142 = vunpack.c.l.b16 %v2102
      %v2143 = vunpack.c.l.b16 %v2103
      %v2144 = vunpack.c.l.b16 %v2104
      %v2145 = vunpack.c.l.b16 %v2105
      %v2146 = vunpack.c.l.b16 %v2106
      %v2147 = vunpack.c.l.b16 %v2107
      %v2148 = vunpack.c.l.b16 %v2108
      %v2149 = vunpack.c.l.b16 %v2109
      %v2150 = vunpack.c.l.b16 %v2110
      %v2151 = vpack.c.b16 %v2136, %v2135
      %v2152 = vpack.c.b16 %v2138, %v2137
      %v2153 = vpack.c.b16 %v2140, %v2139
      %v2154 = vpack.c.b16 %v2142, %v2141
      %v2155 = vpack.c.b16 %v2144, %v2143
      %v2156 = vpack.c.b16 %v2146, %v2145
      %v2157 = vpack.c.b16 %v2148, %v2147
      %v2158 = vpack.c.b16 %v2150, %v2149
      %2167 = vmatprep.subr.bf16.mxu0 0
      %2168 = vmatpush1.bf16.msra.mxu0 %v2151
      %2169 = vmatprep.subr.bf16.mxu0 0
      %2170 = vmatpush1.bf16.msra.mxu0 %v2152
      %2171 = vmatprep.subr.bf16.mxu0 0
      %2172 = vmatpush1.bf16.msra.mxu0 %v2153
      %2173 = vmatprep.subr.bf16.mxu0 0
      %2174 = vmatpush1.bf16.msra.mxu0 %v2154
      %2175 = vmatprep.subr.bf16.mxu0 0
      %2176 = vmatpush1.bf16.msra.mxu0 %v2155
      %2177 = vmatprep.subr.bf16.mxu0 0
      %2178 = vmatpush1.bf16.msra.mxu0 %v2156
      %2179 = vmatprep.subr.bf16.mxu0 0
      %2180 = vmatpush1.bf16.msra.mxu0 %v2157
      %2181 = vmatprep.subr.bf16.mxu0 0
      %2182 = vmatpush1.bf16.msra.mxu0 %v2158
      %2183 = vmatprep.subr.bf16.mxu0 0
      %2184 = vmatpush1.bf16.msra.mxu0 0
      %2185 = vmatprep.subr.bf16.mxu0 0
      %2186 = vmatpush1.bf16.msra.mxu0 0
      %2187 = vmatprep.subr.bf16.mxu0 0
      %2188 = vmatpush1.bf16.msra.mxu0 0
      %2189 = vmatprep.subr.bf16.mxu0 0
      %2190 = vmatpush1.bf16.msra.mxu0 0
      %2191 = vmatprep.subr.bf16.mxu0 0
      %2192 = vmatpush1.bf16.msra.mxu0 0
      %2193 = vmatprep.subr.bf16.mxu0 0
      %2194 = vmatpush1.bf16.msra.mxu0 0
      %2195 = vmatprep.subr.bf16.mxu0 0
      %2196 = vmatpush1.bf16.msra.mxu0 0
      %2197 = vmatprep.subr.bf16.mxu0 0
      %2198 = vmatpush1.bf16.msra.mxu0 0
      %2199 = vmatprep.mubr.bf16.mxu0 0
      %2200 = vmatmul.mubr.bf16.gmra.mrb[0].mxu0 %v2117
      %v2201 = vpop.f32.mrb[0].mxu0
      %v2202 = vadd.f32 0.0, %v2201
      %v2203 = vpop.f32.mrb[0].mxu0
      %v2204 = vpop.f32.mrb[0].mxu0
      %v2205 = vadd.f32 0.0, %v2204
      %v2206 = vpop.f32.mrb[0].mxu0
      %2207 = vdwg.mxu0
      %v2208 = vadd.f32 %v2092, %v2202
      %v2209 = vadd.f32 %v2093, %v2205
      %s2210 = scalar_lea.vmem %s7, 320
      %v2211 = vld [vmem:[%s2210] sm:$0xf]
      %v2212 = vld [vmem:[%s2210 + $0x4] sm:$0xf]
      %v2213 = vld [vmem:[%s2210 + $0x8] sm:$0xf]
      %v2214 = vld [vmem:[%s2210 + $0xc] sm:$0xf]
      %v2215 = vld [vmem:[%s2210 + $0x10] sm:$0xf]
      %v2216 = vld [vmem:[%s2210 + $0x14] sm:$0xf]
      %v2217 = vld [vmem:[%s2210 + $0x18] sm:$0xf]
      %v2218 = vld [vmem:[%s2210 + $0x1c] sm:$0xf]
      %v2219 = vld [vmem:[%s2210 + $0x20] sm:$0xf]
      %v2220 = vld [vmem:[%s2210 + $0x24] sm:$0xf]
      %v2221 = vld [vmem:[%s2210 + $0x28] sm:$0xf]
      %v2222 = vld [vmem:[%s2210 + $0x2c] sm:$0xf]
      %v2223 = vld [vmem:[%s2210 + $0x30] sm:$0xf]
      %v2224 = vld [vmem:[%s2210 + $0x34] sm:$0xf]
      %v2225 = vld [vmem:[%s2210 + $0x38] sm:$0xf]
      %v2226 = vld [vmem:[%s2210 + $0x3c] sm:$0xf]
      %v2227 = vrot.slane %v2001, 1
      %v2245 = vunpack.c.l.b16 %v2211
      %v2246 = vunpack.c.l.b16 %v2212
      %v2247 = vunpack.c.l.b16 %v2213
      %v2248 = vunpack.c.l.b16 %v2214
      %v2249 = vunpack.c.l.b16 %v2215
      %v2250 = vunpack.c.l.b16 %v2216
      %v2251 = vunpack.c.l.b16 %v2217
      %v2252 = vunpack.c.l.b16 %v2218
      %v2253 = vunpack.c.l.b16 %v2219
      %v2254 = vunpack.c.l.b16 %v2220
      %v2255 = vunpack.c.l.b16 %v2221
      %v2256 = vunpack.c.l.b16 %v2222
      %v2257 = vunpack.c.l.b16 %v2223
      %v2258 = vunpack.c.l.b16 %v2224
      %v2259 = vunpack.c.l.b16 %v2225
      %v2260 = vunpack.c.l.b16 %v2226
      %v2261 = vpack.c.b16 %v2246, %v2245
      %v2262 = vpack.c.b16 %v2248, %v2247
      %v2263 = vpack.c.b16 %v2250, %v2249
      %v2264 = vpack.c.b16 %v2252, %v2251
      %v2265 = vpack.c.b16 %v2254, %v2253
      %v2266 = vpack.c.b16 %v2256, %v2255
      %v2267 = vpack.c.b16 %v2258, %v2257
      %v2268 = vpack.c.b16 %v2260, %v2259
      %2277 = vmatprep.subr.bf16.mxu0 0
      %2278 = vmatpush1.bf16.msra.mxu0 %v2261
      %2279 = vmatprep.subr.bf16.mxu0 0
      %2280 = vmatpush1.bf16.msra.mxu0 %v2262
      %2281 = vmatprep.subr.bf16.mxu0 0
      %2282 = vmatpush1.bf16.msra.mxu0 %v2263
      %2283 = vmatprep.subr.bf16.mxu0 0
      %2284 = vmatpush1.bf16.msra.mxu0 %v2264
      %2285 = vmatprep.subr.bf16.mxu0 0
      %2286 = vmatpush1.bf16.msra.mxu0 %v2265
      %2287 = vmatprep.subr.bf16.mxu0 0
      %2288 = vmatpush1.bf16.msra.mxu0 %v2266
      %2289 = vmatprep.subr.bf16.mxu0 0
      %2290 = vmatpush1.bf16.msra.mxu0 %v2267
      %2291 = vmatprep.subr.bf16.mxu0 0
      %2292 = vmatpush1.bf16.msra.mxu0 %v2268
      %2293 = vmatprep.subr.bf16.mxu0 0
      %2294 = vmatpush1.bf16.msra.mxu0 0
      %2295 = vmatprep.subr.bf16.mxu0 0
      %2296 = vmatpush1.bf16.msra.mxu0 0
      %2297 = vmatprep.subr.bf16.mxu0 0
      %2298 = vmatpush1.bf16.msra.mxu0 0
      %2299 = vmatprep.subr.bf16.mxu0 0
      %2300 = vmatpush1.bf16.msra.mxu0 0
      %2301 = vmatprep.subr.bf16.mxu0 0
      %2302 = vmatpush1.bf16.msra.mxu0 0
      %2303 = vmatprep.subr.bf16.mxu0 0
      %2304 = vmatpush1.bf16.msra.mxu0 0
      %2305 = vmatprep.subr.bf16.mxu0 0
      %2306 = vmatpush1.bf16.msra.mxu0 0
      %2307 = vmatprep.subr.bf16.mxu0 0
      %2308 = vmatpush1.bf16.msra.mxu0 0
      %2309 = vmatprep.mubr.bf16.mxu0 0
      %2310 = vmatmul.mubr.bf16.gmra.mrb[0].mxu0 %v2227
      %v2311 = vpop.f32.mrb[0].mxu0
      %v2312 = vadd.f32 0.0, %v2311
      %v2313 = vpop.f32.mrb[0].mxu0
      %v2314 = vpop.f32.mrb[0].mxu0
      %v2315 = vadd.f32 0.0, %v2314
      %v2316 = vpop.f32.mrb[0].mxu0
      %2317 = vdwg.mxu0
      %v2318 = vadd.f32 %v2208, %v2312
      %v2319 = vadd.f32 %v2209, %v2315
      %v2320 = vld [vmem:[%s563] sm:$0xf]
      %v2321 = vld [vmem:[%s563 + $0x4] sm:$0xf]
      %s2322 = scalar_lea.vmem %s7, 384
      %v2323 = vld [vmem:[%s2322] sm:$0xf]
      %v2324 = vld [vmem:[%s2322 + $0x4] sm:$0xf]
      %v2325 = vld [vmem:[%s2322 + $0x8] sm:$0xf]
      %v2326 = vld [vmem:[%s2322 + $0xc] sm:$0xf]
      %v2327 = vld [vmem:[%s2322 + $0x10] sm:$0xf]
      %v2328 = vld [vmem:[%s2322 + $0x14] sm:$0xf]
      %v2329 = vld [vmem:[%s2322 + $0x18] sm:$0xf]
      %v2330 = vld [vmem:[%s2322 + $0x1c] sm:$0xf]
      %v2331 = vld [vmem:[%s2322 + $0x20] sm:$0xf]
      %v2332 = vld [vmem:[%s2322 + $0x24] sm:$0xf]
      %v2333 = vld [vmem:[%s2322 + $0x28] sm:$0xf]
      %v2334 = vld [vmem:[%s2322 + $0x2c] sm:$0xf]
      %v2335 = vld [vmem:[%s2322 + $0x30] sm:$0xf]
      %v2336 = vld [vmem:[%s2322 + $0x34] sm:$0xf]
      %v2337 = vld [vmem:[%s2322 + $0x38] sm:$0xf]
      %v2338 = vld [vmem:[%s2322 + $0x3c] sm:$0xf]
      %v2341 = vunpack.c.l.b16 %v2320
      %v2342 = vunpack.c.l.b16 %v2321
      %v2343 = vpack.c.b16 %v2342, %v2341
      %v2361 = vunpack.c.l.b16 %v2323
      %v2362 = vunpack.c.l.b16 %v2324
      %v2363 = vunpack.c.l.b16 %v2325
      %v2364 = vunpack.c.l.b16 %v2326
      %v2365 = vunpack.c.l.b16 %v2327
      %v2366 = vunpack.c.l.b16 %v2328
      %v2367 = vunpack.c.l.b16 %v2329
      %v2368 = vunpack.c.l.b16 %v2330
      %v2369 = vunpack.c.l.b16 %v2331
      %v2370 = vunpack.c.l.b16 %v2332
      %v2371 = vunpack.c.l.b16 %v2333
      %v2372 = vunpack.c.l.b16 %v2334
      %v2373 = vunpack.c.l.b16 %v2335
      %v2374 = vunpack.c.l.b16 %v2336
      %v2375 = vunpack.c.l.b16 %v2337
      %v2376 = vunpack.c.l.b16 %v2338
      %v2377 = vpack.c.b16 %v2362, %v2361
      %v2378 = vpack.c.b16 %v2364, %v2363
      %v2379 = vpack.c.b16 %v2366, %v2365
      %v2380 = vpack.c.b16 %v2368, %v2367
      %v2381 = vpack.c.b16 %v2370, %v2369
      %v2382 = vpack.c.b16 %v2372, %v2371
      %v2383 = vpack.c.b16 %v2374, %v2373
      %v2384 = vpack.c.b16 %v2376, %v2375
      %2393 = vmatprep.subr.bf16.mxu0 0
      %2394 = vmatpush1.bf16.msra.mxu0 %v2377
      %2395 = vmatprep.subr.bf16.mxu0 0
      %2396 = vmatpush1.bf16.msra.mxu0 %v2378
      %2397 = vmatprep.subr.bf16.mxu0 0
      %2398 = vmatpush1.bf16.msra.mxu0 %v2379
      %2399 = vmatprep.subr.bf16.mxu0 0
      %2400 = vmatpush1.bf16.msra.mxu0 %v2380
      %2401 = vmatprep.subr.bf16.mxu0 0
      %2402 = vmatpush1.bf16.msra.mxu0 %v2381
      %2403 = vmatprep.subr.bf16.mxu0 0
      %2404 = vmatpush1.bf16.msra.mxu0 %v2382
      %2405 = vmatprep.subr.bf16.mxu0 0
      %2406 = vmatpush1.bf16.msra.mxu0 %v2383
      %2407 = vmatprep.subr.bf16.mxu0 0
      %2408 = vmatpush1.bf16.msra.mxu0 %v2384
      %2409 = vmatprep.subr.bf16.mxu0 0
      %2410 = vmatpush1.bf16.msra.mxu0 0
      %2411 = vmatprep.subr.bf16.mxu0 0
      %2412 = vmatpush1.bf16.msra.mxu0 0
      %2413 = vmatprep.subr.bf16.mxu0 0
      %2414 = vmatpush1.bf16.msra.mxu0 0
      %2415 = vmatprep.subr.bf16.mxu0 0
      %2416 = vmatpush1.bf16.msra.mxu0 0
      %2417 = vmatprep.subr.bf16.mxu0 0
      %2418 = vmatpush1.bf16.msra.mxu0 0
      %2419 = vmatprep.subr.bf16.mxu0 0
      %2420 = vmatpush1.bf16.msra.mxu0 0
      %2421 = vmatprep.subr.bf16.mxu0 0
      %2422 = vmatpush1.bf16.msra.mxu0 0
      %2423 = vmatprep.subr.bf16.mxu0 0
      %2424 = vmatpush1.bf16.msra.mxu0 0
      %2425 = vmatprep.mubr.bf16.mxu0 0
      %2426 = vmatmul.mubr.bf16.gmra.mrb[0].mxu0 %v2343
      %v2427 = vpop.f32.mrb[0].mxu0
      %v2428 = vadd.f32 0.0, %v2427
      %v2429 = vpop.f32.mrb[0].mxu0
      %v2430 = vpop.f32.mrb[0].mxu0
      %v2431 = vadd.f32 0.0, %v2430
      %v2432 = vpop.f32.mrb[0].mxu0
      %2433 = vdwg.mxu0
      %v2434 = vadd.f32 %v2318, %v2428
      %v2435 = vadd.f32 %v2319, %v2431
      %s2436 = scalar_lea.vmem %s7, 448
      %v2437 = vld [vmem:[%s2436] sm:$0xf]
      %v2438 = vld [vmem:[%s2436 + $0x4] sm:$0xf]
      %v2439 = vld [vmem:[%s2436 + $0x8] sm:$0xf]
      %v2440 = vld [vmem:[%s2436 + $0xc] sm:$0xf]
      %v2441 = vld [vmem:[%s2436 + $0x10] sm:$0xf]
      %v2442 = vld [vmem:[%s2436 + $0x14] sm:$0xf]
      %v2443 = vld [vmem:[%s2436 + $0x18] sm:$0xf]
      %v2444 = vld [vmem:[%s2436 + $0x1c] sm:$0xf]
      %v2445 = vld [vmem:[%s2436 + $0x20] sm:$0xf]
      %v2446 = vld [vmem:[%s2436 + $0x24] sm:$0xf]
      %v2447 = vld [vmem:[%s2436 + $0x28] sm:$0xf]
      %v2448 = vld [vmem:[%s2436 + $0x2c] sm:$0xf]
      %v2449 = vld [vmem:[%s2436 + $0x30] sm:$0xf]
      %v2450 = vld [vmem:[%s2436 + $0x34] sm:$0xf]
      %v2451 = vld [vmem:[%s2436 + $0x38] sm:$0xf]
      %v2452 = vld [vmem:[%s2436 + $0x3c] sm:$0xf]
      %v2454 = vshrl.u32 %v2343, 16
      %v2456 = vshll.u32 %v2343, 16
      %v2458 = vrot.slane %v2456, 1
      %v2459 = vor.u32 %v2454, %v2458
      %v2477 = vunpack.c.l.b16 %v2437
      %v2478 = vunpack.c.l.b16 %v2438
      %v2479 = vunpack.c.l.b16 %v2439
      %v2480 = vunpack.c.l.b16 %v2440
      %v2481 = vunpack.c.l.b16 %v2441
      %v2482 = vunpack.c.l.b16 %v2442
      %v2483 = vunpack.c.l.b16 %v2443
      %v2484 = vunpack.c.l.b16 %v2444
      %v2485 = vunpack.c.l.b16 %v2445
      %v2486 = vunpack.c.l.b16 %v2446
      %v2487 = vunpack.c.l.b16 %v2447
      %v2488 = vunpack.c.l.b16 %v2448
      %v2489 = vunpack.c.l.b16 %v2449
      %v2490 = vunpack.c.l.b16 %v2450
      %v2491 = vunpack.c.l.b16 %v2451
      %v2492 = vunpack.c.l.b16 %v2452
      %v2493 = vpack.c.b16 %v2478, %v2477
      %v2494 = vpack.c.b16 %v2480, %v2479
      %v2495 = vpack.c.b16 %v2482, %v2481
      %v2496 = vpack.c.b16 %v2484, %v2483
      %v2497 = vpack.c.b16 %v2486, %v2485
      %v2498 = vpack.c.b16 %v2488, %v2487
      %v2499 = vpack.c.b16 %v2490, %v2489
      %v2500 = vpack.c.b16 %v2492, %v2491
      %2509 = vmatprep.subr.bf16.mxu0 0
      %2510 = vmatpush1.bf16.msra.mxu0 %v2493
      %2511 = vmatprep.subr.bf16.mxu0 0
      %2512 = vmatpush1.bf16.msra.mxu0 %v2494
      %2513 = vmatprep.subr.bf16.mxu0 0
      %2514 = vmatpush1.bf16.msra.mxu0 %v2495
      %2515 = vmatprep.subr.bf16.mxu0 0
      %2516 = vmatpush1.bf16.msra.mxu0 %v2496
      %2517 = vmatprep.subr.bf16.mxu0 0
      %2518 = vmatpush1.bf16.msra.mxu0 %v2497
      %2519 = vmatprep.subr.bf16.mxu0 0
      %2520 = vmatpush1.bf16.msra.mxu0 %v2498
      %2521 = vmatprep.subr.bf16.mxu0 0
      %2522 = vmatpush1.bf16.msra.mxu0 %v2499
      %2523 = vmatprep.subr.bf16.mxu0 0
      %2524 = vmatpush1.bf16.msra.mxu0 %v2500
      %2525 = vmatprep.subr.bf16.mxu0 0
      %2526 = vmatpush1.bf16.msra.mxu0 0
      %2527 = vmatprep.subr.bf16.mxu0 0
      %2528 = vmatpush1.bf16.msra.mxu0 0
      %2529 = vmatprep.subr.bf16.mxu0 0
      %2530 = vmatpush1.bf16.msra.mxu0 0
      %2531 = vmatprep.subr.bf16.mxu0 0
      %2532 = vmatpush1.bf16.msra.mxu0 0
      %2533 = vmatprep.subr.bf16.mxu0 0
      %2534 = vmatpush1.bf16.msra.mxu0 0
      %2535 = vmatprep.subr.bf16.mxu0 0
      %2536 = vmatpush1.bf16.msra.mxu0 0
      %2537 = vmatprep.subr.bf16.mxu0 0
      %2538 = vmatpush1.bf16.msra.mxu0 0
      %2539 = vmatprep.subr.bf16.mxu0 0
      %2540 = vmatpush1.bf16.msra.mxu0 0
      %2541 = vmatprep.mubr.bf16.mxu0 0
      %2542 = vmatmul.mubr.bf16.gmra.mrb[0].mxu0 %v2459
      %v2543 = vpop.f32.mrb[0].mxu0
      %v2544 = vadd.f32 0.0, %v2543
      %v2545 = vpop.f32.mrb[0].mxu0
      %v2546 = vpop.f32.mrb[0].mxu0
      %v2547 = vadd.f32 0.0, %v2546
      %v2548 = vpop.f32.mrb[0].mxu0
      %2549 = vdwg.mxu0
      %v2550 = vadd.f32 %v2434, %v2544
      %v2551 = vadd.f32 %v2435, %v2547
      %s2552 = scalar_lea.vmem %s7, 512
      %v2553 = vld [vmem:[%s2552] sm:$0xf]
      %v2554 = vld [vmem:[%s2552 + $0x4] sm:$0xf]
      %v2555 = vld [vmem:[%s2552 + $0x8] sm:$0xf]
      %v2556 = vld [vmem:[%s2552 + $0xc] sm:$0xf]
      %v2557 = vld [vmem:[%s2552 + $0x10] sm:$0xf]
      %v2558 = vld [vmem:[%s2552 + $0x14] sm:$0xf]
      %v2559 = vld [vmem:[%s2552 + $0x18] sm:$0xf]
      %v2560 = vld [vmem:[%s2552 + $0x1c] sm:$0xf]
      %v2561 = vld [vmem:[%s2552 + $0x20] sm:$0xf]
      %v2562 = vld [vmem:[%s2552 + $0x24] sm:$0xf]
      %v2563 = vld [vmem:[%s2552 + $0x28] sm:$0xf]
      %v2564 = vld [vmem:[%s2552 + $0x2c] sm:$0xf]
      %v2565 = vld [vmem:[%s2552 + $0x30] sm:$0xf]
      %v2566 = vld [vmem:[%s2552 + $0x34] sm:$0xf]
      %v2567 = vld [vmem:[%s2552 + $0x38] sm:$0xf]
      %v2568 = vld [vmem:[%s2552 + $0x3c] sm:$0xf]
      %v2569 = vrot.slane %v2343, 1
      %v2587 = vunpack.c.l.b16 %v2553
      %v2588 = vunpack.c.l.b16 %v2554
      %v2589 = vunpack.c.l.b16 %v2555
      %v2590 = vunpack.c.l.b16 %v2556
      %v2591 = vunpack.c.l.b16 %v2557
      %v2592 = vunpack.c.l.b16 %v2558
      %v2593 = vunpack.c.l.b16 %v2559
      %v2594 = vunpack.c.l.b16 %v2560
      %v2595 = vunpack.c.l.b16 %v2561
      %v2596 = vunpack.c.l.b16 %v2562
      %v2597 = vunpack.c.l.b16 %v2563
      %v2598 = vunpack.c.l.b16 %v2564
      %v2599 = vunpack.c.l.b16 %v2565
      %v2600 = vunpack.c.l.b16 %v2566
      %v2601 = vunpack.c.l.b16 %v2567
      %v2602 = vunpack.c.l.b16 %v2568
      %v2603 = vpack.c.b16 %v2588, %v2587
      %v2604 = vpack.c.b16 %v2590, %v2589
      %v2605 = vpack.c.b16 %v2592, %v2591
      %v2606 = vpack.c.b16 %v2594, %v2593
      %v2607 = vpack.c.b16 %v2596, %v2595
      %v2608 = vpack.c.b16 %v2598, %v2597
      %v2609 = vpack.c.b16 %v2600, %v2599
      %v2610 = vpack.c.b16 %v2602, %v2601
      %2619 = vmatprep.subr.bf16.mxu0 0
      %2620 = vmatpush1.bf16.msra.mxu0 %v2603
      %2621 = vmatprep.subr.bf16.mxu0 0
      %2622 = vmatpush1.bf16.msra.mxu0 %v2604
      %2623 = vmatprep.subr.bf16.mxu0 0
      %2624 = vmatpush1.bf16.msra.mxu0 %v2605
      %2625 = vmatprep.subr.bf16.mxu0 0
      %2626 = vmatpush1.bf16.msra.mxu0 %v2606
      %2627 = vmatprep.subr.bf16.mxu0 0
      %2628 = vmatpush1.bf16.msra.mxu0 %v2607
      %2629 = vmatprep.subr.bf16.mxu0 0
      %2630 = vmatpush1.bf16.msra.mxu0 %v2608
      %2631 = vmatprep.subr.bf16.mxu0 0
      %2632 = vmatpush1.bf16.msra.mxu0 %v2609
      %2633 = vmatprep.subr.bf16.mxu0 0
      %2634 = vmatpush1.bf16.msra.mxu0 %v2610
      %2635 = vmatprep.subr.bf16.mxu0 0
      %2636 = vmatpush1.bf16.msra.mxu0 0
      %2637 = vmatprep.subr.bf16.mxu0 0
      %2638 = vmatpush1.bf16.msra.mxu0 0
      %2639 = vmatprep.subr.bf16.mxu0 0
      %2640 = vmatpush1.bf16.msra.mxu0 0
      %2641 = vmatprep.subr.bf16.mxu0 0
      %2642 = vmatpush1.bf16.msra.mxu0 0
      %2643 = vmatprep.subr.bf16.mxu0 0
      %2644 = vmatpush1.bf16.msra.mxu0 0
      %2645 = vmatprep.subr.bf16.mxu0 0
      %2646 = vmatpush1.bf16.msra.mxu0 0
      %2647 = vmatprep.subr.bf16.mxu0 0
      %2648 = vmatpush1.bf16.msra.mxu0 0
      %2649 = vmatprep.subr.bf16.mxu0 0
      %2650 = vmatpush1.bf16.msra.mxu0 0
      %2651 = vmatprep.mubr.bf16.mxu0 0
      %2652 = vmatmul.mubr.bf16.gmra.mrb[0].mxu0 %v2569
      %v2653 = vpop.f32.mrb[0].mxu0
      %v2654 = vadd.f32 0.0, %v2653
      %v2655 = vpop.f32.mrb[0].mxu0
      %v2656 = vpop.f32.mrb[0].mxu0
      %v2657 = vadd.f32 0.0, %v2656
      %v2658 = vpop.f32.mrb[0].mxu0
      %2659 = vdwg.mxu0
      %v2660 = vadd.f32 %v2550, %v2654
      %v2661 = vadd.f32 %v2551, %v2657
      %v2662 = vld [vmem:[%s8] sm:$0x1]
      %v2664 = vlaneseq
      %v2665 = vshrl.u32 %v2664, 7
      %v2666 = vsub.s32 0, %v2665
      %v2667 = vrot.slane %v2662, %v2666
      %v2669 = vadd.f32 %v2660, %v2667
      %v2670 = vadd.f32 %v2661, %v2667
      %v2671 = vmax.f32 %v2669, 0.0
      %v2672 = vmax.f32 %v2670, 0.0
      %v2673 = vpack.c.bf16 %v2672, %v2671
      %v2675 = vunpack.c.l.b16 %v2673
      %v2676 = vunpack.c.h.b16 %v2673
      %v2677 = vpack.c.b16 %v2675, %v2675
      %v2678 = vpack.c.b16 %v2676, %v2676
      %2681 = vst [vmem:[%s573] sm:$0xf] %v2677
      %2682 = vst [vmem:[%s573 + $0x4] sm:$0x7] %v2678
      %p2683 = scmp.lt.s32.totalorder %s24, 1
      %s2684 = scalar_select %p2683, %s24, 1
      %p2685 = scmp.lt.s32.totalorder %s25, 13
      %s2686 = scalar_select %p2685, %s25, 13
      %s2687 = smul.addr %s2686, 2
      %s2688 = smul.addr %s2684, 28
      %s2689 = sadd.s32 %s2687, %s2688
      %s2690 = smul.addr %s2689, 4
      %s2691 = scalar_lea.vmem %s9, %s2690
      // Predicated region
      $region57: #{_lambda_.4} parent=55 // pred_check
        %p2692 = pneg %p293
      $region58: #{_lambda_.4} parent=55 // pred_check_branch
        %2694 = sbr.rel (%p2692) target = $region60
      $region59: #{_lambda_.4} parent=55 // pred_region
        _
      $region60: #{_lambda_.4} parent=55 // pred_fallthru
        _
    $region56: #{_lambda_.4} parent=5 // pred_fallthru
      _
    %p2695 = scmp.le.s32.totalorder 2, %s15
    // Predicated region
    $region61: #{_lambda_.4} parent=5 // pred_check
      %p2696 = pneg %p2695
    $region62: #{_lambda_.4} parent=5 // pred_check_branch
      %2698 = sbr.rel (%p2696) target = $region64
    $region63: #{_lambda_.4} parent=5 // pred_region
      %s2699 = ssub.s32 %s15, 2
      // Predicated region
      $region65: #{_lambda_.4} parent=63 // pred_check
        %p2700 = pneg %p299
      $region66: #{_lambda_.4} parent=63 // pred_check_branch
        %2702 = sbr.rel (%p2700) target = $region68
      $region67: #{_lambda_.4} parent=63 // pred_region
        %p2703 = scmp.lt.s32.totalorder %s26, 1
        %s2704 = scalar_select %p2703, %s26, 1
        %p2705 = scmp.lt.s32.totalorder %s27, 13
        %s2706 = scalar_select %p2705, %s27, 13
        %s2707 = smul.addr %s2706, 2
        %s2708 = smul.addr %s2704, 28
        %s2709 = sadd.s32 %s2707, %s2708
        %s2710 = smul.addr %s2709, 4
        %s2711 = scalar_lea.vmem %s9, %s2710
      $region68: #{_lambda_.4} parent=63 // pred_fallthru
        _
    $region64: #{_lambda_.4} parent=5 // pred_fallthru
      _
  $region6: #{_lambda_.4} parent=0 // loop_footer
    %s19 = sadd.s32 1, %s15
  $region7: #{_lambda_.4} parent=0 // loop_footer_branch
    %14 = sbr.rel target = $region3
  $region8: #{_lambda_.4} parent=0 // loop_exit
    _

</llo_original>
